<compile_context>
chip_gen: v6e
topology: v6e:2x2x1
jax: 0.10.0
libtpu: 0.0.40
codegen_flags: <defaults>
</compile_context>

<pallas_src>
import functools

import jax
import jax.numpy as jnp
from jax.experimental import pallas as pl
from jax.experimental.pallas import tpu as pltpu

KS = 7
PAD = KS // 2


def spatial_attn_kernel(w_ref, b_ref, x_ref, o_ref,
                        avg_pad_ref, max_pad_ref, gate_ref, *, H, W):
    # w_ref : SMEM (2*KS*KS,) flattened conv weight, order [in_ch, kh, kw]
    # b_ref : SMEM (1,) conv bias
    # x_ref : VMEM (C, H*W) lane-dense input block for this batch element
    # o_ref : VMEM (C, H*W) output block
    # avg_pad_ref / max_pad_ref : VMEM (H+2*PAD, W+2*PAD) f32 scratch holding
    #   the zero-padded reduced maps (data placed at (PAD, PAD)).
    # gate_ref : VMEM (1, H*W) f32 scratch for the flattened sigmoid gate.
    x = x_ref[...]                                   # (C, H*W)
    xf = x.astype(jnp.float32)

    # Channel reduction on the lane-dense view (sublane-axis reduce).
    avg = jnp.mean(xf, axis=0, keepdims=True)        # (1, H*W)
    mx = jnp.max(xf, axis=0, keepdims=True)          # (1, H*W)

    # Zero-pad only the small reduced maps (== Conv2d zero padding of
    # cat([avg, max])).  Re-zero every step: safe under megacore grid splits
    # and only ~2 KiB of VMEM stores per map.
    avg_pad_ref[...] = jnp.zeros(avg_pad_ref.shape, avg_pad_ref.dtype)
    max_pad_ref[...] = jnp.zeros(max_pad_ref.shape, max_pad_ref.dtype)

    # Manual (H*W,) -> (H, W) scatter: H static row stores per map.
    for r in range(H):
        row = slice(r * W, (r + 1) * W)
        avg_pad_ref[pl.ds(PAD + r, 1), pl.ds(PAD, W)] = avg[:, row]
        max_pad_ref[pl.ds(PAD + r, 1), pl.ds(PAD, W)] = mx[:, row]

    avg_p = avg_pad_ref[...]                         # (H+2*PAD, W+2*PAD)
    max_p = max_pad_ref[...]

    acc = jnp.zeros((H, W), jnp.float32) + b_ref[0]
    # Fully unrolled 7x7 conv over the 2-channel [avg, max] map.  Lane-axis
    # (kw) shifts hoisted: 7 lane-shifted column views per map; the inner kh
    # loop only takes cheap static sublane slices.
    for kw in range(KS):
        col_a = avg_p[:, kw:kw + W]                  # (H+2*PAD, W)
        col_m = max_p[:, kw:kw + W]
        for kh in range(KS):
            acc = acc + w_ref[kh * KS + kw] * col_a[kh:kh + H, :]
            acc = acc + w_ref[KS * KS + kh * KS + kw] * col_m[kh:kh + H, :]

    gate2 = jax.nn.sigmoid(acc)                      # (H, W) f32

    # Flatten the gate back to (1, H*W) via scratch (H static row stores),
    # then one lane-dense broadcast multiply + store in the input dtype.
    for r in range(H):
        gate_ref[:, pl.ds(r * W, W)] = gate2[r:r + 1, :]
    g = gate_ref[...]                                # (1, H*W)

    o_ref[...] = (x * g.astype(x.dtype)).astype(o_ref.dtype)


def spatial_attention(x, weight, bias):
    """x: (B, C, H, W) NCHW.  weight: (1, 2, KS, KS).  bias: (1,)."""
    B, C, H, W = x.shape
    HW = H * W
    w_flat = weight.reshape(-1).astype(jnp.float32)   # (2*KS*KS,)
    b = bias.astype(jnp.float32)                      # (1,)

    # Free reshape of a contiguous NCHW array: present a lane-dense last dim.
    x2 = x.reshape(B, C, HW)

    kernel = functools.partial(spatial_attn_kernel, H=H, W=W)

    out2 = pl.pallas_call(
        kernel,
        out_shape=jax.ShapeDtypeStruct((B, C, HW), x.dtype),
        grid_spec=pltpu.PrefetchScalarGridSpec(
            num_scalar_prefetch=0,
            grid=(B,),
            in_specs=[
                pl.BlockSpec(memory_space=pltpu.MemorySpace.SMEM),   # conv weight
                pl.BlockSpec(memory_space=pltpu.MemorySpace.SMEM),   # conv bias
                pl.BlockSpec((None, C, HW), lambda bidx: (bidx, 0, 0)),
            ],
            out_specs=pl.BlockSpec((None, C, HW),
                                   lambda bidx: (bidx, 0, 0)),
            scratch_shapes=[
                pltpu.VMEM((H + 2 * PAD, W + 2 * PAD), jnp.float32),
                pltpu.VMEM((H + 2 * PAD, W + 2 * PAD), jnp.float32),
                pltpu.VMEM((1, HW), jnp.float32),
            ],
        ),
        compiler_params=pltpu.CompilerParams(
            dimension_semantics=("parallel",)),
    )(w_flat, b, x2)

    return out2.reshape(B, C, H, W)


def _reference(x, weight, bias):
    avg = jnp.mean(x, axis=1, keepdims=True)
    mx = jnp.max(x, axis=1, keepdims=True)
    u = jnp.concatenate([avg, mx], axis=1)
    conv = jax.lax.conv_general_dilated(
        u, weight, window_strides=(1, 1), padding="SAME",
        dimension_numbers=("NCHW", "OIHW", "NCHW"))
    conv = conv + bias.reshape(1, 1, 1, 1)
    return jax.nn.sigmoid(conv) * x


if __name__ == "__main__":
    key = jax.random.PRNGKey(0)
    kx, kw, kb = jax.random.split(key, 3)

    B, C, H, W = 2, 4, 16, 16
    x = jax.random.normal(kx, (B, C, H, W), dtype=jnp.float32)

    # Deterministic Conv2d(2, 1, 7, padding=3) parameters
    # (PyTorch default init range: uniform(+-1/sqrt(fan_in)), fan_in = 2*7*7).
    fan_in = 2 * KS * KS
    bound = 1.0 / jnp.sqrt(float(fan_in))
    weight = jax.random.uniform(kw, (1, 2, KS, KS), jnp.float32, -bound, bound)
    bias = jax.random.uniform(kb, (1,), jnp.float32, -bound, bound)

    out = spatial_attention(x, weight, bias)
    out = jax.block_until_ready(out)

    ref = _reference(x, weight, bias)
    assert out.shape == (B, C, H, W)
    assert jnp.allclose(out, ref, atol=1e-5, rtol=1e-5), "mismatch vs reference"

    print("KERNEL_OK")
</pallas_src>

<mosaic_0001>
module attributes {stable_mosaic.version = 11 : i64} {
  func.func @spatial_attn_kernel(%arg0: i32, %arg1: memref<98xf32, #tpu.memory_space<smem>>, %arg2: memref<1xf32, #tpu.memory_space<smem>>, %arg3: memref<1x4x256xf32, #tpu.memory_space<vmem>>, %arg4: memref<1x4x256xf32, #tpu.memory_space<vmem>>, %arg5: memref<22x22xf32, #tpu.memory_space<vmem>>, %arg6: memref<22x22xf32, #tpu.memory_space<vmem>>, %arg7: memref<1x256xf32, #tpu.memory_space<vmem>>) attributes {dimension_semantics = [#tpu.dimension_semantics<parallel>], iteration_bounds = array<i64: 2>, scalar_prefetch = 0 : i64, scratch_operands = 3 : i64, tpu.core_type = #tpu.core_type<tc>, window_params = [{transform_indices = @transform_0, window_bounds = array<i64: 98>}, {transform_indices = @transform_1, window_bounds = array<i64: 1>}, {transform_indices = @transform_2, window_bounds = array<i64: 1, 4, 256>}, {transform_indices = @transform_3, window_bounds = array<i64: 1, 4, 256>}]} {
    %c0 = arith.constant 0 : index
    %c0_0 = arith.constant 0 : index
    %c0_1 = arith.constant 0 : index
    %0 = vector.load %arg3[%c0, %c0_0, %c0_1] : memref<1x4x256xf32, #tpu.memory_space<vmem>>, vector<1x4x256xf32>
    %1 = vector.shape_cast %0 : vector<1x4x256xf32> to vector<4x256xf32>
    %cst = arith.constant dense<0.000000e+00> : vector<256xf32>
    %2 = vector.multi_reduction <add>, %1, %cst [0] : vector<4x256xf32> to vector<256xf32>
    %3 = vector.shape_cast %2 : vector<256xf32> to vector<1x256xf32>
    %cst_2 = arith.constant 4.000000e+00 : f32
    %4 = vector.broadcast %cst_2 : f32 to vector<1x256xf32>
    %5 = arith.divf %3, %4 : vector<1x256xf32>
    %cst_3 = arith.constant dense<0xFF800000> : vector<256xf32>
    %6 = vector.multi_reduction <maximumf>, %1, %cst_3 [0] : vector<4x256xf32> to vector<256xf32>
    %7 = vector.shape_cast %6 : vector<256xf32> to vector<1x256xf32>
    %cst_4 = arith.constant 0.000000e+00 : f32
    %8 = vector.broadcast %cst_4 : f32 to vector<22x22xf32>
    %c0_5 = arith.constant 0 : index
    %c0_6 = arith.constant 0 : index
    %9 = vector.load %arg5[%c0_5, %c0_6] : memref<22x22xf32, #tpu.memory_space<vmem>>, vector<22x22xf32>
    tpu.vector_store %arg5[%c0_5, %c0_6], %8 {strides = array<i32>} : memref<22x22xf32, #tpu.memory_space<vmem>>, vector<22x22xf32>,
    %cst_7 = arith.constant 0.000000e+00 : f32
    %10 = vector.broadcast %cst_7 : f32 to vector<22x22xf32>
    %c0_8 = arith.constant 0 : index
    %c0_9 = arith.constant 0 : index
    %11 = vector.load %arg6[%c0_8, %c0_9] : memref<22x22xf32, #tpu.memory_space<vmem>>, vector<22x22xf32>
    tpu.vector_store %arg6[%c0_8, %c0_9], %10 {strides = array<i32>} : memref<22x22xf32, #tpu.memory_space<vmem>>, vector<22x22xf32>,
    %12 = vector.extract_strided_slice %5 {offsets = [0, 0], sizes = [1, 16], strides = [1, 1]} : vector<1x256xf32> to vector<1x16xf32>
    %c3 = arith.constant 3 : index
    %c3_10 = arith.constant 3 : index
    %13 = vector.load %arg5[%c3, %c3_10] : memref<22x22xf32, #tpu.memory_space<vmem>>, vector<1x16xf32>
    tpu.vector_store %arg5[%c3, %c3_10], %12 {strides = array<i32>} : memref<22x22xf32, #tpu.memory_space<vmem>>, vector<1x16xf32>,
    %14 = vector.extract_strided_slice %7 {offsets = [0, 0], sizes = [1, 16], strides = [1, 1]} : vector<1x256xf32> to vector<1x16xf32>
    %c3_11 = arith.constant 3 : index
    %c3_12 = arith.constant 3 : index
    %15 = vector.load %arg6[%c3_11, %c3_12] : memref<22x22xf32, #tpu.memory_space<vmem>>, vector<1x16xf32>
    tpu.vector_store %arg6[%c3_11, %c3_12], %14 {strides = array<i32>} : memref<22x22xf32, #tpu.memory_space<vmem>>, vector<1x16xf32>,
    %16 = vector.extract_strided_slice %5 {offsets = [0, 16], sizes = [1, 16], strides = [1, 1]} : vector<1x256xf32> to vector<1x16xf32>
    %c4 = arith.constant 4 : index
    %c3_13 = arith.constant 3 : index
    %17 = vector.load %arg5[%c4, %c3_13] : memref<22x22xf32, #tpu.memory_space<vmem>>, vector<1x16xf32>
    tpu.vector_store %arg5[%c4, %c3_13], %16 {strides = array<i32>} : memref<22x22xf32, #tpu.memory_space<vmem>>, vector<1x16xf32>,
    %18 = vector.extract_strided_slice %7 {offsets = [0, 16], sizes = [1, 16], strides = [1, 1]} : vector<1x256xf32> to vector<1x16xf32>
    %c4_14 = arith.constant 4 : index
    %c3_15 = arith.constant 3 : index
    %19 = vector.load %arg6[%c4_14, %c3_15] : memref<22x22xf32, #tpu.memory_space<vmem>>, vector<1x16xf32>
    tpu.vector_store %arg6[%c4_14, %c3_15], %18 {strides = array<i32>} : memref<22x22xf32, #tpu.memory_space<vmem>>, vector<1x16xf32>,
    %20 = vector.extract_strided_slice %5 {offsets = [0, 32], sizes = [1, 16], strides = [1, 1]} : vector<1x256xf32> to vector<1x16xf32>
    %c5 = arith.constant 5 : index
    %c3_16 = arith.constant 3 : index
    %21 = vector.load %arg5[%c5, %c3_16] : memref<22x22xf32, #tpu.memory_space<vmem>>, vector<1x16xf32>
    tpu.vector_store %arg5[%c5, %c3_16], %20 {strides = array<i32>} : memref<22x22xf32, #tpu.memory_space<vmem>>, vector<1x16xf32>,
    %22 = vector.extract_strided_slice %7 {offsets = [0, 32], sizes = [1, 16], strides = [1, 1]} : vector<1x256xf32> to vector<1x16xf32>
    %c5_17 = arith.constant 5 : index
    %c3_18 = arith.constant 3 : index
    %23 = vector.load %arg6[%c5_17, %c3_18] : memref<22x22xf32, #tpu.memory_space<vmem>>, vector<1x16xf32>
    tpu.vector_store %arg6[%c5_17, %c3_18], %22 {strides = array<i32>} : memref<22x22xf32, #tpu.memory_space<vmem>>, vector<1x16xf32>,
    %24 = vector.extract_strided_slice %5 {offsets = [0, 48], sizes = [1, 16], strides = [1, 1]} : vector<1x256xf32> to vector<1x16xf32>
    %c6 = arith.constant 6 : index
    %c3_19 = arith.constant 3 : index
    %25 = vector.load %arg5[%c6, %c3_19] : memref<22x22xf32, #tpu.memory_space<vmem>>, vector<1x16xf32>
    tpu.vector_store %arg5[%c6, %c3_19], %24 {strides = array<i32>} : memref<22x22xf32, #tpu.memory_space<vmem>>, vector<1x16xf32>,
    %26 = vector.extract_strided_slice %7 {offsets = [0, 48], sizes = [1, 16], strides = [1, 1]} : vector<1x256xf32> to vector<1x16xf32>
    %c6_20 = arith.constant 6 : index
    %c3_21 = arith.constant 3 : index
    %27 = vector.load %arg6[%c6_20, %c3_21] : memref<22x22xf32, #tpu.memory_space<vmem>>, vector<1x16xf32>
    tpu.vector_store %arg6[%c6_20, %c3_21], %26 {strides = array<i32>} : memref<22x22xf32, #tpu.memory_space<vmem>>, vector<1x16xf32>,
    %28 = vector.extract_strided_slice %5 {offsets = [0, 64], sizes = [1, 16], strides = [1, 1]} : vector<1x256xf32> to vector<1x16xf32>
    %c7 = arith.constant 7 : index
    %c3_22 = arith.constant 3 : index
    %29 = vector.load %arg5[%c7, %c3_22] : memref<22x22xf32, #tpu.memory_space<vmem>>, vector<1x16xf32>
    tpu.vector_store %arg5[%c7, %c3_22], %28 {strides = array<i32>} : memref<22x22xf32, #tpu.memory_space<vmem>>, vector<1x16xf32>,
    %30 = vector.extract_strided_slice %7 {offsets = [0, 64], sizes = [1, 16], strides = [1, 1]} : vector<1x256xf32> to vector<1x16xf32>
    %c7_23 = arith.constant 7 : index
    %c3_24 = arith.constant 3 : index
    %31 = vector.load %arg6[%c7_23, %c3_24] : memref<22x22xf32, #tpu.memory_space<vmem>>, vector<1x16xf32>
    tpu.vector_store %arg6[%c7_23, %c3_24], %30 {strides = array<i32>} : memref<22x22xf32, #tpu.memory_space<vmem>>, vector<1x16xf32>,
    %32 = vector.extract_strided_slice %5 {offsets = [0, 80], sizes = [1, 16], strides = [1, 1]} : vector<1x256xf32> to vector<1x16xf32>
    %c8 = arith.constant 8 : index
    %c3_25 = arith.constant 3 : index
    %33 = vector.load %arg5[%c8, %c3_25] : memref<22x22xf32, #tpu.memory_space<vmem>>, vector<1x16xf32>
    tpu.vector_store %arg5[%c8, %c3_25], %32 {strides = array<i32>} : memref<22x22xf32, #tpu.memory_space<vmem>>, vector<1x16xf32>,
    %34 = vector.extract_strided_slice %7 {offsets = [0, 80], sizes = [1, 16], strides = [1, 1]} : vector<1x256xf32> to vector<1x16xf32>
    %c8_26 = arith.constant 8 : index
    %c3_27 = arith.constant 3 : index
    %35 = vector.load %arg6[%c8_26, %c3_27] : memref<22x22xf32, #tpu.memory_space<vmem>>, vector<1x16xf32>
    tpu.vector_store %arg6[%c8_26, %c3_27], %34 {strides = array<i32>} : memref<22x22xf32, #tpu.memory_space<vmem>>, vector<1x16xf32>,
    %36 = vector.extract_strided_slice %5 {offsets = [0, 96], sizes = [1, 16], strides = [1, 1]} : vector<1x256xf32> to vector<1x16xf32>
    %c9 = arith.constant 9 : index
    %c3_28 = arith.constant 3 : index
    %37 = vector.load %arg5[%c9, %c3_28] : memref<22x22xf32, #tpu.memory_space<vmem>>, vector<1x16xf32>
    tpu.vector_store %arg5[%c9, %c3_28], %36 {strides = array<i32>} : memref<22x22xf32, #tpu.memory_space<vmem>>, vector<1x16xf32>,
    %38 = vector.extract_strided_slice %7 {offsets = [0, 96], sizes = [1, 16], strides = [1, 1]} : vector<1x256xf32> to vector<1x16xf32>
    %c9_29 = arith.constant 9 : index
    %c3_30 = arith.constant 3 : index
    %39 = vector.load %arg6[%c9_29, %c3_30] : memref<22x22xf32, #tpu.memory_space<vmem>>, vector<1x16xf32>
    tpu.vector_store %arg6[%c9_29, %c3_30], %38 {strides = array<i32>} : memref<22x22xf32, #tpu.memory_space<vmem>>, vector<1x16xf32>,
    %40 = vector.extract_strided_slice %5 {offsets = [0, 112], sizes = [1, 16], strides = [1, 1]} : vector<1x256xf32> to vector<1x16xf32>
    %c10 = arith.constant 10 : index
    %c3_31 = arith.constant 3 : index
    %41 = vector.load %arg5[%c10, %c3_31] : memref<22x22xf32, #tpu.memory_space<vmem>>, vector<1x16xf32>
    tpu.vector_store %arg5[%c10, %c3_31], %40 {strides = array<i32>} : memref<22x22xf32, #tpu.memory_space<vmem>>, vector<1x16xf32>,
    %42 = vector.extract_strided_slice %7 {offsets = [0, 112], sizes = [1, 16], strides = [1, 1]} : vector<1x256xf32> to vector<1x16xf32>
    %c10_32 = arith.constant 10 : index
    %c3_33 = arith.constant 3 : index
    %43 = vector.load %arg6[%c10_32, %c3_33] : memref<22x22xf32, #tpu.memory_space<vmem>>, vector<1x16xf32>
    tpu.vector_store %arg6[%c10_32, %c3_33], %42 {strides = array<i32>} : memref<22x22xf32, #tpu.memory_space<vmem>>, vector<1x16xf32>,
    %44 = vector.extract_strided_slice %5 {offsets = [0, 128], sizes = [1, 16], strides = [1, 1]} : vector<1x256xf32> to vector<1x16xf32>
    %c11 = arith.constant 11 : index
    %c3_34 = arith.constant 3 : index
    %45 = vector.load %arg5[%c11, %c3_34] : memref<22x22xf32, #tpu.memory_space<vmem>>, vector<1x16xf32>
    tpu.vector_store %arg5[%c11, %c3_34], %44 {strides = array<i32>} : memref<22x22xf32, #tpu.memory_space<vmem>>, vector<1x16xf32>,
    %46 = vector.extract_strided_slice %7 {offsets = [0, 128], sizes = [1, 16], strides = [1, 1]} : vector<1x256xf32> to vector<1x16xf32>
    %c11_35 = arith.constant 11 : index
    %c3_36 = arith.constant 3 : index
    %47 = vector.load %arg6[%c11_35, %c3_36] : memref<22x22xf32, #tpu.memory_space<vmem>>, vector<1x16xf32>
    tpu.vector_store %arg6[%c11_35, %c3_36], %46 {strides = array<i32>} : memref<22x22xf32, #tpu.memory_space<vmem>>, vector<1x16xf32>,
    %48 = vector.extract_strided_slice %5 {offsets = [0, 144], sizes = [1, 16], strides = [1, 1]} : vector<1x256xf32> to vector<1x16xf32>
    %c12 = arith.constant 12 : index
    %c3_37 = arith.constant 3 : index
    %49 = vector.load %arg5[%c12, %c3_37] : memref<22x22xf32, #tpu.memory_space<vmem>>, vector<1x16xf32>
    tpu.vector_store %arg5[%c12, %c3_37], %48 {strides = array<i32>} : memref<22x22xf32, #tpu.memory_space<vmem>>, vector<1x16xf32>,
    %50 = vector.extract_strided_slice %7 {offsets = [0, 144], sizes = [1, 16], strides = [1, 1]} : vector<1x256xf32> to vector<1x16xf32>
    %c12_38 = arith.constant 12 : index
    %c3_39 = arith.constant 3 : index
    %51 = vector.load %arg6[%c12_38, %c3_39] : memref<22x22xf32, #tpu.memory_space<vmem>>, vector<1x16xf32>
    tpu.vector_store %arg6[%c12_38, %c3_39], %50 {strides = array<i32>} : memref<22x22xf32, #tpu.memory_space<vmem>>, vector<1x16xf32>,
    %52 = vector.extract_strided_slice %5 {offsets = [0, 160], sizes = [1, 16], strides = [1, 1]} : vector<1x256xf32> to vector<1x16xf32>
    %c13 = arith.constant 13 : index
    %c3_40 = arith.constant 3 : index
    %53 = vector.load %arg5[%c13, %c3_40] : memref<22x22xf32, #tpu.memory_space<vmem>>, vector<1x16xf32>
    tpu.vector_store %arg5[%c13, %c3_40], %52 {strides = array<i32>} : memref<22x22xf32, #tpu.memory_space<vmem>>, vector<1x16xf32>,
    %54 = vector.extract_strided_slice %7 {offsets = [0, 160], sizes = [1, 16], strides = [1, 1]} : vector<1x256xf32> to vector<1x16xf32>
    %c13_41 = arith.constant 13 : index
    %c3_42 = arith.constant 3 : index
    %55 = vector.load %arg6[%c13_41, %c3_42] : memref<22x22xf32, #tpu.memory_space<vmem>>, vector<1x16xf32>
    tpu.vector_store %arg6[%c13_41, %c3_42], %54 {strides = array<i32>} : memref<22x22xf32, #tpu.memory_space<vmem>>, vector<1x16xf32>,
    %56 = vector.extract_strided_slice %5 {offsets = [0, 176], sizes = [1, 16], strides = [1, 1]} : vector<1x256xf32> to vector<1x16xf32>
    %c14 = arith.constant 14 : index
    %c3_43 = arith.constant 3 : index
    %57 = vector.load %arg5[%c14, %c3_43] : memref<22x22xf32, #tpu.memory_space<vmem>>, vector<1x16xf32>
    tpu.vector_store %arg5[%c14, %c3_43], %56 {strides = array<i32>} : memref<22x22xf32, #tpu.memory_space<vmem>>, vector<1x16xf32>,
    %58 = vector.extract_strided_slice %7 {offsets = [0, 176], sizes = [1, 16], strides = [1, 1]} : vector<1x256xf32> to vector<1x16xf32>
    %c14_44 = arith.constant 14 : index
    %c3_45 = arith.constant 3 : index
    %59 = vector.load %arg6[%c14_44, %c3_45] : memref<22x22xf32, #tpu.memory_space<vmem>>, vector<1x16xf32>
    tpu.vector_store %arg6[%c14_44, %c3_45], %58 {strides = array<i32>} : memref<22x22xf32, #tpu.memory_space<vmem>>, vector<1x16xf32>,
    %60 = vector.extract_strided_slice %5 {offsets = [0, 192], sizes = [1, 16], strides = [1, 1]} : vector<1x256xf32> to vector<1x16xf32>
    %c15 = arith.constant 15 : index
    %c3_46 = arith.constant 3 : index
    %61 = vector.load %arg5[%c15, %c3_46] : memref<22x22xf32, #tpu.memory_space<vmem>>, vector<1x16xf32>
    tpu.vector_store %arg5[%c15, %c3_46], %60 {strides = array<i32>} : memref<22x22xf32, #tpu.memory_space<vmem>>, vector<1x16xf32>,
    %62 = vector.extract_strided_slice %7 {offsets = [0, 192], sizes = [1, 16], strides = [1, 1]} : vector<1x256xf32> to vector<1x16xf32>
    %c15_47 = arith.constant 15 : index
    %c3_48 = arith.constant 3 : index
    %63 = vector.load %arg6[%c15_47, %c3_48] : memref<22x22xf32, #tpu.memory_space<vmem>>, vector<1x16xf32>
    tpu.vector_store %arg6[%c15_47, %c3_48], %62 {strides = array<i32>} : memref<22x22xf32, #tpu.memory_space<vmem>>, vector<1x16xf32>,
    %64 = vector.extract_strided_slice %5 {offsets = [0, 208], sizes = [1, 16], strides = [1, 1]} : vector<1x256xf32> to vector<1x16xf32>
    %c16 = arith.constant 16 : index
    %c3_49 = arith.constant 3 : index
    %65 = vector.load %arg5[%c16, %c3_49] : memref<22x22xf32, #tpu.memory_space<vmem>>, vector<1x16xf32>
    tpu.vector_store %arg5[%c16, %c3_49], %64 {strides = array<i32>} : memref<22x22xf32, #tpu.memory_space<vmem>>, vector<1x16xf32>,
    %66 = vector.extract_strided_slice %7 {offsets = [0, 208], sizes = [1, 16], strides = [1, 1]} : vector<1x256xf32> to vector<1x16xf32>
    %c16_50 = arith.constant 16 : index
    %c3_51 = arith.constant 3 : index
    %67 = vector.load %arg6[%c16_50, %c3_51] : memref<22x22xf32, #tpu.memory_space<vmem>>, vector<1x16xf32>
    tpu.vector_store %arg6[%c16_50, %c3_51], %66 {strides = array<i32>} : memref<22x22xf32, #tpu.memory_space<vmem>>, vector<1x16xf32>,
    %68 = vector.extract_strided_slice %5 {offsets = [0, 224], sizes = [1, 16], strides = [1, 1]} : vector<1x256xf32> to vector<1x16xf32>
    %c17 = arith.constant 17 : index
    %c3_52 = arith.constant 3 : index
    %69 = vector.load %arg5[%c17, %c3_52] : memref<22x22xf32, #tpu.memory_space<vmem>>, vector<1x16xf32>
    tpu.vector_store %arg5[%c17, %c3_52], %68 {strides = array<i32>} : memref<22x22xf32, #tpu.memory_space<vmem>>, vector<1x16xf32>,
    %70 = vector.extract_strided_slice %7 {offsets = [0, 224], sizes = [1, 16], strides = [1, 1]} : vector<1x256xf32> to vector<1x16xf32>
    %c17_53 = arith.constant 17 : index
    %c3_54 = arith.constant 3 : index
    %71 = vector.load %arg6[%c17_53, %c3_54] : memref<22x22xf32, #tpu.memory_space<vmem>>, vector<1x16xf32>
    tpu.vector_store %arg6[%c17_53, %c3_54], %70 {strides = array<i32>} : memref<22x22xf32, #tpu.memory_space<vmem>>, vector<1x16xf32>,
    %72 = vector.extract_strided_slice %5 {offsets = [0, 240], sizes = [1, 16], strides = [1, 1]} : vector<1x256xf32> to vector<1x16xf32>
    %c18 = arith.constant 18 : index
    %c3_55 = arith.constant 3 : index
    %73 = vector.load %arg5[%c18, %c3_55] : memref<22x22xf32, #tpu.memory_space<vmem>>, vector<1x16xf32>
    tpu.vector_store %arg5[%c18, %c3_55], %72 {strides = array<i32>} : memref<22x22xf32, #tpu.memory_space<vmem>>, vector<1x16xf32>,
    %74 = vector.extract_strided_slice %7 {offsets = [0, 240], sizes = [1, 16], strides = [1, 1]} : vector<1x256xf32> to vector<1x16xf32>
    %c18_56 = arith.constant 18 : index
    %c3_57 = arith.constant 3 : index
    %75 = vector.load %arg6[%c18_56, %c3_57] : memref<22x22xf32, #tpu.memory_space<vmem>>, vector<1x16xf32>
    tpu.vector_store %arg6[%c18_56, %c3_57], %74 {strides = array<i32>} : memref<22x22xf32, #tpu.memory_space<vmem>>, vector<1x16xf32>,
    %c0_58 = arith.constant 0 : index
    %c0_59 = arith.constant 0 : index
    %76 = vector.load %arg5[%c0_58, %c0_59] : memref<22x22xf32, #tpu.memory_space<vmem>>, vector<22x22xf32>
    %c0_60 = arith.constant 0 : index
    %c0_61 = arith.constant 0 : index
    %77 = vector.load %arg6[%c0_60, %c0_61] : memref<22x22xf32, #tpu.memory_space<vmem>>, vector<22x22xf32>
    %cst_62 = arith.constant 0.000000e+00 : f32
    %78 = vector.broadcast %cst_62 : f32 to vector<16x16xf32>
    %c0_63 = arith.constant 0 : index
    %79 = memref.load %arg2[%c0_63] : memref<1xf32, #tpu.memory_space<smem>>
    %80 = vector.broadcast %79 : f32 to vector<16x16xf32>
    %81 = arith.addf %78, %80 : vector<16x16xf32>
    %82 = vector.extract_strided_slice %76 {offsets = [0, 0], sizes = [22, 16], strides = [1, 1]} : vector<22x22xf32> to vector<22x16xf32>
    %83 = vector.extract_strided_slice %77 {offsets = [0, 0], sizes = [22, 16], strides = [1, 1]} : vector<22x22xf32> to vector<22x16xf32>
    %c0_64 = arith.constant 0 : index
    %84 = memref.load %arg1[%c0_64] : memref<98xf32, #tpu.memory_space<smem>>
    %85 = vector.extract_strided_slice %82 {offsets = [0, 0], sizes = [16, 16], strides = [1, 1]} : vector<22x16xf32> to vector<16x16xf32>
    %86 = vector.broadcast %84 : f32 to vector<16x16xf32>
    %87 = arith.mulf %86, %85 : vector<16x16xf32>
    %88 = arith.addf %81, %87 : vector<16x16xf32>
    %c49 = arith.constant 49 : index
    %89 = memref.load %arg1[%c49] : memref<98xf32, #tpu.memory_space<smem>>
    %90 = vector.extract_strided_slice %83 {offsets = [0, 0], sizes = [16, 16], strides = [1, 1]} : vector<22x16xf32> to vector<16x16xf32>
    %91 = vector.broadcast %89 : f32 to vector<16x16xf32>
    %92 = arith.mulf %91, %90 : vector<16x16xf32>
    %93 = arith.addf %88, %92 : vector<16x16xf32>
    %c7_65 = arith.constant 7 : index
    %94 = memref.load %arg1[%c7_65] : memref<98xf32, #tpu.memory_space<smem>>
    %95 = vector.extract_strided_slice %82 {offsets = [1, 0], sizes = [16, 16], strides = [1, 1]} : vector<22x16xf32> to vector<16x16xf32>
    %96 = vector.broadcast %94 : f32 to vector<16x16xf32>
    %97 = arith.mulf %96, %95 : vector<16x16xf32>
    %98 = arith.addf %93, %97 : vector<16x16xf32>
    %c56 = arith.constant 56 : index
    %99 = memref.load %arg1[%c56] : memref<98xf32, #tpu.memory_space<smem>>
    %100 = vector.extract_strided_slice %83 {offsets = [1, 0], sizes = [16, 16], strides = [1, 1]} : vector<22x16xf32> to vector<16x16xf32>
    %101 = vector.broadcast %99 : f32 to vector<16x16xf32>
    %102 = arith.mulf %101, %100 : vector<16x16xf32>
    %103 = arith.addf %98, %102 : vector<16x16xf32>
    %c14_66 = arith.constant 14 : index
    %104 = memref.load %arg1[%c14_66] : memref<98xf32, #tpu.memory_space<smem>>
    %105 = vector.extract_strided_slice %82 {offsets = [2, 0], sizes = [16, 16], strides = [1, 1]} : vector<22x16xf32> to vector<16x16xf32>
    %106 = vector.broadcast %104 : f32 to vector<16x16xf32>
    %107 = arith.mulf %106, %105 : vector<16x16xf32>
    %108 = arith.addf %103, %107 : vector<16x16xf32>
    %c63 = arith.constant 63 : index
    %109 = memref.load %arg1[%c63] : memref<98xf32, #tpu.memory_space<smem>>
    %110 = vector.extract_strided_slice %83 {offsets = [2, 0], sizes = [16, 16], strides = [1, 1]} : vector<22x16xf32> to vector<16x16xf32>
    %111 = vector.broadcast %109 : f32 to vector<16x16xf32>
    %112 = arith.mulf %111, %110 : vector<16x16xf32>
    %113 = arith.addf %108, %112 : vector<16x16xf32>
    %c21 = arith.constant 21 : index
    %114 = memref.load %arg1[%c21] : memref<98xf32, #tpu.memory_space<smem>>
    %115 = vector.extract_strided_slice %82 {offsets = [3, 0], sizes = [16, 16], strides = [1, 1]} : vector<22x16xf32> to vector<16x16xf32>
    %116 = vector.broadcast %114 : f32 to vector<16x16xf32>
    %117 = arith.mulf %116, %115 : vector<16x16xf32>
    %118 = arith.addf %113, %117 : vector<16x16xf32>
    %c70 = arith.constant 70 : index
    %119 = memref.load %arg1[%c70] : memref<98xf32, #tpu.memory_space<smem>>
    %120 = vector.extract_strided_slice %83 {offsets = [3, 0], sizes = [16, 16], strides = [1, 1]} : vector<22x16xf32> to vector<16x16xf32>
    %121 = vector.broadcast %119 : f32 to vector<16x16xf32>
    %122 = arith.mulf %121, %120 : vector<16x16xf32>
    %123 = arith.addf %118, %122 : vector<16x16xf32>
    %c28 = arith.constant 28 : index
    %124 = memref.load %arg1[%c28] : memref<98xf32, #tpu.memory_space<smem>>
    %125 = vector.extract_strided_slice %82 {offsets = [4, 0], sizes = [16, 16], strides = [1, 1]} : vector<22x16xf32> to vector<16x16xf32>
    %126 = vector.broadcast %124 : f32 to vector<16x16xf32>
    %127 = arith.mulf %126, %125 : vector<16x16xf32>
    %128 = arith.addf %123, %127 : vector<16x16xf32>
    %c77 = arith.constant 77 : index
    %129 = memref.load %arg1[%c77] : memref<98xf32, #tpu.memory_space<smem>>
    %130 = vector.extract_strided_slice %83 {offsets = [4, 0], sizes = [16, 16], strides = [1, 1]} : vector<22x16xf32> to vector<16x16xf32>
    %131 = vector.broadcast %129 : f32 to vector<16x16xf32>
    %132 = arith.mulf %131, %130 : vector<16x16xf32>
    %133 = arith.addf %128, %132 : vector<16x16xf32>
    %c35 = arith.constant 35 : index
    %134 = memref.load %arg1[%c35] : memref<98xf32, #tpu.memory_space<smem>>
    %135 = vector.extract_strided_slice %82 {offsets = [5, 0], sizes = [16, 16], strides = [1, 1]} : vector<22x16xf32> to vector<16x16xf32>
    %136 = vector.broadcast %134 : f32 to vector<16x16xf32>
    %137 = arith.mulf %136, %135 : vector<16x16xf32>
    %138 = arith.addf %133, %137 : vector<16x16xf32>
    %c84 = arith.constant 84 : index
    %139 = memref.load %arg1[%c84] : memref<98xf32, #tpu.memory_space<smem>>
    %140 = vector.extract_strided_slice %83 {offsets = [5, 0], sizes = [16, 16], strides = [1, 1]} : vector<22x16xf32> to vector<16x16xf32>
    %141 = vector.broadcast %139 : f32 to vector<16x16xf32>
    %142 = arith.mulf %141, %140 : vector<16x16xf32>
    %143 = arith.addf %138, %142 : vector<16x16xf32>
    %c42 = arith.constant 42 : index
    %144 = memref.load %arg1[%c42] : memref<98xf32, #tpu.memory_space<smem>>
    %145 = vector.extract_strided_slice %82 {offsets = [6, 0], sizes = [16, 16], strides = [1, 1]} : vector<22x16xf32> to vector<16x16xf32>
    %146 = vector.broadcast %144 : f32 to vector<16x16xf32>
    %147 = arith.mulf %146, %145 : vector<16x16xf32>
    %148 = arith.addf %143, %147 : vector<16x16xf32>
    %c91 = arith.constant 91 : index
    %149 = memref.load %arg1[%c91] : memref<98xf32, #tpu.memory_space<smem>>
    %150 = vector.extract_strided_slice %83 {offsets = [6, 0], sizes = [16, 16], strides = [1, 1]} : vector<22x16xf32> to vector<16x16xf32>
    %151 = vector.broadcast %149 : f32 to vector<16x16xf32>
    %152 = arith.mulf %151, %150 : vector<16x16xf32>
    %153 = arith.addf %148, %152 : vector<16x16xf32>
    %154 = vector.extract_strided_slice %76 {offsets = [0, 1], sizes = [22, 16], strides = [1, 1]} : vector<22x22xf32> to vector<22x16xf32>
    %155 = vector.extract_strided_slice %77 {offsets = [0, 1], sizes = [22, 16], strides = [1, 1]} : vector<22x22xf32> to vector<22x16xf32>
    %c1 = arith.constant 1 : index
    %156 = memref.load %arg1[%c1] : memref<98xf32, #tpu.memory_space<smem>>
    %157 = vector.extract_strided_slice %154 {offsets = [0, 0], sizes = [16, 16], strides = [1, 1]} : vector<22x16xf32> to vector<16x16xf32>
    %158 = vector.broadcast %156 : f32 to vector<16x16xf32>
    %159 = arith.mulf %158, %157 : vector<16x16xf32>
    %160 = arith.addf %153, %159 : vector<16x16xf32>
    %c50 = arith.constant 50 : index
    %161 = memref.load %arg1[%c50] : memref<98xf32, #tpu.memory_space<smem>>
    %162 = vector.extract_strided_slice %155 {offsets = [0, 0], sizes = [16, 16], strides = [1, 1]} : vector<22x16xf32> to vector<16x16xf32>
    %163 = vector.broadcast %161 : f32 to vector<16x16xf32>
    %164 = arith.mulf %163, %162 : vector<16x16xf32>
    %165 = arith.addf %160, %164 : vector<16x16xf32>
    %c8_67 = arith.constant 8 : index
    %166 = memref.load %arg1[%c8_67] : memref<98xf32, #tpu.memory_space<smem>>
    %167 = vector.extract_strided_slice %154 {offsets = [1, 0], sizes = [16, 16], strides = [1, 1]} : vector<22x16xf32> to vector<16x16xf32>
    %168 = vector.broadcast %166 : f32 to vector<16x16xf32>
    %169 = arith.mulf %168, %167 : vector<16x16xf32>
    %170 = arith.addf %165, %169 : vector<16x16xf32>
    %c57 = arith.constant 57 : index
    %171 = memref.load %arg1[%c57] : memref<98xf32, #tpu.memory_space<smem>>
    %172 = vector.extract_strided_slice %155 {offsets = [1, 0], sizes = [16, 16], strides = [1, 1]} : vector<22x16xf32> to vector<16x16xf32>
    %173 = vector.broadcast %171 : f32 to vector<16x16xf32>
    %174 = arith.mulf %173, %172 : vector<16x16xf32>
    %175 = arith.addf %170, %174 : vector<16x16xf32>
    %c15_68 = arith.constant 15 : index
    %176 = memref.load %arg1[%c15_68] : memref<98xf32, #tpu.memory_space<smem>>
    %177 = vector.extract_strided_slice %154 {offsets = [2, 0], sizes = [16, 16], strides = [1, 1]} : vector<22x16xf32> to vector<16x16xf32>
    %178 = vector.broadcast %176 : f32 to vector<16x16xf32>
    %179 = arith.mulf %178, %177 : vector<16x16xf32>
    %180 = arith.addf %175, %179 : vector<16x16xf32>
    %c64 = arith.constant 64 : index
    %181 = memref.load %arg1[%c64] : memref<98xf32, #tpu.memory_space<smem>>
    %182 = vector.extract_strided_slice %155 {offsets = [2, 0], sizes = [16, 16], strides = [1, 1]} : vector<22x16xf32> to vector<16x16xf32>
    %183 = vector.broadcast %181 : f32 to vector<16x16xf32>
    %184 = arith.mulf %183, %182 : vector<16x16xf32>
    %185 = arith.addf %180, %184 : vector<16x16xf32>
    %c22 = arith.constant 22 : index
    %186 = memref.load %arg1[%c22] : memref<98xf32, #tpu.memory_space<smem>>
    %187 = vector.extract_strided_slice %154 {offsets = [3, 0], sizes = [16, 16], strides = [1, 1]} : vector<22x16xf32> to vector<16x16xf32>
    %188 = vector.broadcast %186 : f32 to vector<16x16xf32>
    %189 = arith.mulf %188, %187 : vector<16x16xf32>
    %190 = arith.addf %185, %189 : vector<16x16xf32>
    %c71 = arith.constant 71 : index
    %191 = memref.load %arg1[%c71] : memref<98xf32, #tpu.memory_space<smem>>
    %192 = vector.extract_strided_slice %155 {offsets = [3, 0], sizes = [16, 16], strides = [1, 1]} : vector<22x16xf32> to vector<16x16xf32>
    %193 = vector.broadcast %191 : f32 to vector<16x16xf32>
    %194 = arith.mulf %193, %192 : vector<16x16xf32>
    %195 = arith.addf %190, %194 : vector<16x16xf32>
    %c29 = arith.constant 29 : index
    %196 = memref.load %arg1[%c29] : memref<98xf32, #tpu.memory_space<smem>>
    %197 = vector.extract_strided_slice %154 {offsets = [4, 0], sizes = [16, 16], strides = [1, 1]} : vector<22x16xf32> to vector<16x16xf32>
    %198 = vector.broadcast %196 : f32 to vector<16x16xf32>
    %199 = arith.mulf %198, %197 : vector<16x16xf32>
    %200 = arith.addf %195, %199 : vector<16x16xf32>
    %c78 = arith.constant 78 : index
    %201 = memref.load %arg1[%c78] : memref<98xf32, #tpu.memory_space<smem>>
    %202 = vector.extract_strided_slice %155 {offsets = [4, 0], sizes = [16, 16], strides = [1, 1]} : vector<22x16xf32> to vector<16x16xf32>
    %203 = vector.broadcast %201 : f32 to vector<16x16xf32>
    %204 = arith.mulf %203, %202 : vector<16x16xf32>
    %205 = arith.addf %200, %204 : vector<16x16xf32>
    %c36 = arith.constant 36 : index
    %206 = memref.load %arg1[%c36] : memref<98xf32, #tpu.memory_space<smem>>
    %207 = vector.extract_strided_slice %154 {offsets = [5, 0], sizes = [16, 16], strides = [1, 1]} : vector<22x16xf32> to vector<16x16xf32>
    %208 = vector.broadcast %206 : f32 to vector<16x16xf32>
    %209 = arith.mulf %208, %207 : vector<16x16xf32>
    %210 = arith.addf %205, %209 : vector<16x16xf32>
    %c85 = arith.constant 85 : index
    %211 = memref.load %arg1[%c85] : memref<98xf32, #tpu.memory_space<smem>>
    %212 = vector.extract_strided_slice %155 {offsets = [5, 0], sizes = [16, 16], strides = [1, 1]} : vector<22x16xf32> to vector<16x16xf32>
    %213 = vector.broadcast %211 : f32 to vector<16x16xf32>
    %214 = arith.mulf %213, %212 : vector<16x16xf32>
    %215 = arith.addf %210, %214 : vector<16x16xf32>
    %c43 = arith.constant 43 : index
    %216 = memref.load %arg1[%c43] : memref<98xf32, #tpu.memory_space<smem>>
    %217 = vector.extract_strided_slice %154 {offsets = [6, 0], sizes = [16, 16], strides = [1, 1]} : vector<22x16xf32> to vector<16x16xf32>
    %218 = vector.broadcast %216 : f32 to vector<16x16xf32>
    %219 = arith.mulf %218, %217 : vector<16x16xf32>
    %220 = arith.addf %215, %219 : vector<16x16xf32>
    %c92 = arith.constant 92 : index
    %221 = memref.load %arg1[%c92] : memref<98xf32, #tpu.memory_space<smem>>
    %222 = vector.extract_strided_slice %155 {offsets = [6, 0], sizes = [16, 16], strides = [1, 1]} : vector<22x16xf32> to vector<16x16xf32>
    %223 = vector.broadcast %221 : f32 to vector<16x16xf32>
    %224 = arith.mulf %223, %222 : vector<16x16xf32>
    %225 = arith.addf %220, %224 : vector<16x16xf32>
    %226 = vector.extract_strided_slice %76 {offsets = [0, 2], sizes = [22, 16], strides = [1, 1]} : vector<22x22xf32> to vector<22x16xf32>
    %227 = vector.extract_strided_slice %77 {offsets = [0, 2], sizes = [22, 16], strides = [1, 1]} : vector<22x22xf32> to vector<22x16xf32>
    %c2 = arith.constant 2 : index
    %228 = memref.load %arg1[%c2] : memref<98xf32, #tpu.memory_space<smem>>
    %229 = vector.extract_strided_slice %226 {offsets = [0, 0], sizes = [16, 16], strides = [1, 1]} : vector<22x16xf32> to vector<16x16xf32>
    %230 = vector.broadcast %228 : f32 to vector<16x16xf32>
    %231 = arith.mulf %230, %229 : vector<16x16xf32>
    %232 = arith.addf %225, %231 : vector<16x16xf32>
    %c51 = arith.constant 51 : index
    %233 = memref.load %arg1[%c51] : memref<98xf32, #tpu.memory_space<smem>>
    %234 = vector.extract_strided_slice %227 {offsets = [0, 0], sizes = [16, 16], strides = [1, 1]} : vector<22x16xf32> to vector<16x16xf32>
    %235 = vector.broadcast %233 : f32 to vector<16x16xf32>
    %236 = arith.mulf %235, %234 : vector<16x16xf32>
    %237 = arith.addf %232, %236 : vector<16x16xf32>
    %c9_69 = arith.constant 9 : index
    %238 = memref.load %arg1[%c9_69] : memref<98xf32, #tpu.memory_space<smem>>
    %239 = vector.extract_strided_slice %226 {offsets = [1, 0], sizes = [16, 16], strides = [1, 1]} : vector<22x16xf32> to vector<16x16xf32>
    %240 = vector.broadcast %238 : f32 to vector<16x16xf32>
    %241 = arith.mulf %240, %239 : vector<16x16xf32>
    %242 = arith.addf %237, %241 : vector<16x16xf32>
    %c58 = arith.constant 58 : index
    %243 = memref.load %arg1[%c58] : memref<98xf32, #tpu.memory_space<smem>>
    %244 = vector.extract_strided_slice %227 {offsets = [1, 0], sizes = [16, 16], strides = [1, 1]} : vector<22x16xf32> to vector<16x16xf32>
    %245 = vector.broadcast %243 : f32 to vector<16x16xf32>
    %246 = arith.mulf %245, %244 : vector<16x16xf32>
    %247 = arith.addf %242, %246 : vector<16x16xf32>
    %c16_70 = arith.constant 16 : index
    %248 = memref.load %arg1[%c16_70] : memref<98xf32, #tpu.memory_space<smem>>
    %249 = vector.extract_strided_slice %226 {offsets = [2, 0], sizes = [16, 16], strides = [1, 1]} : vector<22x16xf32> to vector<16x16xf32>
    %250 = vector.broadcast %248 : f32 to vector<16x16xf32>
    %251 = arith.mulf %250, %249 : vector<16x16xf32>
    %252 = arith.addf %247, %251 : vector<16x16xf32>
    %c65 = arith.constant 65 : index
    %253 = memref.load %arg1[%c65] : memref<98xf32, #tpu.memory_space<smem>>
    %254 = vector.extract_strided_slice %227 {offsets = [2, 0], sizes = [16, 16], strides = [1, 1]} : vector<22x16xf32> to vector<16x16xf32>
    %255 = vector.broadcast %253 : f32 to vector<16x16xf32>
    %256 = arith.mulf %255, %254 : vector<16x16xf32>
    %257 = arith.addf %252, %256 : vector<16x16xf32>
    %c23 = arith.constant 23 : index
    %258 = memref.load %arg1[%c23] : memref<98xf32, #tpu.memory_space<smem>>
    %259 = vector.extract_strided_slice %226 {offsets = [3, 0], sizes = [16, 16], strides = [1, 1]} : vector<22x16xf32> to vector<16x16xf32>
    %260 = vector.broadcast %258 : f32 to vector<16x16xf32>
    %261 = arith.mulf %260, %259 : vector<16x16xf32>
    %262 = arith.addf %257, %261 : vector<16x16xf32>
    %c72 = arith.constant 72 : index
    %263 = memref.load %arg1[%c72] : memref<98xf32, #tpu.memory_space<smem>>
    %264 = vector.extract_strided_slice %227 {offsets = [3, 0], sizes = [16, 16], strides = [1, 1]} : vector<22x16xf32> to vector<16x16xf32>
    %265 = vector.broadcast %263 : f32 to vector<16x16xf32>
    %266 = arith.mulf %265, %264 : vector<16x16xf32>
    %267 = arith.addf %262, %266 : vector<16x16xf32>
    %c30 = arith.constant 30 : index
    %268 = memref.load %arg1[%c30] : memref<98xf32, #tpu.memory_space<smem>>
    %269 = vector.extract_strided_slice %226 {offsets = [4, 0], sizes = [16, 16], strides = [1, 1]} : vector<22x16xf32> to vector<16x16xf32>
    %270 = vector.broadcast %268 : f32 to vector<16x16xf32>
    %271 = arith.mulf %270, %269 : vector<16x16xf32>
    %272 = arith.addf %267, %271 : vector<16x16xf32>
    %c79 = arith.constant 79 : index
    %273 = memref.load %arg1[%c79] : memref<98xf32, #tpu.memory_space<smem>>
    %274 = vector.extract_strided_slice %227 {offsets = [4, 0], sizes = [16, 16], strides = [1, 1]} : vector<22x16xf32> to vector<16x16xf32>
    %275 = vector.broadcast %273 : f32 to vector<16x16xf32>
    %276 = arith.mulf %275, %274 : vector<16x16xf32>
    %277 = arith.addf %272, %276 : vector<16x16xf32>
    %c37 = arith.constant 37 : index
    %278 = memref.load %arg1[%c37] : memref<98xf32, #tpu.memory_space<smem>>
    %279 = vector.extract_strided_slice %226 {offsets = [5, 0], sizes = [16, 16], strides = [1, 1]} : vector<22x16xf32> to vector<16x16xf32>
    %280 = vector.broadcast %278 : f32 to vector<16x16xf32>
    %281 = arith.mulf %280, %279 : vector<16x16xf32>
    %282 = arith.addf %277, %281 : vector<16x16xf32>
    %c86 = arith.constant 86 : index
    %283 = memref.load %arg1[%c86] : memref<98xf32, #tpu.memory_space<smem>>
    %284 = vector.extract_strided_slice %227 {offsets = [5, 0], sizes = [16, 16], strides = [1, 1]} : vector<22x16xf32> to vector<16x16xf32>
    %285 = vector.broadcast %283 : f32 to vector<16x16xf32>
    %286 = arith.mulf %285, %284 : vector<16x16xf32>
    %287 = arith.addf %282, %286 : vector<16x16xf32>
    %c44 = arith.constant 44 : index
    %288 = memref.load %arg1[%c44] : memref<98xf32, #tpu.memory_space<smem>>
    %289 = vector.extract_strided_slice %226 {offsets = [6, 0], sizes = [16, 16], strides = [1, 1]} : vector<22x16xf32> to vector<16x16xf32>
    %290 = vector.broadcast %288 : f32 to vector<16x16xf32>
    %291 = arith.mulf %290, %289 : vector<16x16xf32>
    %292 = arith.addf %287, %291 : vector<16x16xf32>
    %c93 = arith.constant 93 : index
    %293 = memref.load %arg1[%c93] : memref<98xf32, #tpu.memory_space<smem>>
    %294 = vector.extract_strided_slice %227 {offsets = [6, 0], sizes = [16, 16], strides = [1, 1]} : vector<22x16xf32> to vector<16x16xf32>
    %295 = vector.broadcast %293 : f32 to vector<16x16xf32>
    %296 = arith.mulf %295, %294 : vector<16x16xf32>
    %297 = arith.addf %292, %296 : vector<16x16xf32>
    %298 = vector.extract_strided_slice %76 {offsets = [0, 3], sizes = [22, 16], strides = [1, 1]} : vector<22x22xf32> to vector<22x16xf32>
    %299 = vector.extract_strided_slice %77 {offsets = [0, 3], sizes = [22, 16], strides = [1, 1]} : vector<22x22xf32> to vector<22x16xf32>
    %c3_71 = arith.constant 3 : index
    %300 = memref.load %arg1[%c3_71] : memref<98xf32, #tpu.memory_space<smem>>
    %301 = vector.extract_strided_slice %298 {offsets = [0, 0], sizes = [16, 16], strides = [1, 1]} : vector<22x16xf32> to vector<16x16xf32>
    %302 = vector.broadcast %300 : f32 to vector<16x16xf32>
    %303 = arith.mulf %302, %301 : vector<16x16xf32>
    %304 = arith.addf %297, %303 : vector<16x16xf32>
    %c52 = arith.constant 52 : index
    %305 = memref.load %arg1[%c52] : memref<98xf32, #tpu.memory_space<smem>>
    %306 = vector.extract_strided_slice %299 {offsets = [0, 0], sizes = [16, 16], strides = [1, 1]} : vector<22x16xf32> to vector<16x16xf32>
    %307 = vector.broadcast %305 : f32 to vector<16x16xf32>
    %308 = arith.mulf %307, %306 : vector<16x16xf32>
    %309 = arith.addf %304, %308 : vector<16x16xf32>
    %c10_72 = arith.constant 10 : index
    %310 = memref.load %arg1[%c10_72] : memref<98xf32, #tpu.memory_space<smem>>
    %311 = vector.extract_strided_slice %298 {offsets = [1, 0], sizes = [16, 16], strides = [1, 1]} : vector<22x16xf32> to vector<16x16xf32>
    %312 = vector.broadcast %310 : f32 to vector<16x16xf32>
    %313 = arith.mulf %312, %311 : vector<16x16xf32>
    %314 = arith.addf %309, %313 : vector<16x16xf32>
    %c59 = arith.constant 59 : index
    %315 = memref.load %arg1[%c59] : memref<98xf32, #tpu.memory_space<smem>>
    %316 = vector.extract_strided_slice %299 {offsets = [1, 0], sizes = [16, 16], strides = [1, 1]} : vector<22x16xf32> to vector<16x16xf32>
    %317 = vector.broadcast %315 : f32 to vector<16x16xf32>
    %318 = arith.mulf %317, %316 : vector<16x16xf32>
    %319 = arith.addf %314, %318 : vector<16x16xf32>
    %c17_73 = arith.constant 17 : index
    %320 = memref.load %arg1[%c17_73] : memref<98xf32, #tpu.memory_space<smem>>
    %321 = vector.extract_strided_slice %298 {offsets = [2, 0], sizes = [16, 16], strides = [1, 1]} : vector<22x16xf32> to vector<16x16xf32>
    %322 = vector.broadcast %320 : f32 to vector<16x16xf32>
    %323 = arith.mulf %322, %321 : vector<16x16xf32>
    %324 = arith.addf %319, %323 : vector<16x16xf32>
    %c66 = arith.constant 66 : index
    %325 = memref.load %arg1[%c66] : memref<98xf32, #tpu.memory_space<smem>>
    %326 = vector.extract_strided_slice %299 {offsets = [2, 0], sizes = [16, 16], strides = [1, 1]} : vector<22x16xf32> to vector<16x16xf32>
    %327 = vector.broadcast %325 : f32 to vector<16x16xf32>
    %328 = arith.mulf %327, %326 : vector<16x16xf32>
    %329 = arith.addf %324, %328 : vector<16x16xf32>
    %c24 = arith.constant 24 : index
    %330 = memref.load %arg1[%c24] : memref<98xf32, #tpu.memory_space<smem>>
    %331 = vector.extract_strided_slice %298 {offsets = [3, 0], sizes = [16, 16], strides = [1, 1]} : vector<22x16xf32> to vector<16x16xf32>
    %332 = vector.broadcast %330 : f32 to vector<16x16xf32>
    %333 = arith.mulf %332, %331 : vector<16x16xf32>
    %334 = arith.addf %329, %333 : vector<16x16xf32>
    %c73 = arith.constant 73 : index
    %335 = memref.load %arg1[%c73] : memref<98xf32, #tpu.memory_space<smem>>
    %336 = vector.extract_strided_slice %299 {offsets = [3, 0], sizes = [16, 16], strides = [1, 1]} : vector<22x16xf32> to vector<16x16xf32>
    %337 = vector.broadcast %335 : f32 to vector<16x16xf32>
    %338 = arith.mulf %337, %336 : vector<16x16xf32>
    %339 = arith.addf %334, %338 : vector<16x16xf32>
    %c31 = arith.constant 31 : index
    %340 = memref.load %arg1[%c31] : memref<98xf32, #tpu.memory_space<smem>>
    %341 = vector.extract_strided_slice %298 {offsets = [4, 0], sizes = [16, 16], strides = [1, 1]} : vector<22x16xf32> to vector<16x16xf32>
    %342 = vector.broadcast %340 : f32 to vector<16x16xf32>
    %343 = arith.mulf %342, %341 : vector<16x16xf32>
    %344 = arith.addf %339, %343 : vector<16x16xf32>
    %c80 = arith.constant 80 : index
    %345 = memref.load %arg1[%c80] : memref<98xf32, #tpu.memory_space<smem>>
    %346 = vector.extract_strided_slice %299 {offsets = [4, 0], sizes = [16, 16], strides = [1, 1]} : vector<22x16xf32> to vector<16x16xf32>
    %347 = vector.broadcast %345 : f32 to vector<16x16xf32>
    %348 = arith.mulf %347, %346 : vector<16x16xf32>
    %349 = arith.addf %344, %348 : vector<16x16xf32>
    %c38 = arith.constant 38 : index
    %350 = memref.load %arg1[%c38] : memref<98xf32, #tpu.memory_space<smem>>
    %351 = vector.extract_strided_slice %298 {offsets = [5, 0], sizes = [16, 16], strides = [1, 1]} : vector<22x16xf32> to vector<16x16xf32>
    %352 = vector.broadcast %350 : f32 to vector<16x16xf32>
    %353 = arith.mulf %352, %351 : vector<16x16xf32>
    %354 = arith.addf %349, %353 : vector<16x16xf32>
    %c87 = arith.constant 87 : index
    %355 = memref.load %arg1[%c87] : memref<98xf32, #tpu.memory_space<smem>>
    %356 = vector.extract_strided_slice %299 {offsets = [5, 0], sizes = [16, 16], strides = [1, 1]} : vector<22x16xf32> to vector<16x16xf32>
    %357 = vector.broadcast %355 : f32 to vector<16x16xf32>
    %358 = arith.mulf %357, %356 : vector<16x16xf32>
    %359 = arith.addf %354, %358 : vector<16x16xf32>
    %c45 = arith.constant 45 : index
    %360 = memref.load %arg1[%c45] : memref<98xf32, #tpu.memory_space<smem>>
    %361 = vector.extract_strided_slice %298 {offsets = [6, 0], sizes = [16, 16], strides = [1, 1]} : vector<22x16xf32> to vector<16x16xf32>
    %362 = vector.broadcast %360 : f32 to vector<16x16xf32>
    %363 = arith.mulf %362, %361 : vector<16x16xf32>
    %364 = arith.addf %359, %363 : vector<16x16xf32>
    %c94 = arith.constant 94 : index
    %365 = memref.load %arg1[%c94] : memref<98xf32, #tpu.memory_space<smem>>
    %366 = vector.extract_strided_slice %299 {offsets = [6, 0], sizes = [16, 16], strides = [1, 1]} : vector<22x16xf32> to vector<16x16xf32>
    %367 = vector.broadcast %365 : f32 to vector<16x16xf32>
    %368 = arith.mulf %367, %366 : vector<16x16xf32>
    %369 = arith.addf %364, %368 : vector<16x16xf32>
    %370 = vector.extract_strided_slice %76 {offsets = [0, 4], sizes = [22, 16], strides = [1, 1]} : vector<22x22xf32> to vector<22x16xf32>
    %371 = vector.extract_strided_slice %77 {offsets = [0, 4], sizes = [22, 16], strides = [1, 1]} : vector<22x22xf32> to vector<22x16xf32>
    %c4_74 = arith.constant 4 : index
    %372 = memref.load %arg1[%c4_74] : memref<98xf32, #tpu.memory_space<smem>>
    %373 = vector.extract_strided_slice %370 {offsets = [0, 0], sizes = [16, 16], strides = [1, 1]} : vector<22x16xf32> to vector<16x16xf32>
    %374 = vector.broadcast %372 : f32 to vector<16x16xf32>
    %375 = arith.mulf %374, %373 : vector<16x16xf32>
    %376 = arith.addf %369, %375 : vector<16x16xf32>
    %c53 = arith.constant 53 : index
    %377 = memref.load %arg1[%c53] : memref<98xf32, #tpu.memory_space<smem>>
    %378 = vector.extract_strided_slice %371 {offsets = [0, 0], sizes = [16, 16], strides = [1, 1]} : vector<22x16xf32> to vector<16x16xf32>
    %379 = vector.broadcast %377 : f32 to vector<16x16xf32>
    %380 = arith.mulf %379, %378 : vector<16x16xf32>
    %381 = arith.addf %376, %380 : vector<16x16xf32>
    %c11_75 = arith.constant 11 : index
    %382 = memref.load %arg1[%c11_75] : memref<98xf32, #tpu.memory_space<smem>>
    %383 = vector.extract_strided_slice %370 {offsets = [1, 0], sizes = [16, 16], strides = [1, 1]} : vector<22x16xf32> to vector<16x16xf32>
    %384 = vector.broadcast %382 : f32 to vector<16x16xf32>
    %385 = arith.mulf %384, %383 : vector<16x16xf32>
    %386 = arith.addf %381, %385 : vector<16x16xf32>
    %c60 = arith.constant 60 : index
    %387 = memref.load %arg1[%c60] : memref<98xf32, #tpu.memory_space<smem>>
    %388 = vector.extract_strided_slice %371 {offsets = [1, 0], sizes = [16, 16], strides = [1, 1]} : vector<22x16xf32> to vector<16x16xf32>
    %389 = vector.broadcast %387 : f32 to vector<16x16xf32>
    %390 = arith.mulf %389, %388 : vector<16x16xf32>
    %391 = arith.addf %386, %390 : vector<16x16xf32>
    %c18_76 = arith.constant 18 : index
    %392 = memref.load %arg1[%c18_76] : memref<98xf32, #tpu.memory_space<smem>>
    %393 = vector.extract_strided_slice %370 {offsets = [2, 0], sizes = [16, 16], strides = [1, 1]} : vector<22x16xf32> to vector<16x16xf32>
    %394 = vector.broadcast %392 : f32 to vector<16x16xf32>
    %395 = arith.mulf %394, %393 : vector<16x16xf32>
    %396 = arith.addf %391, %395 : vector<16x16xf32>
    %c67 = arith.constant 67 : index
    %397 = memref.load %arg1[%c67] : memref<98xf32, #tpu.memory_space<smem>>
    %398 = vector.extract_strided_slice %371 {offsets = [2, 0], sizes = [16, 16], strides = [1, 1]} : vector<22x16xf32> to vector<16x16xf32>
    %399 = vector.broadcast %397 : f32 to vector<16x16xf32>
    %400 = arith.mulf %399, %398 : vector<16x16xf32>
    %401 = arith.addf %396, %400 : vector<16x16xf32>
    %c25 = arith.constant 25 : index
    %402 = memref.load %arg1[%c25] : memref<98xf32, #tpu.memory_space<smem>>
    %403 = vector.extract_strided_slice %370 {offsets = [3, 0], sizes = [16, 16], strides = [1, 1]} : vector<22x16xf32> to vector<16x16xf32>
    %404 = vector.broadcast %402 : f32 to vector<16x16xf32>
    %405 = arith.mulf %404, %403 : vector<16x16xf32>
    %406 = arith.addf %401, %405 : vector<16x16xf32>
    %c74 = arith.constant 74 : index
    %407 = memref.load %arg1[%c74] : memref<98xf32, #tpu.memory_space<smem>>
    %408 = vector.extract_strided_slice %371 {offsets = [3, 0], sizes = [16, 16], strides = [1, 1]} : vector<22x16xf32> to vector<16x16xf32>
    %409 = vector.broadcast %407 : f32 to vector<16x16xf32>
    %410 = arith.mulf %409, %408 : vector<16x16xf32>
    %411 = arith.addf %406, %410 : vector<16x16xf32>
    %c32 = arith.constant 32 : index
    %412 = memref.load %arg1[%c32] : memref<98xf32, #tpu.memory_space<smem>>
    %413 = vector.extract_strided_slice %370 {offsets = [4, 0], sizes = [16, 16], strides = [1, 1]} : vector<22x16xf32> to vector<16x16xf32>
    %414 = vector.broadcast %412 : f32 to vector<16x16xf32>
    %415 = arith.mulf %414, %413 : vector<16x16xf32>
    %416 = arith.addf %411, %415 : vector<16x16xf32>
    %c81 = arith.constant 81 : index
    %417 = memref.load %arg1[%c81] : memref<98xf32, #tpu.memory_space<smem>>
    %418 = vector.extract_strided_slice %371 {offsets = [4, 0], sizes = [16, 16], strides = [1, 1]} : vector<22x16xf32> to vector<16x16xf32>
    %419 = vector.broadcast %417 : f32 to vector<16x16xf32>
    %420 = arith.mulf %419, %418 : vector<16x16xf32>
    %421 = arith.addf %416, %420 : vector<16x16xf32>
    %c39 = arith.constant 39 : index
    %422 = memref.load %arg1[%c39] : memref<98xf32, #tpu.memory_space<smem>>
    %423 = vector.extract_strided_slice %370 {offsets = [5, 0], sizes = [16, 16], strides = [1, 1]} : vector<22x16xf32> to vector<16x16xf32>
    %424 = vector.broadcast %422 : f32 to vector<16x16xf32>
    %425 = arith.mulf %424, %423 : vector<16x16xf32>
    %426 = arith.addf %421, %425 : vector<16x16xf32>
    %c88 = arith.constant 88 : index
    %427 = memref.load %arg1[%c88] : memref<98xf32, #tpu.memory_space<smem>>
    %428 = vector.extract_strided_slice %371 {offsets = [5, 0], sizes = [16, 16], strides = [1, 1]} : vector<22x16xf32> to vector<16x16xf32>
    %429 = vector.broadcast %427 : f32 to vector<16x16xf32>
    %430 = arith.mulf %429, %428 : vector<16x16xf32>
    %431 = arith.addf %426, %430 : vector<16x16xf32>
    %c46 = arith.constant 46 : index
    %432 = memref.load %arg1[%c46] : memref<98xf32, #tpu.memory_space<smem>>
    %433 = vector.extract_strided_slice %370 {offsets = [6, 0], sizes = [16, 16], strides = [1, 1]} : vector<22x16xf32> to vector<16x16xf32>
    %434 = vector.broadcast %432 : f32 to vector<16x16xf32>
    %435 = arith.mulf %434, %433 : vector<16x16xf32>
    %436 = arith.addf %431, %435 : vector<16x16xf32>
    %c95 = arith.constant 95 : index
    %437 = memref.load %arg1[%c95] : memref<98xf32, #tpu.memory_space<smem>>
    %438 = vector.extract_strided_slice %371 {offsets = [6, 0], sizes = [16, 16], strides = [1, 1]} : vector<22x16xf32> to vector<16x16xf32>
    %439 = vector.broadcast %437 : f32 to vector<16x16xf32>
    %440 = arith.mulf %439, %438 : vector<16x16xf32>
    %441 = arith.addf %436, %440 : vector<16x16xf32>
    %442 = vector.extract_strided_slice %76 {offsets = [0, 5], sizes = [22, 16], strides = [1, 1]} : vector<22x22xf32> to vector<22x16xf32>
    %443 = vector.extract_strided_slice %77 {offsets = [0, 5], sizes = [22, 16], strides = [1, 1]} : vector<22x22xf32> to vector<22x16xf32>
    %c5_77 = arith.constant 5 : index
    %444 = memref.load %arg1[%c5_77] : memref<98xf32, #tpu.memory_space<smem>>
    %445 = vector.extract_strided_slice %442 {offsets = [0, 0], sizes = [16, 16], strides = [1, 1]} : vector<22x16xf32> to vector<16x16xf32>
    %446 = vector.broadcast %444 : f32 to vector<16x16xf32>
    %447 = arith.mulf %446, %445 : vector<16x16xf32>
    %448 = arith.addf %441, %447 : vector<16x16xf32>
    %c54 = arith.constant 54 : index
    %449 = memref.load %arg1[%c54] : memref<98xf32, #tpu.memory_space<smem>>
    %450 = vector.extract_strided_slice %443 {offsets = [0, 0], sizes = [16, 16], strides = [1, 1]} : vector<22x16xf32> to vector<16x16xf32>
    %451 = vector.broadcast %449 : f32 to vector<16x16xf32>
    %452 = arith.mulf %451, %450 : vector<16x16xf32>
    %453 = arith.addf %448, %452 : vector<16x16xf32>
    %c12_78 = arith.constant 12 : index
    %454 = memref.load %arg1[%c12_78] : memref<98xf32, #tpu.memory_space<smem>>
    %455 = vector.extract_strided_slice %442 {offsets = [1, 0], sizes = [16, 16], strides = [1, 1]} : vector<22x16xf32> to vector<16x16xf32>
    %456 = vector.broadcast %454 : f32 to vector<16x16xf32>
    %457 = arith.mulf %456, %455 : vector<16x16xf32>
    %458 = arith.addf %453, %457 : vector<16x16xf32>
    %c61 = arith.constant 61 : index
    %459 = memref.load %arg1[%c61] : memref<98xf32, #tpu.memory_space<smem>>
    %460 = vector.extract_strided_slice %443 {offsets = [1, 0], sizes = [16, 16], strides = [1, 1]} : vector<22x16xf32> to vector<16x16xf32>
    %461 = vector.broadcast %459 : f32 to vector<16x16xf32>
    %462 = arith.mulf %461, %460 : vector<16x16xf32>
    %463 = arith.addf %458, %462 : vector<16x16xf32>
    %c19 = arith.constant 19 : index
    %464 = memref.load %arg1[%c19] : memref<98xf32, #tpu.memory_space<smem>>
    %465 = vector.extract_strided_slice %442 {offsets = [2, 0], sizes = [16, 16], strides = [1, 1]} : vector<22x16xf32> to vector<16x16xf32>
    %466 = vector.broadcast %464 : f32 to vector<16x16xf32>
    %467 = arith.mulf %466, %465 : vector<16x16xf32>
    %468 = arith.addf %463, %467 : vector<16x16xf32>
    %c68 = arith.constant 68 : index
    %469 = memref.load %arg1[%c68] : memref<98xf32, #tpu.memory_space<smem>>
    %470 = vector.extract_strided_slice %443 {offsets = [2, 0], sizes = [16, 16], strides = [1, 1]} : vector<22x16xf32> to vector<16x16xf32>
    %471 = vector.broadcast %469 : f32 to vector<16x16xf32>
    %472 = arith.mulf %471, %470 : vector<16x16xf32>
    %473 = arith.addf %468, %472 : vector<16x16xf32>
    %c26 = arith.constant 26 : index
    %474 = memref.load %arg1[%c26] : memref<98xf32, #tpu.memory_space<smem>>
    %475 = vector.extract_strided_slice %442 {offsets = [3, 0], sizes = [16, 16], strides = [1, 1]} : vector<22x16xf32> to vector<16x16xf32>
    %476 = vector.broadcast %474 : f32 to vector<16x16xf32>
    %477 = arith.mulf %476, %475 : vector<16x16xf32>
    %478 = arith.addf %473, %477 : vector<16x16xf32>
    %c75 = arith.constant 75 : index
    %479 = memref.load %arg1[%c75] : memref<98xf32, #tpu.memory_space<smem>>
    %480 = vector.extract_strided_slice %443 {offsets = [3, 0], sizes = [16, 16], strides = [1, 1]} : vector<22x16xf32> to vector<16x16xf32>
    %481 = vector.broadcast %479 : f32 to vector<16x16xf32>
    %482 = arith.mulf %481, %480 : vector<16x16xf32>
    %483 = arith.addf %478, %482 : vector<16x16xf32>
    %c33 = arith.constant 33 : index
    %484 = memref.load %arg1[%c33] : memref<98xf32, #tpu.memory_space<smem>>
    %485 = vector.extract_strided_slice %442 {offsets = [4, 0], sizes = [16, 16], strides = [1, 1]} : vector<22x16xf32> to vector<16x16xf32>
    %486 = vector.broadcast %484 : f32 to vector<16x16xf32>
    %487 = arith.mulf %486, %485 : vector<16x16xf32>
    %488 = arith.addf %483, %487 : vector<16x16xf32>
    %c82 = arith.constant 82 : index
    %489 = memref.load %arg1[%c82] : memref<98xf32, #tpu.memory_space<smem>>
    %490 = vector.extract_strided_slice %443 {offsets = [4, 0], sizes = [16, 16], strides = [1, 1]} : vector<22x16xf32> to vector<16x16xf32>
    %491 = vector.broadcast %489 : f32 to vector<16x16xf32>
    %492 = arith.mulf %491, %490 : vector<16x16xf32>
    %493 = arith.addf %488, %492 : vector<16x16xf32>
    %c40 = arith.constant 40 : index
    %494 = memref.load %arg1[%c40] : memref<98xf32, #tpu.memory_space<smem>>
    %495 = vector.extract_strided_slice %442 {offsets = [5, 0], sizes = [16, 16], strides = [1, 1]} : vector<22x16xf32> to vector<16x16xf32>
    %496 = vector.broadcast %494 : f32 to vector<16x16xf32>
    %497 = arith.mulf %496, %495 : vector<16x16xf32>
    %498 = arith.addf %493, %497 : vector<16x16xf32>
    %c89 = arith.constant 89 : index
    %499 = memref.load %arg1[%c89] : memref<98xf32, #tpu.memory_space<smem>>
    %500 = vector.extract_strided_slice %443 {offsets = [5, 0], sizes = [16, 16], strides = [1, 1]} : vector<22x16xf32> to vector<16x16xf32>
    %501 = vector.broadcast %499 : f32 to vector<16x16xf32>
    %502 = arith.mulf %501, %500 : vector<16x16xf32>
    %503 = arith.addf %498, %502 : vector<16x16xf32>
    %c47 = arith.constant 47 : index
    %504 = memref.load %arg1[%c47] : memref<98xf32, #tpu.memory_space<smem>>
    %505 = vector.extract_strided_slice %442 {offsets = [6, 0], sizes = [16, 16], strides = [1, 1]} : vector<22x16xf32> to vector<16x16xf32>
    %506 = vector.broadcast %504 : f32 to vector<16x16xf32>
    %507 = arith.mulf %506, %505 : vector<16x16xf32>
    %508 = arith.addf %503, %507 : vector<16x16xf32>
    %c96 = arith.constant 96 : index
    %509 = memref.load %arg1[%c96] : memref<98xf32, #tpu.memory_space<smem>>
    %510 = vector.extract_strided_slice %443 {offsets = [6, 0], sizes = [16, 16], strides = [1, 1]} : vector<22x16xf32> to vector<16x16xf32>
    %511 = vector.broadcast %509 : f32 to vector<16x16xf32>
    %512 = arith.mulf %511, %510 : vector<16x16xf32>
    %513 = arith.addf %508, %512 : vector<16x16xf32>
    %514 = vector.extract_strided_slice %76 {offsets = [0, 6], sizes = [22, 16], strides = [1, 1]} : vector<22x22xf32> to vector<22x16xf32>
    %515 = vector.extract_strided_slice %77 {offsets = [0, 6], sizes = [22, 16], strides = [1, 1]} : vector<22x22xf32> to vector<22x16xf32>
    %c6_79 = arith.constant 6 : index
    %516 = memref.load %arg1[%c6_79] : memref<98xf32, #tpu.memory_space<smem>>
    %517 = vector.extract_strided_slice %514 {offsets = [0, 0], sizes = [16, 16], strides = [1, 1]} : vector<22x16xf32> to vector<16x16xf32>
    %518 = vector.broadcast %516 : f32 to vector<16x16xf32>
    %519 = arith.mulf %518, %517 : vector<16x16xf32>
    %520 = arith.addf %513, %519 : vector<16x16xf32>
    %c55 = arith.constant 55 : index
    %521 = memref.load %arg1[%c55] : memref<98xf32, #tpu.memory_space<smem>>
    %522 = vector.extract_strided_slice %515 {offsets = [0, 0], sizes = [16, 16], strides = [1, 1]} : vector<22x16xf32> to vector<16x16xf32>
    %523 = vector.broadcast %521 : f32 to vector<16x16xf32>
    %524 = arith.mulf %523, %522 : vector<16x16xf32>
    %525 = arith.addf %520, %524 : vector<16x16xf32>
    %c13_80 = arith.constant 13 : index
    %526 = memref.load %arg1[%c13_80] : memref<98xf32, #tpu.memory_space<smem>>
    %527 = vector.extract_strided_slice %514 {offsets = [1, 0], sizes = [16, 16], strides = [1, 1]} : vector<22x16xf32> to vector<16x16xf32>
    %528 = vector.broadcast %526 : f32 to vector<16x16xf32>
    %529 = arith.mulf %528, %527 : vector<16x16xf32>
    %530 = arith.addf %525, %529 : vector<16x16xf32>
    %c62 = arith.constant 62 : index
    %531 = memref.load %arg1[%c62] : memref<98xf32, #tpu.memory_space<smem>>
    %532 = vector.extract_strided_slice %515 {offsets = [1, 0], sizes = [16, 16], strides = [1, 1]} : vector<22x16xf32> to vector<16x16xf32>
    %533 = vector.broadcast %531 : f32 to vector<16x16xf32>
    %534 = arith.mulf %533, %532 : vector<16x16xf32>
    %535 = arith.addf %530, %534 : vector<16x16xf32>
    %c20 = arith.constant 20 : index
    %536 = memref.load %arg1[%c20] : memref<98xf32, #tpu.memory_space<smem>>
    %537 = vector.extract_strided_slice %514 {offsets = [2, 0], sizes = [16, 16], strides = [1, 1]} : vector<22x16xf32> to vector<16x16xf32>
    %538 = vector.broadcast %536 : f32 to vector<16x16xf32>
    %539 = arith.mulf %538, %537 : vector<16x16xf32>
    %540 = arith.addf %535, %539 : vector<16x16xf32>
    %c69 = arith.constant 69 : index
    %541 = memref.load %arg1[%c69] : memref<98xf32, #tpu.memory_space<smem>>
    %542 = vector.extract_strided_slice %515 {offsets = [2, 0], sizes = [16, 16], strides = [1, 1]} : vector<22x16xf32> to vector<16x16xf32>
    %543 = vector.broadcast %541 : f32 to vector<16x16xf32>
    %544 = arith.mulf %543, %542 : vector<16x16xf32>
    %545 = arith.addf %540, %544 : vector<16x16xf32>
    %c27 = arith.constant 27 : index
    %546 = memref.load %arg1[%c27] : memref<98xf32, #tpu.memory_space<smem>>
    %547 = vector.extract_strided_slice %514 {offsets = [3, 0], sizes = [16, 16], strides = [1, 1]} : vector<22x16xf32> to vector<16x16xf32>
    %548 = vector.broadcast %546 : f32 to vector<16x16xf32>
    %549 = arith.mulf %548, %547 : vector<16x16xf32>
    %550 = arith.addf %545, %549 : vector<16x16xf32>
    %c76 = arith.constant 76 : index
    %551 = memref.load %arg1[%c76] : memref<98xf32, #tpu.memory_space<smem>>
    %552 = vector.extract_strided_slice %515 {offsets = [3, 0], sizes = [16, 16], strides = [1, 1]} : vector<22x16xf32> to vector<16x16xf32>
    %553 = vector.broadcast %551 : f32 to vector<16x16xf32>
    %554 = arith.mulf %553, %552 : vector<16x16xf32>
    %555 = arith.addf %550, %554 : vector<16x16xf32>
    %c34 = arith.constant 34 : index
    %556 = memref.load %arg1[%c34] : memref<98xf32, #tpu.memory_space<smem>>
    %557 = vector.extract_strided_slice %514 {offsets = [4, 0], sizes = [16, 16], strides = [1, 1]} : vector<22x16xf32> to vector<16x16xf32>
    %558 = vector.broadcast %556 : f32 to vector<16x16xf32>
    %559 = arith.mulf %558, %557 : vector<16x16xf32>
    %560 = arith.addf %555, %559 : vector<16x16xf32>
    %c83 = arith.constant 83 : index
    %561 = memref.load %arg1[%c83] : memref<98xf32, #tpu.memory_space<smem>>
    %562 = vector.extract_strided_slice %515 {offsets = [4, 0], sizes = [16, 16], strides = [1, 1]} : vector<22x16xf32> to vector<16x16xf32>
    %563 = vector.broadcast %561 : f32 to vector<16x16xf32>
    %564 = arith.mulf %563, %562 : vector<16x16xf32>
    %565 = arith.addf %560, %564 : vector<16x16xf32>
    %c41 = arith.constant 41 : index
    %566 = memref.load %arg1[%c41] : memref<98xf32, #tpu.memory_space<smem>>
    %567 = vector.extract_strided_slice %514 {offsets = [5, 0], sizes = [16, 16], strides = [1, 1]} : vector<22x16xf32> to vector<16x16xf32>
    %568 = vector.broadcast %566 : f32 to vector<16x16xf32>
    %569 = arith.mulf %568, %567 : vector<16x16xf32>
    %570 = arith.addf %565, %569 : vector<16x16xf32>
    %c90 = arith.constant 90 : index
    %571 = memref.load %arg1[%c90] : memref<98xf32, #tpu.memory_space<smem>>
    %572 = vector.extract_strided_slice %515 {offsets = [5, 0], sizes = [16, 16], strides = [1, 1]} : vector<22x16xf32> to vector<16x16xf32>
    %573 = vector.broadcast %571 : f32 to vector<16x16xf32>
    %574 = arith.mulf %573, %572 : vector<16x16xf32>
    %575 = arith.addf %570, %574 : vector<16x16xf32>
    %c48 = arith.constant 48 : index
    %576 = memref.load %arg1[%c48] : memref<98xf32, #tpu.memory_space<smem>>
    %577 = vector.extract_strided_slice %514 {offsets = [6, 0], sizes = [16, 16], strides = [1, 1]} : vector<22x16xf32> to vector<16x16xf32>
    %578 = vector.broadcast %576 : f32 to vector<16x16xf32>
    %579 = arith.mulf %578, %577 : vector<16x16xf32>
    %580 = arith.addf %575, %579 : vector<16x16xf32>
    %c97 = arith.constant 97 : index
    %581 = memref.load %arg1[%c97] : memref<98xf32, #tpu.memory_space<smem>>
    %582 = vector.extract_strided_slice %515 {offsets = [6, 0], sizes = [16, 16], strides = [1, 1]} : vector<22x16xf32> to vector<16x16xf32>
    %583 = vector.broadcast %581 : f32 to vector<16x16xf32>
    %584 = arith.mulf %583, %582 : vector<16x16xf32>
    %585 = arith.addf %580, %584 : vector<16x16xf32>
    %586 = arith.negf %585 : vector<16x16xf32>
    %587 = math.exp %586 : vector<16x16xf32>
    %cst_81 = arith.constant 1.000000e+00 : f32
    %588 = vector.broadcast %cst_81 : f32 to vector<16x16xf32>
    %589 = arith.addf %588, %587 : vector<16x16xf32>
    %590 = arith.divf %588, %589 : vector<16x16xf32>
    %591 = vector.extract_strided_slice %590 {offsets = [0, 0], sizes = [1, 16], strides = [1, 1]} : vector<16x16xf32> to vector<1x16xf32>
    %c0_82 = arith.constant 0 : index
    %c0_83 = arith.constant 0 : index
    %592 = vector.load %arg7[%c0_82, %c0_83] : memref<1x256xf32, #tpu.memory_space<vmem>>, vector<1x16xf32>
    tpu.vector_store %arg7[%c0_82, %c0_83], %591 {strides = array<i32>} : memref<1x256xf32, #tpu.memory_space<vmem>>, vector<1x16xf32>,
    %593 = vector.extract_strided_slice %590 {offsets = [1, 0], sizes = [1, 16], strides = [1, 1]} : vector<16x16xf32> to vector<1x16xf32>
    %c0_84 = arith.constant 0 : index
    %c16_85 = arith.constant 16 : index
    %594 = vector.load %arg7[%c0_84, %c16_85] : memref<1x256xf32, #tpu.memory_space<vmem>>, vector<1x16xf32>
    tpu.vector_store %arg7[%c0_84, %c16_85], %593 {strides = array<i32>} : memref<1x256xf32, #tpu.memory_space<vmem>>, vector<1x16xf32>,
    %595 = vector.extract_strided_slice %590 {offsets = [2, 0], sizes = [1, 16], strides = [1, 1]} : vector<16x16xf32> to vector<1x16xf32>
    %c0_86 = arith.constant 0 : index
    %c32_87 = arith.constant 32 : index
    %596 = vector.load %arg7[%c0_86, %c32_87] : memref<1x256xf32, #tpu.memory_space<vmem>>, vector<1x16xf32>
    tpu.vector_store %arg7[%c0_86, %c32_87], %595 {strides = array<i32>} : memref<1x256xf32, #tpu.memory_space<vmem>>, vector<1x16xf32>,
    %597 = vector.extract_strided_slice %590 {offsets = [3, 0], sizes = [1, 16], strides = [1, 1]} : vector<16x16xf32> to vector<1x16xf32>
    %c0_88 = arith.constant 0 : index
    %c48_89 = arith.constant 48 : index
    %598 = vector.load %arg7[%c0_88, %c48_89] : memref<1x256xf32, #tpu.memory_space<vmem>>, vector<1x16xf32>
    tpu.vector_store %arg7[%c0_88, %c48_89], %597 {strides = array<i32>} : memref<1x256xf32, #tpu.memory_space<vmem>>, vector<1x16xf32>,
    %599 = vector.extract_strided_slice %590 {offsets = [4, 0], sizes = [1, 16], strides = [1, 1]} : vector<16x16xf32> to vector<1x16xf32>
    %c0_90 = arith.constant 0 : index
    %c64_91 = arith.constant 64 : index
    %600 = vector.load %arg7[%c0_90, %c64_91] : memref<1x256xf32, #tpu.memory_space<vmem>>, vector<1x16xf32>
    tpu.vector_store %arg7[%c0_90, %c64_91], %599 {strides = array<i32>} : memref<1x256xf32, #tpu.memory_space<vmem>>, vector<1x16xf32>,
    %601 = vector.extract_strided_slice %590 {offsets = [5, 0], sizes = [1, 16], strides = [1, 1]} : vector<16x16xf32> to vector<1x16xf32>
    %c0_92 = arith.constant 0 : index
    %c80_93 = arith.constant 80 : index
    %602 = vector.load %arg7[%c0_92, %c80_93] : memref<1x256xf32, #tpu.memory_space<vmem>>, vector<1x16xf32>
    tpu.vector_store %arg7[%c0_92, %c80_93], %601 {strides = array<i32>} : memref<1x256xf32, #tpu.memory_space<vmem>>, vector<1x16xf32>,
    %603 = vector.extract_strided_slice %590 {offsets = [6, 0], sizes = [1, 16], strides = [1, 1]} : vector<16x16xf32> to vector<1x16xf32>
    %c0_94 = arith.constant 0 : index
    %c96_95 = arith.constant 96 : index
    %604 = vector.load %arg7[%c0_94, %c96_95] : memref<1x256xf32, #tpu.memory_space<vmem>>, vector<1x16xf32>
    tpu.vector_store %arg7[%c0_94, %c96_95], %603 {strides = array<i32>} : memref<1x256xf32, #tpu.memory_space<vmem>>, vector<1x16xf32>,
    %605 = vector.extract_strided_slice %590 {offsets = [7, 0], sizes = [1, 16], strides = [1, 1]} : vector<16x16xf32> to vector<1x16xf32>
    %c0_96 = arith.constant 0 : index
    %c112 = arith.constant 112 : index
    %606 = vector.load %arg7[%c0_96, %c112] : memref<1x256xf32, #tpu.memory_space<vmem>>, vector<1x16xf32>
    tpu.vector_store %arg7[%c0_96, %c112], %605 {strides = array<i32>} : memref<1x256xf32, #tpu.memory_space<vmem>>, vector<1x16xf32>,
    %607 = vector.extract_strided_slice %590 {offsets = [8, 0], sizes = [1, 16], strides = [1, 1]} : vector<16x16xf32> to vector<1x16xf32>
    %c0_97 = arith.constant 0 : index
    %c128 = arith.constant 128 : index
    %608 = vector.load %arg7[%c0_97, %c128] : memref<1x256xf32, #tpu.memory_space<vmem>>, vector<1x16xf32>
    tpu.vector_store %arg7[%c0_97, %c128], %607 {strides = array<i32>} : memref<1x256xf32, #tpu.memory_space<vmem>>, vector<1x16xf32>,
    %609 = vector.extract_strided_slice %590 {offsets = [9, 0], sizes = [1, 16], strides = [1, 1]} : vector<16x16xf32> to vector<1x16xf32>
    %c0_98 = arith.constant 0 : index
    %c144 = arith.constant 144 : index
    %610 = vector.load %arg7[%c0_98, %c144] : memref<1x256xf32, #tpu.memory_space<vmem>>, vector<1x16xf32>
    tpu.vector_store %arg7[%c0_98, %c144], %609 {strides = array<i32>} : memref<1x256xf32, #tpu.memory_space<vmem>>, vector<1x16xf32>,
    %611 = vector.extract_strided_slice %590 {offsets = [10, 0], sizes = [1, 16], strides = [1, 1]} : vector<16x16xf32> to vector<1x16xf32>
    %c0_99 = arith.constant 0 : index
    %c160 = arith.constant 160 : index
    %612 = vector.load %arg7[%c0_99, %c160] : memref<1x256xf32, #tpu.memory_space<vmem>>, vector<1x16xf32>
    tpu.vector_store %arg7[%c0_99, %c160], %611 {strides = array<i32>} : memref<1x256xf32, #tpu.memory_space<vmem>>, vector<1x16xf32>,
    %613 = vector.extract_strided_slice %590 {offsets = [11, 0], sizes = [1, 16], strides = [1, 1]} : vector<16x16xf32> to vector<1x16xf32>
    %c0_100 = arith.constant 0 : index
    %c176 = arith.constant 176 : index
    %614 = vector.load %arg7[%c0_100, %c176] : memref<1x256xf32, #tpu.memory_space<vmem>>, vector<1x16xf32>
    tpu.vector_store %arg7[%c0_100, %c176], %613 {strides = array<i32>} : memref<1x256xf32, #tpu.memory_space<vmem>>, vector<1x16xf32>,
    %615 = vector.extract_strided_slice %590 {offsets = [12, 0], sizes = [1, 16], strides = [1, 1]} : vector<16x16xf32> to vector<1x16xf32>
    %c0_101 = arith.constant 0 : index
    %c192 = arith.constant 192 : index
    %616 = vector.load %arg7[%c0_101, %c192] : memref<1x256xf32, #tpu.memory_space<vmem>>, vector<1x16xf32>
    tpu.vector_store %arg7[%c0_101, %c192], %615 {strides = array<i32>} : memref<1x256xf32, #tpu.memory_space<vmem>>, vector<1x16xf32>,
    %617 = vector.extract_strided_slice %590 {offsets = [13, 0], sizes = [1, 16], strides = [1, 1]} : vector<16x16xf32> to vector<1x16xf32>
    %c0_102 = arith.constant 0 : index
    %c208 = arith.constant 208 : index
    %618 = vector.load %arg7[%c0_102, %c208] : memref<1x256xf32, #tpu.memory_space<vmem>>, vector<1x16xf32>
    tpu.vector_store %arg7[%c0_102, %c208], %617 {strides = array<i32>} : memref<1x256xf32, #tpu.memory_space<vmem>>, vector<1x16xf32>,
    %619 = vector.extract_strided_slice %590 {offsets = [14, 0], sizes = [1, 16], strides = [1, 1]} : vector<16x16xf32> to vector<1x16xf32>
    %c0_103 = arith.constant 0 : index
    %c224 = arith.constant 224 : index
    %620 = vector.load %arg7[%c0_103, %c224] : memref<1x256xf32, #tpu.memory_space<vmem>>, vector<1x16xf32>
    tpu.vector_store %arg7[%c0_103, %c224], %619 {strides = array<i32>} : memref<1x256xf32, #tpu.memory_space<vmem>>, vector<1x16xf32>,
    %621 = vector.extract_strided_slice %590 {offsets = [15, 0], sizes = [1, 16], strides = [1, 1]} : vector<16x16xf32> to vector<1x16xf32>
    %c0_104 = arith.constant 0 : index
    %c240 = arith.constant 240 : index
    %622 = vector.load %arg7[%c0_104, %c240] : memref<1x256xf32, #tpu.memory_space<vmem>>, vector<1x16xf32>
    tpu.vector_store %arg7[%c0_104, %c240], %621 {strides = array<i32>} : memref<1x256xf32, #tpu.memory_space<vmem>>, vector<1x16xf32>,
    %c0_105 = arith.constant 0 : index
    %c0_106 = arith.constant 0 : index
    %623 = vector.load %arg7[%c0_105, %c0_106] : memref<1x256xf32, #tpu.memory_space<vmem>>, vector<1x256xf32>
    %624 = vector.broadcast %623 : vector<1x256xf32> to vector<4x256xf32>
    %625 = arith.mulf %1, %624 : vector<4x256xf32>
    %c0_107 = arith.constant 0 : index
    %c0_108 = arith.constant 0 : index
    %c0_109 = arith.constant 0 : index
    %626 = vector.load %arg4[%c0_107, %c0_108, %c0_109] : memref<1x4x256xf32, #tpu.memory_space<vmem>>, vector<1x4x256xf32>
    %627 = vector.shape_cast %626 : vector<1x4x256xf32> to vector<4x256xf32>
    %628 = vector.shape_cast %625 : vector<4x256xf32> to vector<1x4x256xf32>
    tpu.vector_store %arg4[%c0_107, %c0_108, %c0_109], %628 {strides = array<i32>} : memref<1x4x256xf32, #tpu.memory_space<vmem>>, vector<1x4x256xf32>,
    return
  }
  func.func @transform_0(%arg0: i32) -> i32 {
    %c0_i32 = arith.constant 0 : i32
    %c0_i32_0 = arith.constant 0 : i32
    return %c0_i32 : i32
  }
  func.func @transform_1(%arg0: i32) -> i32 {
    %c0_i32 = arith.constant 0 : i32
    %c0_i32_0 = arith.constant 0 : i32
    return %c0_i32 : i32
  }
  func.func @transform_2(%arg0: i32) -> (i32, i32, i32) {
    %c0_i32 = arith.constant 0 : i32
    %c0_i32_0 = arith.constant 0 : i32
    %c0_i32_1 = arith.constant 0 : i32
    return %arg0, %c0_i32, %c0_i32_0 : i32, i32, i32
  }
  func.func @transform_3(%arg0: i32) -> (i32, i32, i32) {
    %c0_i32 = arith.constant 0 : i32
    %c0_i32_0 = arith.constant 0 : i32
    %c0_i32_1 = arith.constant 0 : i32
    return %arg0, %c0_i32, %c0_i32_0 : i32, i32, i32
  }
}

</mosaic_0001>

<llo_original>
// kernel: tpu_custom_call.1
$region0: #{tpu_custom_call.1}
  #allocation0 [shape = 'u32[]', space=smem, size = 0x4, offset = 0x4, fixed_abs, tag = 'smem constant byte address 0x4 - core index']
  #allocation1 [shape = 'u32[144,128]{1,0:T(1,128)}', space=vmem, size = 0x12000, scoped, tag = 'internal scratch']
  #allocation2 [shape = 'f32[22,22]{1,0:T(8,128)}', space=vmem, size = 0x3000, scoped, tag = 'scratch operand']
  #allocation3 [shape = 'f32[22,22]{1,0:T(8,128)}', space=vmem, size = 0x3000, scoped, tag = 'scratch operand']
  #allocation4 [shape = 'f32[1,256]{1,0:T(1,128)}', space=vmem, size = 0x400, scoped, tag = 'scratch operand']
  #allocation5 [shape = 'f32[1]{0:T(128)S(6)}', space=smem, size = 0x200, scoped, tag = 'scoped memory for tpu_custom_call.1']
  %s0 = inlined_call_operand.vmem [shape: f32[98], index: 0, kind: input, shape index: {}]
  %s1 = inlined_call_operand.<no memory space> [shape: f32[1], index: 1, kind: input, shape index: {}]
  %s2 = inlined_call_operand.hbm [shape: f32[2,4,256], index: 2, kind: input, shape index: {}]
  %s3 = inlined_call_operand.hbm [shape: f32[2,4,256], index: 3, kind: output, shape index: {}]
  %s4 = sld [smem:[#allocation0]]
  $region53: #{tpu_custom_call.1} parent=0
    _
  %s6 = ssub.s32 1, %s4
  %s7 = scalar_select 0, %s6, %s4
  %8 = sst [smem:[#allocation5]] %s1
  $region1: #{tpu_custom_call.1} parent=0
    #allocation6 [shape = 'u8[512]{0}', space=smem, size = 0x200, scoped, tag = 'input window, operand 0, single buffered']
    #allocation7 [shape = 's32[2]{0}', space=sflag, size = 0x8, scoped, tag = 'scoped memory for tpu_custom_call.1']
    #allocation8 [shape = 's32[2]{0}', space=sflag, size = 0x8, scoped, tag = 'scoped memory for tpu_custom_call.1']
    #allocation9 [shape = 's32[2]{0}', space=sflag, size = 0x8, scoped, tag = 'scoped memory for tpu_custom_call.1']
    #allocation10 [shape = 'u8[8192]{0}', space=vmem, size = 0x2000, scoped, tag = 'input window, operand 2']
    #allocation11 [shape = 'u8[8192]{0}', space=vmem, size = 0x2000, scoped, tag = 'output window, operand 0']
    %9 = vsyncpa [#allocation9], 0
    %10 = vsyncpa [#allocation7], 0
    %s11 = scalar_lea.sflag [#allocation7], 1
    %12 = vsyncpa %s11, 0
    %13 = vsyncpa [#allocation8], 0
    %s14 = scalar_lea.sflag [#allocation8], 1
    %15 = vsyncpa %s14, 0
    loop: start=0, step=1, limit=4
    $region2: #{tpu_custom_call.1} parent=1 // loop_pre_header
      _
    $region3: #{tpu_custom_call.1} parent=1 // loop_header
      %s17 = sphi 0, %s21
      %p18 = scmp.ge.s32.totalorder %s17, 4
      %s25 = sphi 0, %s25
      %s27 = sphi 0, %s25
      %s28 = sphi 0, %s27
      %s42 = sphi 0, %s28
      %s46 = sphi 0, %s46
      %s48 = sphi 0, %s46
      %s49 = sphi 0, %s48
      %s63 = sphi 0, %s49
      %s69 = sphi 0, %s71
      %s72 = sphi 0, %s69
      %s73 = sphi 0, %s72
      %s89 = sphi 0, %s73
      %s95 = sphi 0, %s97
      %s98 = sphi 0, %s95
      %s99 = sphi 0, %s98
      %s115 = sphi 0, %s99
    $region4: #{tpu_custom_call.1} parent=1 // loop_header_branch
      %20 = sbr.rel (%p18) target = $region8
    $region5: #{tpu_custom_call.1} parent=1 // loop_body
      %s22 = ssub.s32 %s17, 1
      %s23 = ssub.s32 %s17, 2
      %s24 = sadd.s32 %s17, 1
      %s26 = sadd.s32 %s25, 1
      %p29 = scmp.eq.s32.totalorder %s17, 1
      %p30 = scmp.ne.s32.totalorder %s25, %s27
      %p31 = scmp.eq.s32.totalorder %s17, 0
      %p32 = por %p30, %p31
      %p33 = scmp.ne.s32.totalorder %s25, %s27
      %p34 = scmp.eq.s32.totalorder %s22, 1
      %p35 = por %p33, %p34
      %p36 = scmp.ne.s32.totalorder %s27, %s28
      %p37 = scmp.eq.s32.totalorder %s22, 0
      %p38 = por %p36, %p37
      %p39 = scmp.ne.s32.totalorder %s27, %s28
      %p40 = scmp.eq.s32.totalorder %s23, 1
      %p41 = por %p39, %p40
      %p43 = scmp.ne.s32.totalorder %s28, %s42
      %p44 = scmp.eq.s32.totalorder %s23, 0
      %p45 = por %p43, %p44
      %s47 = sadd.s32 %s46, 1
      %p50 = scmp.eq.s32.totalorder %s17, 1
      %p51 = scmp.ne.s32.totalorder %s46, %s48
      %p52 = scmp.eq.s32.totalorder %s17, 0
      %p53 = por %p51, %p52
      %p54 = scmp.ne.s32.totalorder %s46, %s48
      %p55 = scmp.eq.s32.totalorder %s22, 1
      %p56 = por %p54, %p55
      %p57 = scmp.ne.s32.totalorder %s48, %s49
      %p58 = scmp.eq.s32.totalorder %s22, 0
      %p59 = por %p57, %p58
      %p60 = scmp.ne.s32.totalorder %s48, %s49
      %p61 = scmp.eq.s32.totalorder %s23, 1
      %p62 = por %p60, %p61
      %p64 = scmp.ne.s32.totalorder %s49, %s63
      %p65 = scmp.eq.s32.totalorder %s23, 0
      %p66 = por %p64, %p65
      %s67 = ssub.s32 %s17, %s24
      %p68 = scmp.eq.s32.totalorder %s67, 0
      %s70 = sadd.s32 %s69, 1
      %s71 = scalar_select %p68, %s69, %s70
      %p74 = pneg %p68
      %p75 = scmp.eq.s32.totalorder %s17, 1
      %p76 = por %p74, %p75
      %p77 = scmp.ne.s32.totalorder %s69, %s72
      %p78 = scmp.eq.s32.totalorder %s17, 0
      %p79 = por %p77, %p78
      %p80 = scmp.ne.s32.totalorder %s69, %s72
      %p81 = scmp.eq.s32.totalorder %s22, 1
      %p82 = por %p80, %p81
      %p83 = scmp.ne.s32.totalorder %s72, %s73
      %p84 = scmp.eq.s32.totalorder %s22, 0
      %p85 = por %p83, %p84
      %p86 = scmp.ne.s32.totalorder %s72, %s73
      %p87 = scmp.eq.s32.totalorder %s23, 1
      %p88 = por %p86, %p87
      %p90 = scmp.ne.s32.totalorder %s73, %s89
      %p91 = scmp.eq.s32.totalorder %s23, 0
      %p92 = por %p90, %p91
      %s93 = ssub.s32 %s17, %s24
      %p94 = scmp.eq.s32.totalorder %s93, 0
      %s96 = sadd.s32 %s95, 1
      %s97 = scalar_select %p94, %s95, %s96
      %p100 = pneg %p94
      %p101 = scmp.eq.s32.totalorder %s17, 1
      %p102 = por %p100, %p101
      %p103 = scmp.ne.s32.totalorder %s95, %s98
      %p104 = scmp.eq.s32.totalorder %s17, 0
      %p105 = por %p103, %p104
      %p106 = scmp.ne.s32.totalorder %s95, %s98
      %p107 = scmp.eq.s32.totalorder %s22, 1
      %p108 = por %p106, %p107
      %p109 = scmp.ne.s32.totalorder %s98, %s99
      %p110 = scmp.eq.s32.totalorder %s22, 0
      %p111 = por %p109, %p110
      %p112 = scmp.ne.s32.totalorder %s98, %s99
      %p113 = scmp.eq.s32.totalorder %s23, 1
      %p114 = por %p112, %p113
      %p116 = scmp.ne.s32.totalorder %s99, %s115
      %p117 = scmp.eq.s32.totalorder %s23, 0
      %p118 = por %p116, %p117
      %p119 = scmp.le.s32.totalorder 1, %s17
      %p120 = scmp.lt.s32.totalorder %s17, 3
      %p121 = pnand %p119, %p120
      %p122 = pneg %p121
      // Predicated region
      $region9: #{tpu_custom_call.1} parent=5 // pred_check
        _
      $region10: #{tpu_custom_call.1} parent=5 // pred_check_branch
        %124 = sbr.rel (%p121) target = $region12
      $region11: #{tpu_custom_call.1} parent=5 // pred_region
        %s125 = ssub.s32 %s17, 1
        // Predicated region
        $region13: #{tpu_custom_call.1} parent=11 // pred_check
          %p126 = pneg %p38
        $region14: #{tpu_custom_call.1} parent=11 // pred_check_branch
          %128 = sbr.rel (%p126) target = $region16
        $region15: #{tpu_custom_call.1} parent=11 // pred_region
          %s130 = ssub.s32 16, 16
          %131 = vsyncadd [#allocation9], %s130
          %s133 = sshll.u32 %s0, 4
          %s134 = int_to_ptr.vmem [resolvable:$true] %s133
          %136 = dma.vmem_to_smem %s134, 16, [#allocation6], [#allocation9]
        $region16: #{tpu_custom_call.1} parent=11 // pred_fallthru
          _
        // Predicated region
        $region17: #{tpu_custom_call.1} parent=11 // pred_check
          %p137 = pneg %p59
        $region18: #{tpu_custom_call.1} parent=11 // pred_check_branch
          %139 = sbr.rel (%p137) target = $region20
        $region19: #{tpu_custom_call.1} parent=11 // pred_region
          _
        $region20: #{tpu_custom_call.1} parent=11 // pred_fallthru
          _
      $region12: #{tpu_custom_call.1} parent=5 // pred_fallthru
        _
      %p140 = scmp.lt.s32.totalorder %s17, 2
      // Predicated region
      $region21: #{tpu_custom_call.1} parent=5 // pred_check
        %p141 = pneg %p140
      $region22: #{tpu_custom_call.1} parent=5 // pred_check_branch
        %143 = sbr.rel (%p141) target = $region24
      $region23: #{tpu_custom_call.1} parent=5 // pred_region
        // Predicated region
        $region25: #{tpu_custom_call.1} parent=23 // pred_check
          %p144 = pneg %p79
        $region26: #{tpu_custom_call.1} parent=23 // pred_check_branch
          %146 = sbr.rel (%p144) target = $region28
        $region27: #{tpu_custom_call.1} parent=23 // pred_region
          %s147 = sand.u32 %s69, 1
          %s148 = scalar_lea.sflag [#allocation7], %s147
          %s149 = sand.u32 %s69, 1
          %s150 = smul.addr %s149, 8
          %s151 = scalar_lea.vmem [#allocation10], %s150
          %s153 = ssub.s32 128, 128
          %154 = vsyncadd %s148, %s153
          %s155 = smul.addr %s17, 2
          %s156 = smul.addr %s155, 64
          %s157 = scalar_lea.hbm %s2, %s156
          %s159 = sshll.u32 %s151, 4
          %s160 = int_to_ptr.vmem [resolvable:$true] %s159
          %162 = dma.hbm_to_vmem [thread:$0]  %s157, 128, %s160, %s148
        $region28: #{tpu_custom_call.1} parent=23 // pred_fallthru
          _
      $region24: #{tpu_custom_call.1} parent=5 // pred_fallthru
        _
      %p163 = scmp.le.s32.totalorder 1, %s17
      %p164 = scmp.lt.s32.totalorder %s17, 3
      %p165 = pnand %p163, %p164
      %p166 = pneg %p165
      // Predicated region
      $region29: #{tpu_custom_call.1} parent=5 // pred_check
        _
      $region30: #{tpu_custom_call.1} parent=5 // pred_check_branch
        %168 = sbr.rel (%p165) target = $region32
      $region31: #{tpu_custom_call.1} parent=5 // pred_region
        %s169 = ssub.s32 %s17, 1
        // Predicated region
        $region33: #{tpu_custom_call.1} parent=31 // pred_check
          %p170 = pneg %p38
        $region34: #{tpu_custom_call.1} parent=31 // pred_check_branch
          %172 = sbr.rel (%p170) target = $region36
        $region35: #{tpu_custom_call.1} parent=31 // pred_region
          %173 = dma.done [#allocation9], 16
        $region36: #{tpu_custom_call.1} parent=31 // pred_fallthru
          _
        %s174 = sand.u32 %s72, 1
        %s175 = scalar_lea.sflag [#allocation7], %s174
        %s176 = sand.u32 %s72, 1
        %s177 = smul.addr %s176, 8
        %s178 = scalar_lea.vmem [#allocation10], %s177
        // Predicated region
        $region37: #{tpu_custom_call.1} parent=31 // pred_check
          %p179 = pneg %p85
        $region38: #{tpu_custom_call.1} parent=31 // pred_check_branch
          %181 = sbr.rel (%p179) target = $region40
        $region39: #{tpu_custom_call.1} parent=31 // pred_region
          %182 = dma.done %s175, 128
        $region40: #{tpu_custom_call.1} parent=31 // pred_fallthru
          _
        %183 = sfence
        %p184 = pneg %p38
        %p185 = pneg %p35
        %p186 = pneg %p59
        %p187 = pneg %p56
        %s188 = sand.u32 %s72, 1
        %s189 = scalar_lea.sflag [#allocation7], %s188
        %s190 = sand.u32 %s72, 1
        %s191 = smul.addr %s190, 8
        %s192 = scalar_lea.vmem [#allocation10], %s191
        %p193 = pneg %p85
        %p194 = pneg %p82
        %p195 = pneg %p111
        %p196 = pneg %p108
        %s197 = sand.u32 %s98, 1
        %s198 = scalar_lea.sflag [#allocation8], %s197
        %s199 = sand.u32 %s98, 1
        %s200 = smul.addr %s199, 8
        %s201 = scalar_lea.vmem [#allocation11], %s200
        %v202 = vld [vmem:[%s178] sm:$0xff]
        %v204 = vcombine.high %v202, %v202
        %vm206 = vcmask 1043456
        %v207 = vsel %vm206, %v202, 0.0
        %v208 = vrot.slane %v207, 4
        %v209 = vadd.f32 %v207, %v208
        %v210 = vrot.slane %v209, 2
        %v211 = vadd.f32 %v209, %v210
        %v212 = vrot.slane %v211, 1
        %v213 = vadd.f32 %v211, %v212
        %v214 = vsel %vm206, %v204, 0.0
        %v215 = vrot.slane %v214, 4
        %v216 = vadd.f32 %v214, %v215
        %v217 = vrot.slane %v216, 2
        %v218 = vadd.f32 %v216, %v217
        %v219 = vrot.slane %v218, 1
        %v220 = vadd.f32 %v218, %v219
        %v221 = vrcp.pop 4.0
        %v222 = vmul.f32 %v213, %v221
        %v223 = vmul.f32 %v220, %v221
        %v224 = vsel %vm206, %v202, -inf
        %v225 = vrot.slane %v224, 4
        %v226 = vmax.f32 %v224, %v225
        %v227 = vrot.slane %v226, 2
        %v228 = vmax.f32 %v226, %v227
        %v229 = vrot.slane %v228, 1
        %v230 = vmax.f32 %v228, %v229
        %v231 = vsel %vm206, %v204, -inf
        %v232 = vrot.slane %v231, 4
        %v233 = vmax.f32 %v231, %v232
        %v234 = vrot.slane %v233, 2
        %v235 = vmax.f32 %v233, %v234
        %v236 = vrot.slane %v235, 1
        %v237 = vmax.f32 %v235, %v236
        %vm238 = vcmask 179200
        %239 = vst.msk [vmem:[#allocation2] sm:$0xff] %vm238, 0.0
        %240 = vst.msk [vmem:[#allocation2 + $0x8] sm:$0xff] %vm238, 0.0
        %vm241 = vcmask 177152
        %242 = vst.msk [vmem:[#allocation2 + $0x10] sm:$0x3f] %vm241, 0.0
        %243 = vst.msk [vmem:[#allocation3] sm:$0xff] %vm238, 0.0
        %244 = vst.msk [vmem:[#allocation3 + $0x8] sm:$0xff] %vm238, 0.0
        %245 = vst.msk [vmem:[#allocation3 + $0x10] sm:$0x3f] %vm241, 0.0
        %247 = vrot.lane.b32.xlu0 %v222, 3
        %v248 = vpop.permute.xlu0 %247
        %vm250 = vcmask 147480
        %251 = vst.msk [vmem:[#allocation2 + $0x3] sm:$0x1] %vm250, %v248
        %253 = vrot.lane.b32.xlu0 %v230, 3
        %v254 = vpop.permute.xlu0 %253
        %256 = vst.msk [vmem:[#allocation3 + $0x3] sm:$0x1] %vm250, %v254
        %257 = vrot.lane.b32.xlu0 %v222, 115
        %v258 = vpop.permute.xlu0 %257
        %260 = vst.msk [vmem:[#allocation2 + $0x4] sm:$0x1] %vm250, %v258
        %261 = vrot.lane.b32.xlu0 %v230, 115
        %v262 = vpop.permute.xlu0 %261
        %264 = vst.msk [vmem:[#allocation3 + $0x4] sm:$0x1] %vm250, %v262
        %265 = vrot.lane.b32.xlu0 %v222, 99
        %v266 = vpop.permute.xlu0 %265
        %268 = vst.msk [vmem:[#allocation2 + $0x5] sm:$0x1] %vm250, %v266
        %269 = vrot.lane.b32.xlu0 %v230, 99
        %v270 = vpop.permute.xlu0 %269
        %272 = vst.msk [vmem:[#allocation3 + $0x5] sm:$0x1] %vm250, %v270
        %273 = vrot.lane.b32.xlu0 %v222, 83
        %v274 = vpop.permute.xlu0 %273
        %276 = vst.msk [vmem:[#allocation2 + $0x6] sm:$0x1] %vm250, %v274
        %277 = vrot.lane.b32.xlu0 %v230, 83
        %v278 = vpop.permute.xlu0 %277
        %280 = vst.msk [vmem:[#allocation3 + $0x6] sm:$0x1] %vm250, %v278
        %281 = vrot.lane.b32.xlu0 %v222, 67
        %v282 = vpop.permute.xlu0 %281
        %284 = vst.msk [vmem:[#allocation2 + $0x7] sm:$0x1] %vm250, %v282
        %285 = vrot.lane.b32.xlu0 %v230, 67
        %v286 = vpop.permute.xlu0 %285
        %288 = vst.msk [vmem:[#allocation3 + $0x7] sm:$0x1] %vm250, %v286
        %289 = vrot.lane.b32.xlu0 %v222, 51
        %v290 = vpop.permute.xlu0 %289
        %292 = vst.msk [vmem:[#allocation2 + $0x8] sm:$0x1] %vm250, %v290
        %293 = vrot.lane.b32.xlu0 %v230, 51
        %v294 = vpop.permute.xlu0 %293
        %296 = vst.msk [vmem:[#allocation3 + $0x8] sm:$0x1] %vm250, %v294
        %297 = vrot.lane.b32.xlu0 %v222, 35
        %v298 = vpop.permute.xlu0 %297
        %300 = vst.msk [vmem:[#allocation2 + $0x9] sm:$0x1] %vm250, %v298
        %301 = vrot.lane.b32.xlu0 %v230, 35
        %v302 = vpop.permute.xlu0 %301
        %304 = vst.msk [vmem:[#allocation3 + $0x9] sm:$0x1] %vm250, %v302
        %305 = vrot.lane.b32.xlu0 %v222, 19
        %v306 = vpop.permute.xlu0 %305
        %308 = vst.msk [vmem:[#allocation2 + $0xa] sm:$0x1] %vm250, %v306
        %309 = vrot.lane.b32.xlu0 %v230, 19
        %v310 = vpop.permute.xlu0 %309
        %312 = vst.msk [vmem:[#allocation3 + $0xa] sm:$0x1] %vm250, %v310
        %314 = vrot.lane.b32.xlu0 %v223, 3
        %v315 = vpop.permute.xlu0 %314
        %317 = vst.msk [vmem:[#allocation2 + $0xb] sm:$0x1] %vm250, %v315
        %319 = vrot.lane.b32.xlu0 %v237, 3
        %v320 = vpop.permute.xlu0 %319
        %322 = vst.msk [vmem:[#allocation3 + $0xb] sm:$0x1] %vm250, %v320
        %323 = vrot.lane.b32.xlu0 %v223, 115
        %v324 = vpop.permute.xlu0 %323
        %326 = vst.msk [vmem:[#allocation2 + $0xc] sm:$0x1] %vm250, %v324
        %327 = vrot.lane.b32.xlu0 %v237, 115
        %v328 = vpop.permute.xlu0 %327
        %330 = vst.msk [vmem:[#allocation3 + $0xc] sm:$0x1] %vm250, %v328
        %331 = vrot.lane.b32.xlu0 %v223, 99
        %v332 = vpop.permute.xlu0 %331
        %334 = vst.msk [vmem:[#allocation2 + $0xd] sm:$0x1] %vm250, %v332
        %335 = vrot.lane.b32.xlu0 %v237, 99
        %v336 = vpop.permute.xlu0 %335
        %338 = vst.msk [vmem:[#allocation3 + $0xd] sm:$0x1] %vm250, %v336
        %339 = vrot.lane.b32.xlu0 %v223, 83
        %v340 = vpop.permute.xlu0 %339
        %342 = vst.msk [vmem:[#allocation2 + $0xe] sm:$0x1] %vm250, %v340
        %343 = vrot.lane.b32.xlu0 %v237, 83
        %v344 = vpop.permute.xlu0 %343
        %346 = vst.msk [vmem:[#allocation3 + $0xe] sm:$0x1] %vm250, %v344
        %347 = vrot.lane.b32.xlu0 %v223, 67
        %v348 = vpop.permute.xlu0 %347
        %350 = vst.msk [vmem:[#allocation2 + $0xf] sm:$0x1] %vm250, %v348
        %351 = vrot.lane.b32.xlu0 %v237, 67
        %v352 = vpop.permute.xlu0 %351
        %354 = vst.msk [vmem:[#allocation3 + $0xf] sm:$0x1] %vm250, %v352
        %355 = vrot.lane.b32.xlu0 %v223, 51
        %v356 = vpop.permute.xlu0 %355
        %358 = vst.msk [vmem:[#allocation2 + $0x10] sm:$0x1] %vm250, %v356
        %359 = vrot.lane.b32.xlu0 %v237, 51
        %v360 = vpop.permute.xlu0 %359
        %362 = vst.msk [vmem:[#allocation3 + $0x10] sm:$0x1] %vm250, %v360
        %363 = vrot.lane.b32.xlu0 %v223, 35
        %v364 = vpop.permute.xlu0 %363
        %366 = vst.msk [vmem:[#allocation2 + $0x11] sm:$0x1] %vm250, %v364
        %367 = vrot.lane.b32.xlu0 %v237, 35
        %v368 = vpop.permute.xlu0 %367
        %370 = vst.msk [vmem:[#allocation3 + $0x11] sm:$0x1] %vm250, %v368
        %371 = vrot.lane.b32.xlu0 %v223, 19
        %v372 = vpop.permute.xlu0 %371
        %374 = vst.msk [vmem:[#allocation2 + $0x12] sm:$0x1] %vm250, %v372
        %375 = vrot.lane.b32.xlu0 %v237, 19
        %v376 = vpop.permute.xlu0 %375
        %378 = vst.msk [vmem:[#allocation3 + $0x12] sm:$0x1] %vm250, %v376
        %v379 = vld [vmem:[#allocation2] sm:$0xff]
        %v380 = vld [vmem:[#allocation2 + $0x8] sm:$0xff]
        %v381 = vld [vmem:[#allocation2 + $0x10] sm:$0x3f]
        %v382 = vld [vmem:[#allocation3] sm:$0xff]
        %v383 = vld [vmem:[#allocation3 + $0x8] sm:$0xff]
        %v384 = vld [vmem:[#allocation3 + $0x10] sm:$0x3f]
        %s385 = sld [smem:[#allocation5]]
        %v386 = vstv %s385
        %v387 = vadd.f32 %v386, 0.0
        %s388 = sld [smem:[#allocation6]]
        %v389 = vstv %s388
        %v390 = vmul.f32 %v389, %v379
        %v391 = vmul.f32 %v389, %v380
        %v392 = vadd.f32 %v387, %v390
        %v393 = vadd.f32 %v387, %v391
        %s394 = sld [smem:[#allocation6 + $0x31]]
        %v395 = vstv %s394
        %v396 = vmul.f32 %v395, %v382
        %v397 = vmul.f32 %v395, %v383
        %v398 = vadd.f32 %v392, %v396
        %v399 = vadd.f32 %v393, %v397
        %s400 = sld [smem:[#allocation6 + $0x7]]
        %v401 = vstv %s400
        %v402 = vmul.f32 %v401, %v379
        %v403 = vmul.f32 %v401, %v380
        %v404 = vmul.f32 %v401, %v381
        %vm408 = vcmask 1046528
        %v409 = vrot.slane %v402, 1
        %v410 = vrot.slane %v403, 1
        %v411 = vsel %vm408, %v409, %v410
        %v412 = vrot.slane %v404, 1
        %v413 = vsel %vm408, %v410, %v412
        %v416 = vadd.f32 %v398, %v411
        %v417 = vadd.f32 %v399, %v413
        %s418 = sld [smem:[#allocation6 + $0x38]]
        %v419 = vstv %s418
        %v420 = vmul.f32 %v419, %v382
        %v421 = vmul.f32 %v419, %v383
        %v422 = vmul.f32 %v419, %v384
        %v426 = vrot.slane %v420, 1
        %v427 = vrot.slane %v421, 1
        %v428 = vsel %vm408, %v426, %v427
        %v429 = vrot.slane %v422, 1
        %v430 = vsel %vm408, %v427, %v429
        %v433 = vadd.f32 %v416, %v428
        %v434 = vadd.f32 %v417, %v430
        %s435 = sld [smem:[#allocation6 + $0xe]]
        %v436 = vstv %s435
        %v437 = vmul.f32 %v436, %v379
        %v438 = vmul.f32 %v436, %v380
        %v439 = vmul.f32 %v436, %v381
        %vm443 = vcmask 1045504
        %v444 = vrot.slane %v437, 2
        %v445 = vrot.slane %v438, 2
        %v446 = vsel %vm443, %v444, %v445
        %v447 = vrot.slane %v439, 2
        %v448 = vsel %vm443, %v445, %v447
        %v451 = vadd.f32 %v433, %v446
        %v452 = vadd.f32 %v434, %v448
        %s453 = sld [smem:[#allocation6 + $0x3f]]
        %v454 = vstv %s453
        %v455 = vmul.f32 %v454, %v382
        %v456 = vmul.f32 %v454, %v383
        %v457 = vmul.f32 %v454, %v384
        %v461 = vrot.slane %v455, 2
        %v462 = vrot.slane %v456, 2
        %v463 = vsel %vm443, %v461, %v462
        %v464 = vrot.slane %v457, 2
        %v465 = vsel %vm443, %v462, %v464
        %v468 = vadd.f32 %v451, %v463
        %v469 = vadd.f32 %v452, %v465
        %s470 = sld [smem:[#allocation6 + $0x15]]
        %v471 = vstv %s470
        %v472 = vmul.f32 %v471, %v379
        %v473 = vmul.f32 %v471, %v380
        %v474 = vmul.f32 %v471, %v381
        %vm478 = vcmask 1044480
        %v479 = vrot.slane %v472, 3
        %v480 = vrot.slane %v473, 3
        %v481 = vsel %vm478, %v479, %v480
        %v482 = vrot.slane %v474, 3
        %v483 = vsel %vm478, %v480, %v482
        %v486 = vadd.f32 %v468, %v481
        %v487 = vadd.f32 %v469, %v483
        %s488 = sld [smem:[#allocation6 + $0x46]]
        %v489 = vstv %s488
        %v490 = vmul.f32 %v489, %v382
        %v491 = vmul.f32 %v489, %v383
        %v492 = vmul.f32 %v489, %v384
        %v496 = vrot.slane %v490, 3
        %v497 = vrot.slane %v491, 3
        %v498 = vsel %vm478, %v496, %v497
        %v499 = vrot.slane %v492, 3
        %v500 = vsel %vm478, %v497, %v499
        %v503 = vadd.f32 %v486, %v498
        %v504 = vadd.f32 %v487, %v500
        %s505 = sld [smem:[#allocation6 + $0x1c]]
        %v506 = vstv %s505
        %v507 = vmul.f32 %v506, %v379
        %v508 = vmul.f32 %v506, %v380
        %v509 = vmul.f32 %v506, %v381
        %v513 = vrot.slane %v507, 4
        %v514 = vrot.slane %v508, 4
        %v515 = vsel %vm206, %v513, %v514
        %v516 = vrot.slane %v509, 4
        %v517 = vsel %vm206, %v514, %v516
        %v520 = vadd.f32 %v503, %v515
        %v521 = vadd.f32 %v504, %v517
        %s522 = sld [smem:[#allocation6 + $0x4d]]
        %v523 = vstv %s522
        %v524 = vmul.f32 %v523, %v382
        %v525 = vmul.f32 %v523, %v383
        %v526 = vmul.f32 %v523, %v384
        %v530 = vrot.slane %v524, 4
        %v531 = vrot.slane %v525, 4
        %v532 = vsel %vm206, %v530, %v531
        %v533 = vrot.slane %v526, 4
        %v534 = vsel %vm206, %v531, %v533
        %v537 = vadd.f32 %v520, %v532
        %v538 = vadd.f32 %v521, %v534
        %s539 = sld [smem:[#allocation6 + $0x23]]
        %v540 = vstv %s539
        %v541 = vmul.f32 %v540, %v379
        %v542 = vmul.f32 %v540, %v380
        %v543 = vmul.f32 %v540, %v381
        %vm547 = vcmask 1042432
        %v548 = vrot.slane %v541, 5
        %v549 = vrot.slane %v542, 5
        %v550 = vsel %vm547, %v548, %v549
        %v551 = vrot.slane %v543, 5
        %v552 = vsel %vm547, %v549, %v551
        %v555 = vadd.f32 %v537, %v550
        %v556 = vadd.f32 %v538, %v552
        %s557 = sld [smem:[#allocation6 + $0x54]]
        %v558 = vstv %s557
        %v559 = vmul.f32 %v558, %v382
        %v560 = vmul.f32 %v558, %v383
        %v561 = vmul.f32 %v558, %v384
        %v565 = vrot.slane %v559, 5
        %v566 = vrot.slane %v560, 5
        %v567 = vsel %vm547, %v565, %v566
        %v568 = vrot.slane %v561, 5
        %v569 = vsel %vm547, %v566, %v568
        %v572 = vadd.f32 %v555, %v567
        %v573 = vadd.f32 %v556, %v569
        %s574 = sld [smem:[#allocation6 + $0x2a]]
        %v575 = vstv %s574
        %v576 = vmul.f32 %v575, %v379
        %v577 = vmul.f32 %v575, %v380
        %v578 = vmul.f32 %v575, %v381
        %vm582 = vcmask 1041408
        %v583 = vrot.slane %v576, 6
        %v584 = vrot.slane %v577, 6
        %v585 = vsel %vm582, %v583, %v584
        %v586 = vrot.slane %v578, 6
        %v587 = vsel %vm582, %v584, %v586
        %v590 = vadd.f32 %v572, %v585
        %v591 = vadd.f32 %v573, %v587
        %s592 = sld [smem:[#allocation6 + $0x5b]]
        %v593 = vstv %s592
        %v594 = vmul.f32 %v593, %v382
        %v595 = vmul.f32 %v593, %v383
        %v596 = vmul.f32 %v593, %v384
        %v600 = vrot.slane %v594, 6
        %v601 = vrot.slane %v595, 6
        %v602 = vsel %vm582, %v600, %v601
        %v603 = vrot.slane %v596, 6
        %v604 = vsel %vm582, %v601, %v603
        %v607 = vadd.f32 %v590, %v602
        %v608 = vadd.f32 %v591, %v604
        %s609 = sld [smem:[#allocation6 + $0x1]]
        %v610 = vstv %s609
        %v611 = vmul.f32 %v610, %v379
        %v612 = vmul.f32 %v610, %v380
        %615 = vrot.lane.b32.xlu0 %v611, 127
        %v616 = vpop.permute.xlu0 %615
        %617 = vrot.lane.b32.xlu0 %v612, 127
        %v618 = vpop.permute.xlu0 %617
        %v621 = vadd.f32 %v607, %v616
        %v622 = vadd.f32 %v608, %v618
        %s623 = sld [smem:[#allocation6 + $0x32]]
        %v624 = vstv %s623
        %v625 = vmul.f32 %v624, %v382
        %v626 = vmul.f32 %v624, %v383
        %629 = vrot.lane.b32.xlu0 %v625, 127
        %v630 = vpop.permute.xlu0 %629
        %631 = vrot.lane.b32.xlu0 %v626, 127
        %v632 = vpop.permute.xlu0 %631
        %v635 = vadd.f32 %v621, %v630
        %v636 = vadd.f32 %v622, %v632
        %s637 = sld [smem:[#allocation6 + $0x8]]
        %v638 = vstv %s637
        %v639 = vmul.f32 %v638, %v379
        %v640 = vmul.f32 %v638, %v380
        %v641 = vmul.f32 %v638, %v381
        %v645 = vrot.slane %v639, 1
        %v646 = vrot.slane %v640, 1
        %v647 = vsel %vm408, %v645, %v646
        %v648 = vrot.slane %v641, 1
        %v649 = vsel %vm408, %v646, %v648
        %650 = vrot.lane.b32.xlu0 %v647, 127
        %v651 = vpop.permute.xlu0 %650
        %652 = vrot.lane.b32.xlu0 %v649, 127
        %v653 = vpop.permute.xlu0 %652
        %v656 = vadd.f32 %v635, %v651
        %v657 = vadd.f32 %v636, %v653
        %s658 = sld [smem:[#allocation6 + $0x39]]
        %v659 = vstv %s658
        %v660 = vmul.f32 %v659, %v382
        %v661 = vmul.f32 %v659, %v383
        %v662 = vmul.f32 %v659, %v384
        %v666 = vrot.slane %v660, 1
        %v667 = vrot.slane %v661, 1
        %v668 = vsel %vm408, %v666, %v667
        %v669 = vrot.slane %v662, 1
        %v670 = vsel %vm408, %v667, %v669
        %671 = vrot.lane.b32.xlu0 %v668, 127
        %v672 = vpop.permute.xlu0 %671
        %673 = vrot.lane.b32.xlu0 %v670, 127
        %v674 = vpop.permute.xlu0 %673
        %v677 = vadd.f32 %v656, %v672
        %v678 = vadd.f32 %v657, %v674
        %s679 = sld [smem:[#allocation6 + $0xf]]
        %v680 = vstv %s679
        %v681 = vmul.f32 %v680, %v379
        %v682 = vmul.f32 %v680, %v380
        %v683 = vmul.f32 %v680, %v381
        %v687 = vrot.slane %v681, 2
        %v688 = vrot.slane %v682, 2
        %v689 = vsel %vm443, %v687, %v688
        %v690 = vrot.slane %v683, 2
        %v691 = vsel %vm443, %v688, %v690
        %692 = vrot.lane.b32.xlu0 %v689, 127
        %v693 = vpop.permute.xlu0 %692
        %694 = vrot.lane.b32.xlu0 %v691, 127
        %v695 = vpop.permute.xlu0 %694
        %v698 = vadd.f32 %v677, %v693
        %v699 = vadd.f32 %v678, %v695
        %s700 = sld [smem:[#allocation6 + $0x40]]
        %v701 = vstv %s700
        %v702 = vmul.f32 %v701, %v382
        %v703 = vmul.f32 %v701, %v383
        %v704 = vmul.f32 %v701, %v384
        %v708 = vrot.slane %v702, 2
        %v709 = vrot.slane %v703, 2
        %v710 = vsel %vm443, %v708, %v709
        %v711 = vrot.slane %v704, 2
        %v712 = vsel %vm443, %v709, %v711
        %713 = vrot.lane.b32.xlu0 %v710, 127
        %v714 = vpop.permute.xlu0 %713
        %715 = vrot.lane.b32.xlu0 %v712, 127
        %v716 = vpop.permute.xlu0 %715
        %v719 = vadd.f32 %v698, %v714
        %v720 = vadd.f32 %v699, %v716
        %s721 = sld [smem:[#allocation6 + $0x16]]
        %v722 = vstv %s721
        %v723 = vmul.f32 %v722, %v379
        %v724 = vmul.f32 %v722, %v380
        %v725 = vmul.f32 %v722, %v381
        %v729 = vrot.slane %v723, 3
        %v730 = vrot.slane %v724, 3
        %v731 = vsel %vm478, %v729, %v730
        %v732 = vrot.slane %v725, 3
        %v733 = vsel %vm478, %v730, %v732
        %734 = vrot.lane.b32.xlu0 %v731, 127
        %v735 = vpop.permute.xlu0 %734
        %736 = vrot.lane.b32.xlu0 %v733, 127
        %v737 = vpop.permute.xlu0 %736
        %v740 = vadd.f32 %v719, %v735
        %v741 = vadd.f32 %v720, %v737
        %s742 = sld [smem:[#allocation6 + $0x47]]
        %v743 = vstv %s742
        %v744 = vmul.f32 %v743, %v382
        %v745 = vmul.f32 %v743, %v383
        %v746 = vmul.f32 %v743, %v384
        %v750 = vrot.slane %v744, 3
        %v751 = vrot.slane %v745, 3
        %v752 = vsel %vm478, %v750, %v751
        %v753 = vrot.slane %v746, 3
        %v754 = vsel %vm478, %v751, %v753
        %755 = vrot.lane.b32.xlu0 %v752, 127
        %v756 = vpop.permute.xlu0 %755
        %757 = vrot.lane.b32.xlu0 %v754, 127
        %v758 = vpop.permute.xlu0 %757
        %v761 = vadd.f32 %v740, %v756
        %v762 = vadd.f32 %v741, %v758
        %s763 = sld [smem:[#allocation6 + $0x1d]]
        %v764 = vstv %s763
        %v765 = vmul.f32 %v764, %v379
        %v766 = vmul.f32 %v764, %v380
        %v767 = vmul.f32 %v764, %v381
        %v771 = vrot.slane %v765, 4
        %v772 = vrot.slane %v766, 4
        %v773 = vsel %vm206, %v771, %v772
        %v774 = vrot.slane %v767, 4
        %v775 = vsel %vm206, %v772, %v774
        %776 = vrot.lane.b32.xlu0 %v773, 127
        %v777 = vpop.permute.xlu0 %776
        %778 = vrot.lane.b32.xlu0 %v775, 127
        %v779 = vpop.permute.xlu0 %778
        %v782 = vadd.f32 %v761, %v777
        %v783 = vadd.f32 %v762, %v779
        %s784 = sld [smem:[#allocation6 + $0x4e]]
        %v785 = vstv %s784
        %v786 = vmul.f32 %v785, %v382
        %v787 = vmul.f32 %v785, %v383
        %v788 = vmul.f32 %v785, %v384
        %v792 = vrot.slane %v786, 4
        %v793 = vrot.slane %v787, 4
        %v794 = vsel %vm206, %v792, %v793
        %v795 = vrot.slane %v788, 4
        %v796 = vsel %vm206, %v793, %v795
        %797 = vrot.lane.b32.xlu0 %v794, 127
        %v798 = vpop.permute.xlu0 %797
        %799 = vrot.lane.b32.xlu0 %v796, 127
        %v800 = vpop.permute.xlu0 %799
        %v803 = vadd.f32 %v782, %v798
        %v804 = vadd.f32 %v783, %v800
        %s805 = sld [smem:[#allocation6 + $0x24]]
        %v806 = vstv %s805
        %v807 = vmul.f32 %v806, %v379
        %v808 = vmul.f32 %v806, %v380
        %v809 = vmul.f32 %v806, %v381
        %v813 = vrot.slane %v807, 5
        %v814 = vrot.slane %v808, 5
        %v815 = vsel %vm547, %v813, %v814
        %v816 = vrot.slane %v809, 5
        %v817 = vsel %vm547, %v814, %v816
        %818 = vrot.lane.b32.xlu0 %v815, 127
        %v819 = vpop.permute.xlu0 %818
        %820 = vrot.lane.b32.xlu0 %v817, 127
        %v821 = vpop.permute.xlu0 %820
        %v824 = vadd.f32 %v803, %v819
        %v825 = vadd.f32 %v804, %v821
        %s826 = sld [smem:[#allocation6 + $0x55]]
        %v827 = vstv %s826
        %v828 = vmul.f32 %v827, %v382
        %v829 = vmul.f32 %v827, %v383
        %v830 = vmul.f32 %v827, %v384
        %v834 = vrot.slane %v828, 5
        %v835 = vrot.slane %v829, 5
        %v836 = vsel %vm547, %v834, %v835
        %v837 = vrot.slane %v830, 5
        %v838 = vsel %vm547, %v835, %v837
        %839 = vrot.lane.b32.xlu0 %v836, 127
        %v840 = vpop.permute.xlu0 %839
        %841 = vrot.lane.b32.xlu0 %v838, 127
        %v842 = vpop.permute.xlu0 %841
        %v845 = vadd.f32 %v824, %v840
        %v846 = vadd.f32 %v825, %v842
        %s847 = sld [smem:[#allocation6 + $0x2b]]
        %v848 = vstv %s847
        %v849 = vmul.f32 %v848, %v379
        %v850 = vmul.f32 %v848, %v380
        %v851 = vmul.f32 %v848, %v381
        %v855 = vrot.slane %v849, 6
        %v856 = vrot.slane %v850, 6
        %v857 = vsel %vm582, %v855, %v856
        %v858 = vrot.slane %v851, 6
        %v859 = vsel %vm582, %v856, %v858
        %860 = vrot.lane.b32.xlu0 %v857, 127
        %v861 = vpop.permute.xlu0 %860
        %862 = vrot.lane.b32.xlu0 %v859, 127
        %v863 = vpop.permute.xlu0 %862
        %v866 = vadd.f32 %v845, %v861
        %v867 = vadd.f32 %v846, %v863
        %s868 = sld [smem:[#allocation6 + $0x5c]]
        %v869 = vstv %s868
        %v870 = vmul.f32 %v869, %v382
        %v871 = vmul.f32 %v869, %v383
        %v872 = vmul.f32 %v869, %v384
        %v876 = vrot.slane %v870, 6
        %v877 = vrot.slane %v871, 6
        %v878 = vsel %vm582, %v876, %v877
        %v879 = vrot.slane %v872, 6
        %v880 = vsel %vm582, %v877, %v879
        %881 = vrot.lane.b32.xlu0 %v878, 127
        %v882 = vpop.permute.xlu0 %881
        %883 = vrot.lane.b32.xlu0 %v880, 127
        %v884 = vpop.permute.xlu0 %883
        %v887 = vadd.f32 %v866, %v882
        %v888 = vadd.f32 %v867, %v884
        %s889 = sld [smem:[#allocation6 + $0x2]]
        %v890 = vstv %s889
        %v891 = vmul.f32 %v890, %v379
        %v892 = vmul.f32 %v890, %v380
        %895 = vrot.lane.b32.xlu0 %v891, 126
        %v896 = vpop.permute.xlu0 %895
        %897 = vrot.lane.b32.xlu0 %v892, 126
        %v898 = vpop.permute.xlu0 %897
        %v901 = vadd.f32 %v887, %v896
        %v902 = vadd.f32 %v888, %v898
        %s903 = sld [smem:[#allocation6 + $0x33]]
        %v904 = vstv %s903
        %v905 = vmul.f32 %v904, %v382
        %v906 = vmul.f32 %v904, %v383
        %909 = vrot.lane.b32.xlu0 %v905, 126
        %v910 = vpop.permute.xlu0 %909
        %911 = vrot.lane.b32.xlu0 %v906, 126
        %v912 = vpop.permute.xlu0 %911
        %v915 = vadd.f32 %v901, %v910
        %v916 = vadd.f32 %v902, %v912
        %s917 = sld [smem:[#allocation6 + $0x9]]
        %v918 = vstv %s917
        %v919 = vmul.f32 %v918, %v379
        %v920 = vmul.f32 %v918, %v380
        %v921 = vmul.f32 %v918, %v381
        %v925 = vrot.slane %v919, 1
        %v926 = vrot.slane %v920, 1
        %v927 = vsel %vm408, %v925, %v926
        %v928 = vrot.slane %v921, 1
        %v929 = vsel %vm408, %v926, %v928
        %930 = vrot.lane.b32.xlu0 %v927, 126
        %v931 = vpop.permute.xlu0 %930
        %932 = vrot.lane.b32.xlu0 %v929, 126
        %v933 = vpop.permute.xlu0 %932
        %v936 = vadd.f32 %v915, %v931
        %v937 = vadd.f32 %v916, %v933
        %s938 = sld [smem:[#allocation6 + $0x3a]]
        %v939 = vstv %s938
        %v940 = vmul.f32 %v939, %v382
        %v941 = vmul.f32 %v939, %v383
        %v942 = vmul.f32 %v939, %v384
        %v946 = vrot.slane %v940, 1
        %v947 = vrot.slane %v941, 1
        %v948 = vsel %vm408, %v946, %v947
        %v949 = vrot.slane %v942, 1
        %v950 = vsel %vm408, %v947, %v949
        %951 = vrot.lane.b32.xlu0 %v948, 126
        %v952 = vpop.permute.xlu0 %951
        %953 = vrot.lane.b32.xlu0 %v950, 126
        %v954 = vpop.permute.xlu0 %953
        %v957 = vadd.f32 %v936, %v952
        %v958 = vadd.f32 %v937, %v954
        %s959 = sld [smem:[#allocation6 + $0x10]]
        %v960 = vstv %s959
        %v961 = vmul.f32 %v960, %v379
        %v962 = vmul.f32 %v960, %v380
        %v963 = vmul.f32 %v960, %v381
        %v967 = vrot.slane %v961, 2
        %v968 = vrot.slane %v962, 2
        %v969 = vsel %vm443, %v967, %v968
        %v970 = vrot.slane %v963, 2
        %v971 = vsel %vm443, %v968, %v970
        %972 = vrot.lane.b32.xlu0 %v969, 126
        %v973 = vpop.permute.xlu0 %972
        %974 = vrot.lane.b32.xlu0 %v971, 126
        %v975 = vpop.permute.xlu0 %974
        %v978 = vadd.f32 %v957, %v973
        %v979 = vadd.f32 %v958, %v975
        %s980 = sld [smem:[#allocation6 + $0x41]]
        %v981 = vstv %s980
        %v982 = vmul.f32 %v981, %v382
        %v983 = vmul.f32 %v981, %v383
        %v984 = vmul.f32 %v981, %v384
        %v988 = vrot.slane %v982, 2
        %v989 = vrot.slane %v983, 2
        %v990 = vsel %vm443, %v988, %v989
        %v991 = vrot.slane %v984, 2
        %v992 = vsel %vm443, %v989, %v991
        %993 = vrot.lane.b32.xlu0 %v990, 126
        %v994 = vpop.permute.xlu0 %993
        %995 = vrot.lane.b32.xlu0 %v992, 126
        %v996 = vpop.permute.xlu0 %995
        %v999 = vadd.f32 %v978, %v994
        %v1000 = vadd.f32 %v979, %v996
        %s1001 = sld [smem:[#allocation6 + $0x17]]
        %v1002 = vstv %s1001
        %v1003 = vmul.f32 %v1002, %v379
        %v1004 = vmul.f32 %v1002, %v380
        %v1005 = vmul.f32 %v1002, %v381
        %v1009 = vrot.slane %v1003, 3
        %v1010 = vrot.slane %v1004, 3
        %v1011 = vsel %vm478, %v1009, %v1010
        %v1012 = vrot.slane %v1005, 3
        %v1013 = vsel %vm478, %v1010, %v1012
        %1014 = vrot.lane.b32.xlu0 %v1011, 126
        %v1015 = vpop.permute.xlu0 %1014
        %1016 = vrot.lane.b32.xlu0 %v1013, 126
        %v1017 = vpop.permute.xlu0 %1016
        %v1020 = vadd.f32 %v999, %v1015
        %v1021 = vadd.f32 %v1000, %v1017
        %s1022 = sld [smem:[#allocation6 + $0x48]]
        %v1023 = vstv %s1022
        %v1024 = vmul.f32 %v1023, %v382
        %v1025 = vmul.f32 %v1023, %v383
        %v1026 = vmul.f32 %v1023, %v384
        %v1030 = vrot.slane %v1024, 3
        %v1031 = vrot.slane %v1025, 3
        %v1032 = vsel %vm478, %v1030, %v1031
        %v1033 = vrot.slane %v1026, 3
        %v1034 = vsel %vm478, %v1031, %v1033
        %1035 = vrot.lane.b32.xlu0 %v1032, 126
        %v1036 = vpop.permute.xlu0 %1035
        %1037 = vrot.lane.b32.xlu0 %v1034, 126
        %v1038 = vpop.permute.xlu0 %1037
        %v1041 = vadd.f32 %v1020, %v1036
        %v1042 = vadd.f32 %v1021, %v1038
        %s1043 = sld [smem:[#allocation6 + $0x1e]]
        %v1044 = vstv %s1043
        %v1045 = vmul.f32 %v1044, %v379
        %v1046 = vmul.f32 %v1044, %v380
        %v1047 = vmul.f32 %v1044, %v381
        %v1051 = vrot.slane %v1045, 4
        %v1052 = vrot.slane %v1046, 4
        %v1053 = vsel %vm206, %v1051, %v1052
        %v1054 = vrot.slane %v1047, 4
        %v1055 = vsel %vm206, %v1052, %v1054
        %1056 = vrot.lane.b32.xlu0 %v1053, 126
        %v1057 = vpop.permute.xlu0 %1056
        %1058 = vrot.lane.b32.xlu0 %v1055, 126
        %v1059 = vpop.permute.xlu0 %1058
        %v1062 = vadd.f32 %v1041, %v1057
        %v1063 = vadd.f32 %v1042, %v1059
        %s1064 = sld [smem:[#allocation6 + $0x4f]]
        %v1065 = vstv %s1064
        %v1066 = vmul.f32 %v1065, %v382
        %v1067 = vmul.f32 %v1065, %v383
        %v1068 = vmul.f32 %v1065, %v384
        %v1072 = vrot.slane %v1066, 4
        %v1073 = vrot.slane %v1067, 4
        %v1074 = vsel %vm206, %v1072, %v1073
        %v1075 = vrot.slane %v1068, 4
        %v1076 = vsel %vm206, %v1073, %v1075
        %1077 = vrot.lane.b32.xlu0 %v1074, 126
        %v1078 = vpop.permute.xlu0 %1077
        %1079 = vrot.lane.b32.xlu0 %v1076, 126
        %v1080 = vpop.permute.xlu0 %1079
        %v1083 = vadd.f32 %v1062, %v1078
        %v1084 = vadd.f32 %v1063, %v1080
        %s1085 = sld [smem:[#allocation6 + $0x25]]
        %v1086 = vstv %s1085
        %v1087 = vmul.f32 %v1086, %v379
        %v1088 = vmul.f32 %v1086, %v380
        %v1089 = vmul.f32 %v1086, %v381
        %v1093 = vrot.slane %v1087, 5
        %v1094 = vrot.slane %v1088, 5
        %v1095 = vsel %vm547, %v1093, %v1094
        %v1096 = vrot.slane %v1089, 5
        %v1097 = vsel %vm547, %v1094, %v1096
        %1098 = vrot.lane.b32.xlu0 %v1095, 126
        %v1099 = vpop.permute.xlu0 %1098
        %1100 = vrot.lane.b32.xlu0 %v1097, 126
        %v1101 = vpop.permute.xlu0 %1100
        %v1104 = vadd.f32 %v1083, %v1099
        %v1105 = vadd.f32 %v1084, %v1101
        %s1106 = sld [smem:[#allocation6 + $0x56]]
        %v1107 = vstv %s1106
        %v1108 = vmul.f32 %v1107, %v382
        %v1109 = vmul.f32 %v1107, %v383
        %v1110 = vmul.f32 %v1107, %v384
        %v1114 = vrot.slane %v1108, 5
        %v1115 = vrot.slane %v1109, 5
        %v1116 = vsel %vm547, %v1114, %v1115
        %v1117 = vrot.slane %v1110, 5
        %v1118 = vsel %vm547, %v1115, %v1117
        %1119 = vrot.lane.b32.xlu0 %v1116, 126
        %v1120 = vpop.permute.xlu0 %1119
        %1121 = vrot.lane.b32.xlu0 %v1118, 126
        %v1122 = vpop.permute.xlu0 %1121
        %v1125 = vadd.f32 %v1104, %v1120
        %v1126 = vadd.f32 %v1105, %v1122
        %s1127 = sld [smem:[#allocation6 + $0x2c]]
        %v1128 = vstv %s1127
        %v1129 = vmul.f32 %v1128, %v379
        %v1130 = vmul.f32 %v1128, %v380
        %v1131 = vmul.f32 %v1128, %v381
        %v1135 = vrot.slane %v1129, 6
        %v1136 = vrot.slane %v1130, 6
        %v1137 = vsel %vm582, %v1135, %v1136
        %v1138 = vrot.slane %v1131, 6
        %v1139 = vsel %vm582, %v1136, %v1138
        %1140 = vrot.lane.b32.xlu0 %v1137, 126
        %v1141 = vpop.permute.xlu0 %1140
        %1142 = vrot.lane.b32.xlu0 %v1139, 126
        %v1143 = vpop.permute.xlu0 %1142
        %v1146 = vadd.f32 %v1125, %v1141
        %v1147 = vadd.f32 %v1126, %v1143
        %s1148 = sld [smem:[#allocation6 + $0x5d]]
        %v1149 = vstv %s1148
        %v1150 = vmul.f32 %v1149, %v382
        %v1151 = vmul.f32 %v1149, %v383
        %v1152 = vmul.f32 %v1149, %v384
        %v1156 = vrot.slane %v1150, 6
        %v1157 = vrot.slane %v1151, 6
        %v1158 = vsel %vm582, %v1156, %v1157
        %v1159 = vrot.slane %v1152, 6
        %v1160 = vsel %vm582, %v1157, %v1159
        %1161 = vrot.lane.b32.xlu0 %v1158, 126
        %v1162 = vpop.permute.xlu0 %1161
        %1163 = vrot.lane.b32.xlu0 %v1160, 126
        %v1164 = vpop.permute.xlu0 %1163
        %v1167 = vadd.f32 %v1146, %v1162
        %v1168 = vadd.f32 %v1147, %v1164
        %s1169 = sld [smem:[#allocation6 + $0x3]]
        %v1170 = vstv %s1169
        %v1171 = vmul.f32 %v1170, %v379
        %v1172 = vmul.f32 %v1170, %v380
        %1175 = vrot.lane.b32.xlu0 %v1171, 125
        %v1176 = vpop.permute.xlu0 %1175
        %1177 = vrot.lane.b32.xlu0 %v1172, 125
        %v1178 = vpop.permute.xlu0 %1177
        %v1181 = vadd.f32 %v1167, %v1176
        %v1182 = vadd.f32 %v1168, %v1178
        %s1183 = sld [smem:[#allocation6 + $0x34]]
        %v1184 = vstv %s1183
        %v1185 = vmul.f32 %v1184, %v382
        %v1186 = vmul.f32 %v1184, %v383
        %1189 = vrot.lane.b32.xlu0 %v1185, 125
        %v1190 = vpop.permute.xlu0 %1189
        %1191 = vrot.lane.b32.xlu0 %v1186, 125
        %v1192 = vpop.permute.xlu0 %1191
        %v1195 = vadd.f32 %v1181, %v1190
        %v1196 = vadd.f32 %v1182, %v1192
        %s1197 = sld [smem:[#allocation6 + $0xa]]
        %v1198 = vstv %s1197
        %v1199 = vmul.f32 %v1198, %v379
        %v1200 = vmul.f32 %v1198, %v380
        %v1201 = vmul.f32 %v1198, %v381
        %v1205 = vrot.slane %v1199, 1
        %v1206 = vrot.slane %v1200, 1
        %v1207 = vsel %vm408, %v1205, %v1206
        %v1208 = vrot.slane %v1201, 1
        %v1209 = vsel %vm408, %v1206, %v1208
        %1210 = vrot.lane.b32.xlu0 %v1207, 125
        %v1211 = vpop.permute.xlu0 %1210
        %1212 = vrot.lane.b32.xlu0 %v1209, 125
        %v1213 = vpop.permute.xlu0 %1212
        %v1216 = vadd.f32 %v1195, %v1211
        %v1217 = vadd.f32 %v1196, %v1213
        %s1218 = sld [smem:[#allocation6 + $0x3b]]
        %v1219 = vstv %s1218
        %v1220 = vmul.f32 %v1219, %v382
        %v1221 = vmul.f32 %v1219, %v383
        %v1222 = vmul.f32 %v1219, %v384
        %v1226 = vrot.slane %v1220, 1
        %v1227 = vrot.slane %v1221, 1
        %v1228 = vsel %vm408, %v1226, %v1227
        %v1229 = vrot.slane %v1222, 1
        %v1230 = vsel %vm408, %v1227, %v1229
        %1231 = vrot.lane.b32.xlu0 %v1228, 125
        %v1232 = vpop.permute.xlu0 %1231
        %1233 = vrot.lane.b32.xlu0 %v1230, 125
        %v1234 = vpop.permute.xlu0 %1233
        %v1237 = vadd.f32 %v1216, %v1232
        %v1238 = vadd.f32 %v1217, %v1234
        %s1239 = sld [smem:[#allocation6 + $0x11]]
        %v1240 = vstv %s1239
        %v1241 = vmul.f32 %v1240, %v379
        %v1242 = vmul.f32 %v1240, %v380
        %v1243 = vmul.f32 %v1240, %v381
        %v1247 = vrot.slane %v1241, 2
        %v1248 = vrot.slane %v1242, 2
        %v1249 = vsel %vm443, %v1247, %v1248
        %v1250 = vrot.slane %v1243, 2
        %v1251 = vsel %vm443, %v1248, %v1250
        %1252 = vrot.lane.b32.xlu0 %v1249, 125
        %v1253 = vpop.permute.xlu0 %1252
        %1254 = vrot.lane.b32.xlu0 %v1251, 125
        %v1255 = vpop.permute.xlu0 %1254
        %v1258 = vadd.f32 %v1237, %v1253
        %v1259 = vadd.f32 %v1238, %v1255
        %s1260 = sld [smem:[#allocation6 + $0x42]]
        %v1261 = vstv %s1260
        %v1262 = vmul.f32 %v1261, %v382
        %v1263 = vmul.f32 %v1261, %v383
        %v1264 = vmul.f32 %v1261, %v384
        %v1268 = vrot.slane %v1262, 2
        %v1269 = vrot.slane %v1263, 2
        %v1270 = vsel %vm443, %v1268, %v1269
        %v1271 = vrot.slane %v1264, 2
        %v1272 = vsel %vm443, %v1269, %v1271
        %1273 = vrot.lane.b32.xlu0 %v1270, 125
        %v1274 = vpop.permute.xlu0 %1273
        %1275 = vrot.lane.b32.xlu0 %v1272, 125
        %v1276 = vpop.permute.xlu0 %1275
        %v1279 = vadd.f32 %v1258, %v1274
        %v1280 = vadd.f32 %v1259, %v1276
        %s1281 = sld [smem:[#allocation6 + $0x18]]
        %v1282 = vstv %s1281
        %v1283 = vmul.f32 %v1282, %v379
        %v1284 = vmul.f32 %v1282, %v380
        %v1285 = vmul.f32 %v1282, %v381
        %v1289 = vrot.slane %v1283, 3
        %v1290 = vrot.slane %v1284, 3
        %v1291 = vsel %vm478, %v1289, %v1290
        %v1292 = vrot.slane %v1285, 3
        %v1293 = vsel %vm478, %v1290, %v1292
        %1294 = vrot.lane.b32.xlu0 %v1291, 125
        %v1295 = vpop.permute.xlu0 %1294
        %1296 = vrot.lane.b32.xlu0 %v1293, 125
        %v1297 = vpop.permute.xlu0 %1296
        %v1300 = vadd.f32 %v1279, %v1295
        %v1301 = vadd.f32 %v1280, %v1297
        %s1302 = sld [smem:[#allocation6 + $0x49]]
        %v1303 = vstv %s1302
        %v1304 = vmul.f32 %v1303, %v382
        %v1305 = vmul.f32 %v1303, %v383
        %v1306 = vmul.f32 %v1303, %v384
        %v1310 = vrot.slane %v1304, 3
        %v1311 = vrot.slane %v1305, 3
        %v1312 = vsel %vm478, %v1310, %v1311
        %v1313 = vrot.slane %v1306, 3
        %v1314 = vsel %vm478, %v1311, %v1313
        %1315 = vrot.lane.b32.xlu0 %v1312, 125
        %v1316 = vpop.permute.xlu0 %1315
        %1317 = vrot.lane.b32.xlu0 %v1314, 125
        %v1318 = vpop.permute.xlu0 %1317
        %v1321 = vadd.f32 %v1300, %v1316
        %v1322 = vadd.f32 %v1301, %v1318
        %s1323 = sld [smem:[#allocation6 + $0x1f]]
        %v1324 = vstv %s1323
        %v1325 = vmul.f32 %v1324, %v379
        %v1326 = vmul.f32 %v1324, %v380
        %v1327 = vmul.f32 %v1324, %v381
        %v1331 = vrot.slane %v1325, 4
        %v1332 = vrot.slane %v1326, 4
        %v1333 = vsel %vm206, %v1331, %v1332
        %v1334 = vrot.slane %v1327, 4
        %v1335 = vsel %vm206, %v1332, %v1334
        %1336 = vrot.lane.b32.xlu0 %v1333, 125
        %v1337 = vpop.permute.xlu0 %1336
        %1338 = vrot.lane.b32.xlu0 %v1335, 125
        %v1339 = vpop.permute.xlu0 %1338
        %v1342 = vadd.f32 %v1321, %v1337
        %v1343 = vadd.f32 %v1322, %v1339
        %s1344 = sld [smem:[#allocation6 + $0x50]]
        %v1345 = vstv %s1344
        %v1346 = vmul.f32 %v1345, %v382
        %v1347 = vmul.f32 %v1345, %v383
        %v1348 = vmul.f32 %v1345, %v384
        %v1352 = vrot.slane %v1346, 4
        %v1353 = vrot.slane %v1347, 4
        %v1354 = vsel %vm206, %v1352, %v1353
        %v1355 = vrot.slane %v1348, 4
        %v1356 = vsel %vm206, %v1353, %v1355
        %1357 = vrot.lane.b32.xlu0 %v1354, 125
        %v1358 = vpop.permute.xlu0 %1357
        %1359 = vrot.lane.b32.xlu0 %v1356, 125
        %v1360 = vpop.permute.xlu0 %1359
        %v1363 = vadd.f32 %v1342, %v1358
        %v1364 = vadd.f32 %v1343, %v1360
        %s1365 = sld [smem:[#allocation6 + $0x26]]
        %v1366 = vstv %s1365
        %v1367 = vmul.f32 %v1366, %v379
        %v1368 = vmul.f32 %v1366, %v380
        %v1369 = vmul.f32 %v1366, %v381
        %v1373 = vrot.slane %v1367, 5
        %v1374 = vrot.slane %v1368, 5
        %v1375 = vsel %vm547, %v1373, %v1374
        %v1376 = vrot.slane %v1369, 5
        %v1377 = vsel %vm547, %v1374, %v1376
        %1378 = vrot.lane.b32.xlu0 %v1375, 125
        %v1379 = vpop.permute.xlu0 %1378
        %1380 = vrot.lane.b32.xlu0 %v1377, 125
        %v1381 = vpop.permute.xlu0 %1380
        %v1384 = vadd.f32 %v1363, %v1379
        %v1385 = vadd.f32 %v1364, %v1381
        %s1386 = sld [smem:[#allocation6 + $0x57]]
        %v1387 = vstv %s1386
        %v1388 = vmul.f32 %v1387, %v382
        %v1389 = vmul.f32 %v1387, %v383
        %v1390 = vmul.f32 %v1387, %v384
        %v1394 = vrot.slane %v1388, 5
        %v1395 = vrot.slane %v1389, 5
        %v1396 = vsel %vm547, %v1394, %v1395
        %v1397 = vrot.slane %v1390, 5
        %v1398 = vsel %vm547, %v1395, %v1397
        %1399 = vrot.lane.b32.xlu0 %v1396, 125
        %v1400 = vpop.permute.xlu0 %1399
        %1401 = vrot.lane.b32.xlu0 %v1398, 125
        %v1402 = vpop.permute.xlu0 %1401
        %v1405 = vadd.f32 %v1384, %v1400
        %v1406 = vadd.f32 %v1385, %v1402
        %s1407 = sld [smem:[#allocation6 + $0x2d]]
        %v1408 = vstv %s1407
        %v1409 = vmul.f32 %v1408, %v379
        %v1410 = vmul.f32 %v1408, %v380
        %v1411 = vmul.f32 %v1408, %v381
        %v1415 = vrot.slane %v1409, 6
        %v1416 = vrot.slane %v1410, 6
        %v1417 = vsel %vm582, %v1415, %v1416
        %v1418 = vrot.slane %v1411, 6
        %v1419 = vsel %vm582, %v1416, %v1418
        %1420 = vrot.lane.b32.xlu0 %v1417, 125
        %v1421 = vpop.permute.xlu0 %1420
        %1422 = vrot.lane.b32.xlu0 %v1419, 125
        %v1423 = vpop.permute.xlu0 %1422
        %v1426 = vadd.f32 %v1405, %v1421
        %v1427 = vadd.f32 %v1406, %v1423
        %s1428 = sld [smem:[#allocation6 + $0x5e]]
        %v1429 = vstv %s1428
        %v1430 = vmul.f32 %v1429, %v382
        %v1431 = vmul.f32 %v1429, %v383
        %v1432 = vmul.f32 %v1429, %v384
        %v1436 = vrot.slane %v1430, 6
        %v1437 = vrot.slane %v1431, 6
        %v1438 = vsel %vm582, %v1436, %v1437
        %v1439 = vrot.slane %v1432, 6
        %v1440 = vsel %vm582, %v1437, %v1439
        %1441 = vrot.lane.b32.xlu0 %v1438, 125
        %v1442 = vpop.permute.xlu0 %1441
        %1443 = vrot.lane.b32.xlu0 %v1440, 125
        %v1444 = vpop.permute.xlu0 %1443
        %v1447 = vadd.f32 %v1426, %v1442
        %v1448 = vadd.f32 %v1427, %v1444
        %s1449 = sld [smem:[#allocation6 + $0x4]]
        %v1450 = vstv %s1449
        %v1451 = vmul.f32 %v1450, %v379
        %v1452 = vmul.f32 %v1450, %v380
        %1455 = vrot.lane.b32.xlu0 %v1451, 124
        %v1456 = vpop.permute.xlu0 %1455
        %1457 = vrot.lane.b32.xlu0 %v1452, 124
        %v1458 = vpop.permute.xlu0 %1457
        %v1461 = vadd.f32 %v1447, %v1456
        %v1462 = vadd.f32 %v1448, %v1458
        %s1463 = sld [smem:[#allocation6 + $0x35]]
        %v1464 = vstv %s1463
        %v1465 = vmul.f32 %v1464, %v382
        %v1466 = vmul.f32 %v1464, %v383
        %1469 = vrot.lane.b32.xlu0 %v1465, 124
        %v1470 = vpop.permute.xlu0 %1469
        %1471 = vrot.lane.b32.xlu0 %v1466, 124
        %v1472 = vpop.permute.xlu0 %1471
        %v1475 = vadd.f32 %v1461, %v1470
        %v1476 = vadd.f32 %v1462, %v1472
        %s1477 = sld [smem:[#allocation6 + $0xb]]
        %v1478 = vstv %s1477
        %v1479 = vmul.f32 %v1478, %v379
        %v1480 = vmul.f32 %v1478, %v380
        %v1481 = vmul.f32 %v1478, %v381
        %v1485 = vrot.slane %v1479, 1
        %v1486 = vrot.slane %v1480, 1
        %v1487 = vsel %vm408, %v1485, %v1486
        %v1488 = vrot.slane %v1481, 1
        %v1489 = vsel %vm408, %v1486, %v1488
        %1490 = vrot.lane.b32.xlu0 %v1487, 124
        %v1491 = vpop.permute.xlu0 %1490
        %1492 = vrot.lane.b32.xlu0 %v1489, 124
        %v1493 = vpop.permute.xlu0 %1492
        %v1496 = vadd.f32 %v1475, %v1491
        %v1497 = vadd.f32 %v1476, %v1493
        %s1498 = sld [smem:[#allocation6 + $0x3c]]
        %v1499 = vstv %s1498
        %v1500 = vmul.f32 %v1499, %v382
        %v1501 = vmul.f32 %v1499, %v383
        %v1502 = vmul.f32 %v1499, %v384
        %v1506 = vrot.slane %v1500, 1
        %v1507 = vrot.slane %v1501, 1
        %v1508 = vsel %vm408, %v1506, %v1507
        %v1509 = vrot.slane %v1502, 1
        %v1510 = vsel %vm408, %v1507, %v1509
        %1511 = vrot.lane.b32.xlu0 %v1508, 124
        %v1512 = vpop.permute.xlu0 %1511
        %1513 = vrot.lane.b32.xlu0 %v1510, 124
        %v1514 = vpop.permute.xlu0 %1513
        %v1517 = vadd.f32 %v1496, %v1512
        %v1518 = vadd.f32 %v1497, %v1514
        %s1519 = sld [smem:[#allocation6 + $0x12]]
        %v1520 = vstv %s1519
        %v1521 = vmul.f32 %v1520, %v379
        %v1522 = vmul.f32 %v1520, %v380
        %v1523 = vmul.f32 %v1520, %v381
        %v1527 = vrot.slane %v1521, 2
        %v1528 = vrot.slane %v1522, 2
        %v1529 = vsel %vm443, %v1527, %v1528
        %v1530 = vrot.slane %v1523, 2
        %v1531 = vsel %vm443, %v1528, %v1530
        %1532 = vrot.lane.b32.xlu0 %v1529, 124
        %v1533 = vpop.permute.xlu0 %1532
        %1534 = vrot.lane.b32.xlu0 %v1531, 124
        %v1535 = vpop.permute.xlu0 %1534
        %v1538 = vadd.f32 %v1517, %v1533
        %v1539 = vadd.f32 %v1518, %v1535
        %s1540 = sld [smem:[#allocation6 + $0x43]]
        %v1541 = vstv %s1540
        %v1542 = vmul.f32 %v1541, %v382
        %v1543 = vmul.f32 %v1541, %v383
        %v1544 = vmul.f32 %v1541, %v384
        %v1548 = vrot.slane %v1542, 2
        %v1549 = vrot.slane %v1543, 2
        %v1550 = vsel %vm443, %v1548, %v1549
        %v1551 = vrot.slane %v1544, 2
        %v1552 = vsel %vm443, %v1549, %v1551
        %1553 = vrot.lane.b32.xlu0 %v1550, 124
        %v1554 = vpop.permute.xlu0 %1553
        %1555 = vrot.lane.b32.xlu0 %v1552, 124
        %v1556 = vpop.permute.xlu0 %1555
        %v1559 = vadd.f32 %v1538, %v1554
        %v1560 = vadd.f32 %v1539, %v1556
        %s1561 = sld [smem:[#allocation6 + $0x19]]
        %v1562 = vstv %s1561
        %v1563 = vmul.f32 %v1562, %v379
        %v1564 = vmul.f32 %v1562, %v380
        %v1565 = vmul.f32 %v1562, %v381
        %v1569 = vrot.slane %v1563, 3
        %v1570 = vrot.slane %v1564, 3
        %v1571 = vsel %vm478, %v1569, %v1570
        %v1572 = vrot.slane %v1565, 3
        %v1573 = vsel %vm478, %v1570, %v1572
        %1574 = vrot.lane.b32.xlu0 %v1571, 124
        %v1575 = vpop.permute.xlu0 %1574
        %1576 = vrot.lane.b32.xlu0 %v1573, 124
        %v1577 = vpop.permute.xlu0 %1576
        %v1580 = vadd.f32 %v1559, %v1575
        %v1581 = vadd.f32 %v1560, %v1577
        %s1582 = sld [smem:[#allocation6 + $0x4a]]
        %v1583 = vstv %s1582
        %v1584 = vmul.f32 %v1583, %v382
        %v1585 = vmul.f32 %v1583, %v383
        %v1586 = vmul.f32 %v1583, %v384
        %v1590 = vrot.slane %v1584, 3
        %v1591 = vrot.slane %v1585, 3
        %v1592 = vsel %vm478, %v1590, %v1591
        %v1593 = vrot.slane %v1586, 3
        %v1594 = vsel %vm478, %v1591, %v1593
        %1595 = vrot.lane.b32.xlu0 %v1592, 124
        %v1596 = vpop.permute.xlu0 %1595
        %1597 = vrot.lane.b32.xlu0 %v1594, 124
        %v1598 = vpop.permute.xlu0 %1597
        %v1601 = vadd.f32 %v1580, %v1596
        %v1602 = vadd.f32 %v1581, %v1598
        %s1603 = sld [smem:[#allocation6 + $0x20]]
        %v1604 = vstv %s1603
        %v1605 = vmul.f32 %v1604, %v379
        %v1606 = vmul.f32 %v1604, %v380
        %v1607 = vmul.f32 %v1604, %v381
        %v1611 = vrot.slane %v1605, 4
        %v1612 = vrot.slane %v1606, 4
        %v1613 = vsel %vm206, %v1611, %v1612
        %v1614 = vrot.slane %v1607, 4
        %v1615 = vsel %vm206, %v1612, %v1614
        %1616 = vrot.lane.b32.xlu0 %v1613, 124
        %v1617 = vpop.permute.xlu0 %1616
        %1618 = vrot.lane.b32.xlu0 %v1615, 124
        %v1619 = vpop.permute.xlu0 %1618
        %v1622 = vadd.f32 %v1601, %v1617
        %v1623 = vadd.f32 %v1602, %v1619
        %s1624 = sld [smem:[#allocation6 + $0x51]]
        %v1625 = vstv %s1624
        %v1626 = vmul.f32 %v1625, %v382
        %v1627 = vmul.f32 %v1625, %v383
        %v1628 = vmul.f32 %v1625, %v384
        %v1632 = vrot.slane %v1626, 4
        %v1633 = vrot.slane %v1627, 4
        %v1634 = vsel %vm206, %v1632, %v1633
        %v1635 = vrot.slane %v1628, 4
        %v1636 = vsel %vm206, %v1633, %v1635
        %1637 = vrot.lane.b32.xlu0 %v1634, 124
        %v1638 = vpop.permute.xlu0 %1637
        %1639 = vrot.lane.b32.xlu0 %v1636, 124
        %v1640 = vpop.permute.xlu0 %1639
        %v1643 = vadd.f32 %v1622, %v1638
        %v1644 = vadd.f32 %v1623, %v1640
        %s1645 = sld [smem:[#allocation6 + $0x27]]
        %v1646 = vstv %s1645
        %v1647 = vmul.f32 %v1646, %v379
        %v1648 = vmul.f32 %v1646, %v380
        %v1649 = vmul.f32 %v1646, %v381
        %v1653 = vrot.slane %v1647, 5
        %v1654 = vrot.slane %v1648, 5
        %v1655 = vsel %vm547, %v1653, %v1654
        %v1656 = vrot.slane %v1649, 5
        %v1657 = vsel %vm547, %v1654, %v1656
        %1658 = vrot.lane.b32.xlu0 %v1655, 124
        %v1659 = vpop.permute.xlu0 %1658
        %1660 = vrot.lane.b32.xlu0 %v1657, 124
        %v1661 = vpop.permute.xlu0 %1660
        %v1664 = vadd.f32 %v1643, %v1659
        %v1665 = vadd.f32 %v1644, %v1661
        %s1666 = sld [smem:[#allocation6 + $0x58]]
        %v1667 = vstv %s1666
        %v1668 = vmul.f32 %v1667, %v382
        %v1669 = vmul.f32 %v1667, %v383
        %v1670 = vmul.f32 %v1667, %v384
        %v1674 = vrot.slane %v1668, 5
        %v1675 = vrot.slane %v1669, 5
        %v1676 = vsel %vm547, %v1674, %v1675
        %v1677 = vrot.slane %v1670, 5
        %v1678 = vsel %vm547, %v1675, %v1677
        %1679 = vrot.lane.b32.xlu0 %v1676, 124
        %v1680 = vpop.permute.xlu0 %1679
        %1681 = vrot.lane.b32.xlu0 %v1678, 124
        %v1682 = vpop.permute.xlu0 %1681
        %v1685 = vadd.f32 %v1664, %v1680
        %v1686 = vadd.f32 %v1665, %v1682
        %s1687 = sld [smem:[#allocation6 + $0x2e]]
        %v1688 = vstv %s1687
        %v1689 = vmul.f32 %v1688, %v379
        %v1690 = vmul.f32 %v1688, %v380
        %v1691 = vmul.f32 %v1688, %v381
        %v1695 = vrot.slane %v1689, 6
        %v1696 = vrot.slane %v1690, 6
        %v1697 = vsel %vm582, %v1695, %v1696
        %v1698 = vrot.slane %v1691, 6
        %v1699 = vsel %vm582, %v1696, %v1698
        %1700 = vrot.lane.b32.xlu0 %v1697, 124
        %v1701 = vpop.permute.xlu0 %1700
        %1702 = vrot.lane.b32.xlu0 %v1699, 124
        %v1703 = vpop.permute.xlu0 %1702
        %v1706 = vadd.f32 %v1685, %v1701
        %v1707 = vadd.f32 %v1686, %v1703
        %s1708 = sld [smem:[#allocation6 + $0x5f]]
        %v1709 = vstv %s1708
        %v1710 = vmul.f32 %v1709, %v382
        %v1711 = vmul.f32 %v1709, %v383
        %v1712 = vmul.f32 %v1709, %v384
        %v1716 = vrot.slane %v1710, 6
        %v1717 = vrot.slane %v1711, 6
        %v1718 = vsel %vm582, %v1716, %v1717
        %v1719 = vrot.slane %v1712, 6
        %v1720 = vsel %vm582, %v1717, %v1719
        %1721 = vrot.lane.b32.xlu0 %v1718, 124
        %v1722 = vpop.permute.xlu0 %1721
        %1723 = vrot.lane.b32.xlu0 %v1720, 124
        %v1724 = vpop.permute.xlu0 %1723
        %v1727 = vadd.f32 %v1706, %v1722
        %v1728 = vadd.f32 %v1707, %v1724
        %s1729 = sld [smem:[#allocation6 + $0x5]]
        %v1730 = vstv %s1729
        %v1731 = vmul.f32 %v1730, %v379
        %v1732 = vmul.f32 %v1730, %v380
        %1735 = vrot.lane.b32.xlu0 %v1731, 123
        %v1736 = vpop.permute.xlu0 %1735
        %1737 = vrot.lane.b32.xlu0 %v1732, 123
        %v1738 = vpop.permute.xlu0 %1737
        %v1741 = vadd.f32 %v1727, %v1736
        %v1742 = vadd.f32 %v1728, %v1738
        %s1743 = sld [smem:[#allocation6 + $0x36]]
        %v1744 = vstv %s1743
        %v1745 = vmul.f32 %v1744, %v382
        %v1746 = vmul.f32 %v1744, %v383
        %1749 = vrot.lane.b32.xlu0 %v1745, 123
        %v1750 = vpop.permute.xlu0 %1749
        %1751 = vrot.lane.b32.xlu0 %v1746, 123
        %v1752 = vpop.permute.xlu0 %1751
        %v1755 = vadd.f32 %v1741, %v1750
        %v1756 = vadd.f32 %v1742, %v1752
        %s1757 = sld [smem:[#allocation6 + $0xc]]
        %v1758 = vstv %s1757
        %v1759 = vmul.f32 %v1758, %v379
        %v1760 = vmul.f32 %v1758, %v380
        %v1761 = vmul.f32 %v1758, %v381
        %v1765 = vrot.slane %v1759, 1
        %v1766 = vrot.slane %v1760, 1
        %v1767 = vsel %vm408, %v1765, %v1766
        %v1768 = vrot.slane %v1761, 1
        %v1769 = vsel %vm408, %v1766, %v1768
        %1770 = vrot.lane.b32.xlu0 %v1767, 123
        %v1771 = vpop.permute.xlu0 %1770
        %1772 = vrot.lane.b32.xlu0 %v1769, 123
        %v1773 = vpop.permute.xlu0 %1772
        %v1776 = vadd.f32 %v1755, %v1771
        %v1777 = vadd.f32 %v1756, %v1773
        %s1778 = sld [smem:[#allocation6 + $0x3d]]
        %v1779 = vstv %s1778
        %v1780 = vmul.f32 %v1779, %v382
        %v1781 = vmul.f32 %v1779, %v383
        %v1782 = vmul.f32 %v1779, %v384
        %v1786 = vrot.slane %v1780, 1
        %v1787 = vrot.slane %v1781, 1
        %v1788 = vsel %vm408, %v1786, %v1787
        %v1789 = vrot.slane %v1782, 1
        %v1790 = vsel %vm408, %v1787, %v1789
        %1791 = vrot.lane.b32.xlu0 %v1788, 123
        %v1792 = vpop.permute.xlu0 %1791
        %1793 = vrot.lane.b32.xlu0 %v1790, 123
        %v1794 = vpop.permute.xlu0 %1793
        %v1797 = vadd.f32 %v1776, %v1792
        %v1798 = vadd.f32 %v1777, %v1794
        %s1799 = sld [smem:[#allocation6 + $0x13]]
        %v1800 = vstv %s1799
        %v1801 = vmul.f32 %v1800, %v379
        %v1802 = vmul.f32 %v1800, %v380
        %v1803 = vmul.f32 %v1800, %v381
        %v1807 = vrot.slane %v1801, 2
        %v1808 = vrot.slane %v1802, 2
        %v1809 = vsel %vm443, %v1807, %v1808
        %v1810 = vrot.slane %v1803, 2
        %v1811 = vsel %vm443, %v1808, %v1810
        %1812 = vrot.lane.b32.xlu0 %v1809, 123
        %v1813 = vpop.permute.xlu0 %1812
        %1814 = vrot.lane.b32.xlu0 %v1811, 123
        %v1815 = vpop.permute.xlu0 %1814
        %v1818 = vadd.f32 %v1797, %v1813
        %v1819 = vadd.f32 %v1798, %v1815
        %s1820 = sld [smem:[#allocation6 + $0x44]]
        %v1821 = vstv %s1820
        %v1822 = vmul.f32 %v1821, %v382
        %v1823 = vmul.f32 %v1821, %v383
        %v1824 = vmul.f32 %v1821, %v384
        %v1828 = vrot.slane %v1822, 2
        %v1829 = vrot.slane %v1823, 2
        %v1830 = vsel %vm443, %v1828, %v1829
        %v1831 = vrot.slane %v1824, 2
        %v1832 = vsel %vm443, %v1829, %v1831
        %1833 = vrot.lane.b32.xlu0 %v1830, 123
        %v1834 = vpop.permute.xlu0 %1833
        %1835 = vrot.lane.b32.xlu0 %v1832, 123
        %v1836 = vpop.permute.xlu0 %1835
        %v1839 = vadd.f32 %v1818, %v1834
        %v1840 = vadd.f32 %v1819, %v1836
        %s1841 = sld [smem:[#allocation6 + $0x1a]]
        %v1842 = vstv %s1841
        %v1843 = vmul.f32 %v1842, %v379
        %v1844 = vmul.f32 %v1842, %v380
        %v1845 = vmul.f32 %v1842, %v381
        %v1849 = vrot.slane %v1843, 3
        %v1850 = vrot.slane %v1844, 3
        %v1851 = vsel %vm478, %v1849, %v1850
        %v1852 = vrot.slane %v1845, 3
        %v1853 = vsel %vm478, %v1850, %v1852
        %1854 = vrot.lane.b32.xlu0 %v1851, 123
        %v1855 = vpop.permute.xlu0 %1854
        %1856 = vrot.lane.b32.xlu0 %v1853, 123
        %v1857 = vpop.permute.xlu0 %1856
        %v1860 = vadd.f32 %v1839, %v1855
        %v1861 = vadd.f32 %v1840, %v1857
        %s1862 = sld [smem:[#allocation6 + $0x4b]]
        %v1863 = vstv %s1862
        %v1864 = vmul.f32 %v1863, %v382
        %v1865 = vmul.f32 %v1863, %v383
        %v1866 = vmul.f32 %v1863, %v384
        %v1870 = vrot.slane %v1864, 3
        %v1871 = vrot.slane %v1865, 3
        %v1872 = vsel %vm478, %v1870, %v1871
        %v1873 = vrot.slane %v1866, 3
        %v1874 = vsel %vm478, %v1871, %v1873
        %1875 = vrot.lane.b32.xlu0 %v1872, 123
        %v1876 = vpop.permute.xlu0 %1875
        %1877 = vrot.lane.b32.xlu0 %v1874, 123
        %v1878 = vpop.permute.xlu0 %1877
        %v1881 = vadd.f32 %v1860, %v1876
        %v1882 = vadd.f32 %v1861, %v1878
        %s1883 = sld [smem:[#allocation6 + $0x21]]
        %v1884 = vstv %s1883
        %v1885 = vmul.f32 %v1884, %v379
        %v1886 = vmul.f32 %v1884, %v380
        %v1887 = vmul.f32 %v1884, %v381
        %v1891 = vrot.slane %v1885, 4
        %v1892 = vrot.slane %v1886, 4
        %v1893 = vsel %vm206, %v1891, %v1892
        %v1894 = vrot.slane %v1887, 4
        %v1895 = vsel %vm206, %v1892, %v1894
        %1896 = vrot.lane.b32.xlu0 %v1893, 123
        %v1897 = vpop.permute.xlu0 %1896
        %1898 = vrot.lane.b32.xlu0 %v1895, 123
        %v1899 = vpop.permute.xlu0 %1898
        %v1902 = vadd.f32 %v1881, %v1897
        %v1903 = vadd.f32 %v1882, %v1899
        %s1904 = sld [smem:[#allocation6 + $0x52]]
        %v1905 = vstv %s1904
        %v1906 = vmul.f32 %v1905, %v382
        %v1907 = vmul.f32 %v1905, %v383
        %v1908 = vmul.f32 %v1905, %v384
        %v1912 = vrot.slane %v1906, 4
        %v1913 = vrot.slane %v1907, 4
        %v1914 = vsel %vm206, %v1912, %v1913
        %v1915 = vrot.slane %v1908, 4
        %v1916 = vsel %vm206, %v1913, %v1915
        %1917 = vrot.lane.b32.xlu0 %v1914, 123
        %v1918 = vpop.permute.xlu0 %1917
        %1919 = vrot.lane.b32.xlu0 %v1916, 123
        %v1920 = vpop.permute.xlu0 %1919
        %v1923 = vadd.f32 %v1902, %v1918
        %v1924 = vadd.f32 %v1903, %v1920
        %s1925 = sld [smem:[#allocation6 + $0x28]]
        %v1926 = vstv %s1925
        %v1927 = vmul.f32 %v1926, %v379
        %v1928 = vmul.f32 %v1926, %v380
        %v1929 = vmul.f32 %v1926, %v381
        %v1933 = vrot.slane %v1927, 5
        %v1934 = vrot.slane %v1928, 5
        %v1935 = vsel %vm547, %v1933, %v1934
        %v1936 = vrot.slane %v1929, 5
        %v1937 = vsel %vm547, %v1934, %v1936
        %1938 = vrot.lane.b32.xlu0 %v1935, 123
        %v1939 = vpop.permute.xlu0 %1938
        %1940 = vrot.lane.b32.xlu0 %v1937, 123
        %v1941 = vpop.permute.xlu0 %1940
        %v1944 = vadd.f32 %v1923, %v1939
        %v1945 = vadd.f32 %v1924, %v1941
        %s1946 = sld [smem:[#allocation6 + $0x59]]
        %v1947 = vstv %s1946
        %v1948 = vmul.f32 %v1947, %v382
        %v1949 = vmul.f32 %v1947, %v383
        %v1950 = vmul.f32 %v1947, %v384
        %v1954 = vrot.slane %v1948, 5
        %v1955 = vrot.slane %v1949, 5
        %v1956 = vsel %vm547, %v1954, %v1955
        %v1957 = vrot.slane %v1950, 5
        %v1958 = vsel %vm547, %v1955, %v1957
        %1959 = vrot.lane.b32.xlu0 %v1956, 123
        %v1960 = vpop.permute.xlu0 %1959
        %1961 = vrot.lane.b32.xlu0 %v1958, 123
        %v1962 = vpop.permute.xlu0 %1961
        %v1965 = vadd.f32 %v1944, %v1960
        %v1966 = vadd.f32 %v1945, %v1962
        %s1967 = sld [smem:[#allocation6 + $0x2f]]
        %v1968 = vstv %s1967
        %v1969 = vmul.f32 %v1968, %v379
        %v1970 = vmul.f32 %v1968, %v380
        %v1971 = vmul.f32 %v1968, %v381
        %v1975 = vrot.slane %v1969, 6
        %v1976 = vrot.slane %v1970, 6
        %v1977 = vsel %vm582, %v1975, %v1976
        %v1978 = vrot.slane %v1971, 6
        %v1979 = vsel %vm582, %v1976, %v1978
        %1980 = vrot.lane.b32.xlu0 %v1977, 123
        %v1981 = vpop.permute.xlu0 %1980
        %1982 = vrot.lane.b32.xlu0 %v1979, 123
        %v1983 = vpop.permute.xlu0 %1982
        %v1986 = vadd.f32 %v1965, %v1981
        %v1987 = vadd.f32 %v1966, %v1983
        %s1988 = sld [smem:[#allocation6 + $0x60]]
        %v1989 = vstv %s1988
        %v1990 = vmul.f32 %v1989, %v382
        %v1991 = vmul.f32 %v1989, %v383
        %v1992 = vmul.f32 %v1989, %v384
        %v1996 = vrot.slane %v1990, 6
        %v1997 = vrot.slane %v1991, 6
        %v1998 = vsel %vm582, %v1996, %v1997
        %v1999 = vrot.slane %v1992, 6
        %v2000 = vsel %vm582, %v1997, %v1999
        %2001 = vrot.lane.b32.xlu0 %v1998, 123
        %v2002 = vpop.permute.xlu0 %2001
        %2003 = vrot.lane.b32.xlu0 %v2000, 123
        %v2004 = vpop.permute.xlu0 %2003
        %v2007 = vadd.f32 %v1986, %v2002
        %v2008 = vadd.f32 %v1987, %v2004
        %s2009 = sld [smem:[#allocation6 + $0x6]]
        %v2010 = vstv %s2009
        %v2011 = vmul.f32 %v2010, %v379
        %v2012 = vmul.f32 %v2010, %v380
        %2015 = vrot.lane.b32.xlu0 %v2011, 122
        %v2016 = vpop.permute.xlu0 %2015
        %2017 = vrot.lane.b32.xlu0 %v2012, 122
        %v2018 = vpop.permute.xlu0 %2017
        %v2021 = vadd.f32 %v2007, %v2016
        %v2022 = vadd.f32 %v2008, %v2018
        %s2023 = sld [smem:[#allocation6 + $0x37]]
        %v2024 = vstv %s2023
        %v2025 = vmul.f32 %v2024, %v382
        %v2026 = vmul.f32 %v2024, %v383
        %2029 = vrot.lane.b32.xlu0 %v2025, 122
        %v2030 = vpop.permute.xlu0 %2029
        %2031 = vrot.lane.b32.xlu0 %v2026, 122
        %v2032 = vpop.permute.xlu0 %2031
        %v2035 = vadd.f32 %v2021, %v2030
        %v2036 = vadd.f32 %v2022, %v2032
        %s2037 = sld [smem:[#allocation6 + $0xd]]
        %v2038 = vstv %s2037
        %v2039 = vmul.f32 %v2038, %v379
        %v2040 = vmul.f32 %v2038, %v380
        %v2041 = vmul.f32 %v2038, %v381
        %v2045 = vrot.slane %v2039, 1
        %v2046 = vrot.slane %v2040, 1
        %v2047 = vsel %vm408, %v2045, %v2046
        %v2048 = vrot.slane %v2041, 1
        %v2049 = vsel %vm408, %v2046, %v2048
        %2050 = vrot.lane.b32.xlu0 %v2047, 122
        %v2051 = vpop.permute.xlu0 %2050
        %2052 = vrot.lane.b32.xlu0 %v2049, 122
        %v2053 = vpop.permute.xlu0 %2052
        %v2056 = vadd.f32 %v2035, %v2051
        %v2057 = vadd.f32 %v2036, %v2053
        %s2058 = sld [smem:[#allocation6 + $0x3e]]
        %v2059 = vstv %s2058
        %v2060 = vmul.f32 %v2059, %v382
        %v2061 = vmul.f32 %v2059, %v383
        %v2062 = vmul.f32 %v2059, %v384
        %v2066 = vrot.slane %v2060, 1
        %v2067 = vrot.slane %v2061, 1
        %v2068 = vsel %vm408, %v2066, %v2067
        %v2069 = vrot.slane %v2062, 1
        %v2070 = vsel %vm408, %v2067, %v2069
        %2071 = vrot.lane.b32.xlu0 %v2068, 122
        %v2072 = vpop.permute.xlu0 %2071
        %2073 = vrot.lane.b32.xlu0 %v2070, 122
        %v2074 = vpop.permute.xlu0 %2073
        %v2077 = vadd.f32 %v2056, %v2072
        %v2078 = vadd.f32 %v2057, %v2074
        %s2079 = sld [smem:[#allocation6 + $0x14]]
        %v2080 = vstv %s2079
        %v2081 = vmul.f32 %v2080, %v379
        %v2082 = vmul.f32 %v2080, %v380
        %v2083 = vmul.f32 %v2080, %v381
        %v2087 = vrot.slane %v2081, 2
        %v2088 = vrot.slane %v2082, 2
        %v2089 = vsel %vm443, %v2087, %v2088
        %v2090 = vrot.slane %v2083, 2
        %v2091 = vsel %vm443, %v2088, %v2090
        %2092 = vrot.lane.b32.xlu0 %v2089, 122
        %v2093 = vpop.permute.xlu0 %2092
        %2094 = vrot.lane.b32.xlu0 %v2091, 122
        %v2095 = vpop.permute.xlu0 %2094
        %v2098 = vadd.f32 %v2077, %v2093
        %v2099 = vadd.f32 %v2078, %v2095
        %s2100 = sld [smem:[#allocation6 + $0x45]]
        %v2101 = vstv %s2100
        %v2102 = vmul.f32 %v2101, %v382
        %v2103 = vmul.f32 %v2101, %v383
        %v2104 = vmul.f32 %v2101, %v384
        %v2108 = vrot.slane %v2102, 2
        %v2109 = vrot.slane %v2103, 2
        %v2110 = vsel %vm443, %v2108, %v2109
        %v2111 = vrot.slane %v2104, 2
        %v2112 = vsel %vm443, %v2109, %v2111
        %2113 = vrot.lane.b32.xlu0 %v2110, 122
        %v2114 = vpop.permute.xlu0 %2113
        %2115 = vrot.lane.b32.xlu0 %v2112, 122
        %v2116 = vpop.permute.xlu0 %2115
        %v2119 = vadd.f32 %v2098, %v2114
        %v2120 = vadd.f32 %v2099, %v2116
        %s2121 = sld [smem:[#allocation6 + $0x1b]]
        %v2122 = vstv %s2121
        %v2123 = vmul.f32 %v2122, %v379
        %v2124 = vmul.f32 %v2122, %v380
        %v2125 = vmul.f32 %v2122, %v381
        %v2129 = vrot.slane %v2123, 3
        %v2130 = vrot.slane %v2124, 3
        %v2131 = vsel %vm478, %v2129, %v2130
        %v2132 = vrot.slane %v2125, 3
        %v2133 = vsel %vm478, %v2130, %v2132
        %2134 = vrot.lane.b32.xlu0 %v2131, 122
        %v2135 = vpop.permute.xlu0 %2134
        %2136 = vrot.lane.b32.xlu0 %v2133, 122
        %v2137 = vpop.permute.xlu0 %2136
        %v2140 = vadd.f32 %v2119, %v2135
        %v2141 = vadd.f32 %v2120, %v2137
        %s2142 = sld [smem:[#allocation6 + $0x4c]]
        %v2143 = vstv %s2142
        %v2144 = vmul.f32 %v2143, %v382
        %v2145 = vmul.f32 %v2143, %v383
        %v2146 = vmul.f32 %v2143, %v384
        %v2150 = vrot.slane %v2144, 3
        %v2151 = vrot.slane %v2145, 3
        %v2152 = vsel %vm478, %v2150, %v2151
        %v2153 = vrot.slane %v2146, 3
        %v2154 = vsel %vm478, %v2151, %v2153
        %2155 = vrot.lane.b32.xlu0 %v2152, 122
        %v2156 = vpop.permute.xlu0 %2155
        %2157 = vrot.lane.b32.xlu0 %v2154, 122
        %v2158 = vpop.permute.xlu0 %2157
        %v2161 = vadd.f32 %v2140, %v2156
        %v2162 = vadd.f32 %v2141, %v2158
        %s2163 = sld [smem:[#allocation6 + $0x22]]
        %v2164 = vstv %s2163
        %v2165 = vmul.f32 %v2164, %v379
        %v2166 = vmul.f32 %v2164, %v380
        %v2167 = vmul.f32 %v2164, %v381
        %v2171 = vrot.slane %v2165, 4
        %v2172 = vrot.slane %v2166, 4
        %v2173 = vsel %vm206, %v2171, %v2172
        %v2174 = vrot.slane %v2167, 4
        %v2175 = vsel %vm206, %v2172, %v2174
        %2176 = vrot.lane.b32.xlu0 %v2173, 122
        %v2177 = vpop.permute.xlu0 %2176
        %2178 = vrot.lane.b32.xlu0 %v2175, 122
        %v2179 = vpop.permute.xlu0 %2178
        %v2182 = vadd.f32 %v2161, %v2177
        %v2183 = vadd.f32 %v2162, %v2179
        %s2184 = sld [smem:[#allocation6 + $0x53]]
        %v2185 = vstv %s2184
        %v2186 = vmul.f32 %v2185, %v382
        %v2187 = vmul.f32 %v2185, %v383
        %v2188 = vmul.f32 %v2185, %v384
        %v2192 = vrot.slane %v2186, 4
        %v2193 = vrot.slane %v2187, 4
        %v2194 = vsel %vm206, %v2192, %v2193
        %v2195 = vrot.slane %v2188, 4
        %v2196 = vsel %vm206, %v2193, %v2195
        %2197 = vrot.lane.b32.xlu0 %v2194, 122
        %v2198 = vpop.permute.xlu0 %2197
        %2199 = vrot.lane.b32.xlu0 %v2196, 122
        %v2200 = vpop.permute.xlu0 %2199
        %v2203 = vadd.f32 %v2182, %v2198
        %v2204 = vadd.f32 %v2183, %v2200
        %s2205 = sld [smem:[#allocation6 + $0x29]]
        %v2206 = vstv %s2205
        %v2207 = vmul.f32 %v2206, %v379
        %v2208 = vmul.f32 %v2206, %v380
        %v2209 = vmul.f32 %v2206, %v381
        %v2213 = vrot.slane %v2207, 5
        %v2214 = vrot.slane %v2208, 5
        %v2215 = vsel %vm547, %v2213, %v2214
        %v2216 = vrot.slane %v2209, 5
        %v2217 = vsel %vm547, %v2214, %v2216
        %2218 = vrot.lane.b32.xlu0 %v2215, 122
        %v2219 = vpop.permute.xlu0 %2218
        %2220 = vrot.lane.b32.xlu0 %v2217, 122
        %v2221 = vpop.permute.xlu0 %2220
        %v2224 = vadd.f32 %v2203, %v2219
        %v2225 = vadd.f32 %v2204, %v2221
        %s2226 = sld [smem:[#allocation6 + $0x5a]]
        %v2227 = vstv %s2226
        %v2228 = vmul.f32 %v2227, %v382
        %v2229 = vmul.f32 %v2227, %v383
        %v2230 = vmul.f32 %v2227, %v384
        %v2234 = vrot.slane %v2228, 5
        %v2235 = vrot.slane %v2229, 5
        %v2236 = vsel %vm547, %v2234, %v2235
        %v2237 = vrot.slane %v2230, 5
        %v2238 = vsel %vm547, %v2235, %v2237
        %2239 = vrot.lane.b32.xlu0 %v2236, 122
        %v2240 = vpop.permute.xlu0 %2239
        %2241 = vrot.lane.b32.xlu0 %v2238, 122
        %v2242 = vpop.permute.xlu0 %2241
        %v2245 = vadd.f32 %v2224, %v2240
        %v2246 = vadd.f32 %v2225, %v2242
        %s2247 = sld [smem:[#allocation6 + $0x30]]
        %v2248 = vstv %s2247
        %v2249 = vmul.f32 %v2248, %v379
        %v2250 = vmul.f32 %v2248, %v380
        %v2251 = vmul.f32 %v2248, %v381
        %v2255 = vrot.slane %v2249, 6
        %v2256 = vrot.slane %v2250, 6
        %v2257 = vsel %vm582, %v2255, %v2256
        %v2258 = vrot.slane %v2251, 6
        %v2259 = vsel %vm582, %v2256, %v2258
        %2260 = vrot.lane.b32.xlu0 %v2257, 122
        %v2261 = vpop.permute.xlu0 %2260
        %2262 = vrot.lane.b32.xlu0 %v2259, 122
        %v2263 = vpop.permute.xlu0 %2262
        %v2266 = vadd.f32 %v2245, %v2261
        %v2267 = vadd.f32 %v2246, %v2263
        %s2268 = sld [smem:[#allocation6 + $0x61]]
        %v2269 = vstv %s2268
        %v2270 = vmul.f32 %v2269, %v382
        %v2271 = vmul.f32 %v2269, %v383
        %v2272 = vmul.f32 %v2269, %v384
        %v2276 = vrot.slane %v2270, 6
        %v2277 = vrot.slane %v2271, 6
        %v2278 = vsel %vm582, %v2276, %v2277
        %v2279 = vrot.slane %v2272, 6
        %v2280 = vsel %vm582, %v2277, %v2279
        %2281 = vrot.lane.b32.xlu0 %v2278, 122
        %v2282 = vpop.permute.xlu0 %2281
        %2283 = vrot.lane.b32.xlu0 %v2280, 122
        %v2284 = vpop.permute.xlu0 %2283
        %v2287 = vadd.f32 %v2266, %v2282
        %v2288 = vadd.f32 %v2267, %v2284
        %v2289 = vxor.u32 %v2287, 2147483648
        %v2290 = vxor.u32 %v2288, 2147483648
        %v2291 = vmul.f32 %v2289, 1.442695
        %v2292 = vpow.pop %v2291
        %v2293 = vmul.f32 %v2290, 1.442695
        %v2294 = vpow.pop %v2293
        %v2295 = vadd.f32 %v2292, 1.0
        %v2296 = vadd.f32 %v2294, 1.0
        %v2297 = vrcp.pop %v2295
        %v2298 = vmul.f32 1.0, %v2297
        %v2299 = vrcp.pop %v2296
        %v2300 = vmul.f32 1.0, %v2299
        %v2301 = vlaneseq
        %vm2302 = vcmp.ge.s32.totalorder %v2301, 0
        %vm2303 = vcmp.lt.s32.totalorder %v2301, 16
        %vm2304 = vmand %vm2302, %vm2303
        %2305 = vst.msk [vmem:[#allocation4] sm:$0x1] %vm2304, %v2298
        %v2308 = vunpack.c.l.s4 1966171168
        %v2309 = vunpack.c.0.s8 %v2308
        %v2310 = vlaneseq
        %v2311 = vshrl.u32 %v2310, 7
        %v2312 = vsub.s32 %v2309, %v2311
        %v2313 = vrot.slane %v2298, %v2312
        %v2314 = vcombine.high %v2313, %v2313
        %v2316 = vunpack.c.l.s4 1966171168
        %v2317 = vunpack.c.0.s8 %v2316
        %v2318 = vlaneseq
        %v2319 = vshrl.u32 %v2318, 7
        %v2320 = vsub.s32 %v2317, %v2319
        %v2321 = vrot.slane %v2313, %v2320
        %v2323 = vunpack.c.l.s4 1966171168
        %v2324 = vunpack.c.0.s8 %v2323
        %v2325 = vlaneseq
        %v2326 = vshrl.u32 %v2325, 7
        %v2327 = vsub.s32 %v2324, %v2326
        %v2328 = vrot.slane %v2314, %v2327
        %2329 = vrot.lane.b32.xlu0 %v2328, 16
        %v2330 = vpop.permute.xlu0 %2329
        %vm2332 = vcmp.ge.s32.totalorder %v2301, 16
        %vm2333 = vcmp.lt.s32.totalorder %v2301, 32
        %vm2334 = vmand %vm2332, %vm2333
        %2335 = vst.msk [vmem:[#allocation4] sm:$0x1] %vm2334, %v2330
        %v2336 = vcombine.high %v2321, %v2321
        %2337 = vrot.lane.b32.xlu0 %v2336, 32
        %v2338 = vpop.permute.xlu0 %2337
        %vm2340 = vcmp.ge.s32.totalorder %v2301, 32
        %vm2341 = vcmp.lt.s32.totalorder %v2301, 48
        %vm2342 = vmand %vm2340, %vm2341
        %2343 = vst.msk [vmem:[#allocation4] sm:$0x1] %vm2342, %v2338
        %v2344 = vcombine.high %v2328, %v2328
        %2345 = vrot.lane.b32.xlu0 %v2344, 48
        %v2346 = vpop.permute.xlu0 %2345
        %vm2348 = vcmp.ge.s32.totalorder %v2301, 48
        %vm2349 = vcmp.lt.s32.totalorder %v2301, 64
        %vm2350 = vmand %vm2348, %vm2349
        %2351 = vst.msk [vmem:[#allocation4] sm:$0x1] %vm2350, %v2346
        %v2352 = vcombine.high %v2298, %v2298
        %v2354 = vunpack.c.l.s4 1966171168
        %v2355 = vunpack.c.0.s8 %v2354
        %v2356 = vlaneseq
        %v2357 = vshrl.u32 %v2356, 7
        %v2358 = vsub.s32 %v2355, %v2357
        %v2359 = vrot.slane %v2352, %v2358
        %v2361 = vunpack.c.l.s4 1966171168
        %v2362 = vunpack.c.0.s8 %v2361
        %v2363 = vlaneseq
        %v2364 = vshrl.u32 %v2363, 7
        %v2365 = vsub.s32 %v2362, %v2364
        %v2366 = vrot.slane %v2359, %v2365
        %2367 = vrot.lane.b32.xlu0 %v2366, 64
        %v2368 = vpop.permute.xlu0 %2367
        %vm2370 = vcmp.ge.s32.totalorder %v2301, 64
        %vm2371 = vcmp.lt.s32.totalorder %v2301, 80
        %vm2372 = vmand %vm2370, %vm2371
        %2373 = vst.msk [vmem:[#allocation4] sm:$0x1] %vm2372, %v2368
        %v2374 = vcombine.high %v2359, %v2359
        %v2376 = vunpack.c.l.s4 1966171168
        %v2377 = vunpack.c.0.s8 %v2376
        %v2378 = vlaneseq
        %v2379 = vshrl.u32 %v2378, 7
        %v2380 = vsub.s32 %v2377, %v2379
        %v2381 = vrot.slane %v2374, %v2380
        %2382 = vrot.lane.b32.xlu0 %v2381, 80
        %v2383 = vpop.permute.xlu0 %2382
        %vm2385 = vcmp.ge.s32.totalorder %v2301, 80
        %vm2386 = vcmp.lt.s32.totalorder %v2301, 96
        %vm2387 = vmand %vm2385, %vm2386
        %2388 = vst.msk [vmem:[#allocation4] sm:$0x1] %vm2387, %v2383
        %v2389 = vcombine.high %v2366, %v2366
        %2390 = vrot.lane.b32.xlu0 %v2389, 96
        %v2391 = vpop.permute.xlu0 %2390
        %vm2393 = vcmp.ge.s32.totalorder %v2301, 96
        %vm2394 = vcmp.lt.s32.totalorder %v2301, 112
        %vm2395 = vmand %vm2393, %vm2394
        %2396 = vst.msk [vmem:[#allocation4] sm:$0x1] %vm2395, %v2391
        %v2397 = vcombine.high %v2381, %v2381
        %2398 = vrot.lane.b32.xlu0 %v2397, 112
        %v2399 = vpop.permute.xlu0 %2398
        %vm2401 = vcmp.ge.s32.totalorder %v2301, 112
        %vm2402 = vcmp.lt.s32.totalorder %v2301, 128
        %vm2403 = vmand %vm2401, %vm2402
        %2404 = vst.msk [vmem:[#allocation4] sm:$0x1] %vm2403, %v2399
        %2405 = vst.msk [vmem:[#allocation4 + $0x1] sm:$0x1] %vm2304, %v2300
        %v2408 = vunpack.c.l.s4 1966171168
        %v2409 = vunpack.c.0.s8 %v2408
        %v2410 = vlaneseq
        %v2411 = vshrl.u32 %v2410, 7
        %v2412 = vsub.s32 %v2409, %v2411
        %v2413 = vrot.slane %v2300, %v2412
        %v2414 = vcombine.high %v2413, %v2413
        %v2416 = vunpack.c.l.s4 1966171168
        %v2417 = vunpack.c.0.s8 %v2416
        %v2418 = vlaneseq
        %v2419 = vshrl.u32 %v2418, 7
        %v2420 = vsub.s32 %v2417, %v2419
        %v2421 = vrot.slane %v2413, %v2420
        %v2423 = vunpack.c.l.s4 1966171168
        %v2424 = vunpack.c.0.s8 %v2423
        %v2425 = vlaneseq
        %v2426 = vshrl.u32 %v2425, 7
        %v2427 = vsub.s32 %v2424, %v2426
        %v2428 = vrot.slane %v2414, %v2427
        %2429 = vrot.lane.b32.xlu0 %v2428, 16
        %v2430 = vpop.permute.xlu0 %2429
        %2432 = vst.msk [vmem:[#allocation4 + $0x1] sm:$0x1] %vm2334, %v2430
        %v2433 = vcombine.high %v2421, %v2421
        %2434 = vrot.lane.b32.xlu0 %v2433, 32
        %v2435 = vpop.permute.xlu0 %2434
        %2437 = vst.msk [vmem:[#allocation4 + $0x1] sm:$0x1] %vm2342, %v2435
        %v2438 = vcombine.high %v2428, %v2428
        %2439 = vrot.lane.b32.xlu0 %v2438, 48
        %v2440 = vpop.permute.xlu0 %2439
        %2442 = vst.msk [vmem:[#allocation4 + $0x1] sm:$0x1] %vm2350, %v2440
        %v2443 = vcombine.high %v2300, %v2300
        %v2445 = vunpack.c.l.s4 1966171168
        %v2446 = vunpack.c.0.s8 %v2445
        %v2447 = vlaneseq
        %v2448 = vshrl.u32 %v2447, 7
        %v2449 = vsub.s32 %v2446, %v2448
        %v2450 = vrot.slane %v2443, %v2449
        %v2452 = vunpack.c.l.s4 1966171168
        %v2453 = vunpack.c.0.s8 %v2452
        %v2454 = vlaneseq
        %v2455 = vshrl.u32 %v2454, 7
        %v2456 = vsub.s32 %v2453, %v2455
        %v2457 = vrot.slane %v2450, %v2456
        %2458 = vrot.lane.b32.xlu0 %v2457, 64
        %v2459 = vpop.permute.xlu0 %2458
        %2461 = vst.msk [vmem:[#allocation4 + $0x1] sm:$0x1] %vm2372, %v2459
        %v2462 = vcombine.high %v2450, %v2450
        %v2464 = vunpack.c.l.s4 1966171168
        %v2465 = vunpack.c.0.s8 %v2464
        %v2466 = vlaneseq
        %v2467 = vshrl.u32 %v2466, 7
        %v2468 = vsub.s32 %v2465, %v2467
        %v2469 = vrot.slane %v2462, %v2468
        %2470 = vrot.lane.b32.xlu0 %v2469, 80
        %v2471 = vpop.permute.xlu0 %2470
        %2473 = vst.msk [vmem:[#allocation4 + $0x1] sm:$0x1] %vm2387, %v2471
        %v2474 = vcombine.high %v2457, %v2457
        %2475 = vrot.lane.b32.xlu0 %v2474, 96
        %v2476 = vpop.permute.xlu0 %2475
        %2478 = vst.msk [vmem:[#allocation4 + $0x1] sm:$0x1] %vm2395, %v2476
        %v2479 = vcombine.high %v2469, %v2469
        %2480 = vrot.lane.b32.xlu0 %v2479, 112
        %v2481 = vpop.permute.xlu0 %2480
        %2483 = vst.msk [vmem:[#allocation4 + $0x1] sm:$0x1] %vm2403, %v2481
        %v2484 = vld [vmem:[#allocation4] sm:$0x3]
        %v2486 = vlaneseq
        %v2487 = vshrl.u32 %v2486, 7
        %v2488 = vsub.s32 0, %v2487
        %v2489 = vrot.slane %v2484, %v2488
        %v2490 = vlaneseq
        %v2491 = vshrl.u32 %v2490, 7
        %v2492 = vsub.s32 1, %v2491
        %v2493 = vrot.slane %v2484, %v2492
        %v2494 = vcombine.low %v2489, %v2493
        %v2496 = vmul.f32 %v202, %v2494
        %2497 = vst [vmem:[%s201] sm:$0xff] %v2496
        %s2498 = sand.u32 %s98, 1
        %s2499 = scalar_lea.sflag [#allocation8], %s2498
        %s2500 = sand.u32 %s98, 1
        %s2501 = smul.addr %s2500, 8
        %s2502 = scalar_lea.vmem [#allocation11], %s2501
        // Predicated region
        $region41: #{tpu_custom_call.1} parent=31 // pred_check
          %p2503 = pneg %p108
        $region42: #{tpu_custom_call.1} parent=31 // pred_check_branch
          %2505 = sbr.rel (%p2503) target = $region44
        $region43: #{tpu_custom_call.1} parent=31 // pred_region
          %s2507 = ssub.s32 128, 128
          %2508 = vsyncadd %s2499, %s2507
          %s2509 = smul.addr %s22, 2
          %s2510 = smul.addr %s2509, 64
          %s2511 = scalar_lea.hbm %s3, %s2510
          %s2513 = sshll.u32 %s2502, 4
          %s2514 = int_to_ptr.vmem [resolvable:$true] %s2513
          %2516 = dma.vmem_to_hbm [thread:$0]  %s2514, 128, %s2511, %s2499
        $region44: #{tpu_custom_call.1} parent=31 // pred_fallthru
          _
      $region32: #{tpu_custom_call.1} parent=5 // pred_fallthru
        _
      %p2517 = scmp.le.s32.totalorder 2, %s17
      // Predicated region
      $region45: #{tpu_custom_call.1} parent=5 // pred_check
        %p2518 = pneg %p2517
      $region46: #{tpu_custom_call.1} parent=5 // pred_check_branch
        %2520 = sbr.rel (%p2518) target = $region48
      $region47: #{tpu_custom_call.1} parent=5 // pred_region
        %s2521 = ssub.s32 %s17, 2
        // Predicated region
        $region49: #{tpu_custom_call.1} parent=47 // pred_check
          %p2522 = pneg %p114
        $region50: #{tpu_custom_call.1} parent=47 // pred_check_branch
          %2524 = sbr.rel (%p2522) target = $region52
        $region51: #{tpu_custom_call.1} parent=47 // pred_region
          %s2525 = sand.u32 %s99, 1
          %s2526 = scalar_lea.sflag [#allocation8], %s2525
          %s2527 = sand.u32 %s99, 1
          %s2528 = smul.addr %s2527, 8
          %s2529 = scalar_lea.vmem [#allocation11], %s2528
          %2530 = dma.done %s2526, 128
        $region52: #{tpu_custom_call.1} parent=47 // pred_fallthru
          _
      $region48: #{tpu_custom_call.1} parent=5 // pred_fallthru
        _
    $region6: #{tpu_custom_call.1} parent=1 // loop_footer
      %s21 = sadd.s32 1, %s17
    $region7: #{tpu_custom_call.1} parent=1 // loop_footer_branch
      %16 = sbr.rel target = $region3
    $region8: #{tpu_custom_call.1} parent=1 // loop_exit
      _
    %2531 = vsyncpa [#allocation7], 1
    %s2532 = scalar_lea.sflag [#allocation7], 1
    %2533 = vsyncpa %s2532, 1
    %2534 = vsyncpa [#allocation8], 1
    %s2535 = scalar_lea.sflag [#allocation8], 1
    %2536 = vsyncpa %s2535, 1
    %2537 = vsyncpa [#allocation9], 1
    %s2538 = scalar_lea.sflag [#allocation9], 1
    %2539 = vsyncpa %s2538, 1

</llo_original>
